<compile_context>
chip_gen: v7x
topology: tpu7x:2x2x1
jax: 0.10.0
libtpu: 0.0.40
codegen_flags: <defaults>
</compile_context>

<pallas_src>
import math

import jax
import jax.numpy as jnp
from jax import lax
from jax.experimental import pallas as pl
from jax.experimental.pallas import tpu as pltpu

# ---- small config consistent with the module structure ----
VOCAB = 50
D_MODEL = 32          # d_model
N_LAYERS = 2          # N
N_HEADS = 4           # n_heads
D_K = D_MODEL // N_HEADS
D_FF = 64             # FeedForward hidden size (small stand-in for 2048)
BATCH = 2
SEQ = 8
MAX_SEQ = 80
EPS = 1e-6


# ----------------------- in-kernel helpers -----------------------
def _layernorm(x, alpha, beta):
    # Matches the reference LayerNorm: unbiased std (n-1), eps added to std.
    d = x.shape[-1]
    mean = jnp.mean(x, axis=-1, keepdims=True)
    xc = x - mean
    var = jnp.sum(xc * xc, axis=-1, keepdims=True) * (1.0 / (d - 1))
    std = jnp.sqrt(var)
    # exact divide (review: approx reciprocal can show up at ~1e-3 LN parity)
    return alpha * (xc / (std + EPS)) + beta


def _softmax_last(x):
    m = jnp.max(x, axis=-1, keepdims=True)
    e = jnp.exp(x - m)
    return e * pl.reciprocal(jnp.sum(e, axis=-1, keepdims=True), approx=True)


# ----------------------- the Pallas kernel -----------------------
def encoder_kernel(src_ref, mask_ref, emb_ref, pe_ref,
                   w_ref, w2_ref, vec_ref, fin_ref, out_ref):
    BS = src_ref.shape[0]                  # B * S
    B, _, S = mask_ref.shape
    V, D = emb_ref.shape
    inv_sqrt_dk = 1.0 / math.sqrt(D_K)
    bf16 = jnp.bfloat16

    # ---- fused glue: embedding gather, positional encoding, mask bias ----
    src = src_ref[...]                                          # (B*S, 1) int32
    vocab_iota = lax.broadcasted_iota(jnp.int32, (BS, V), 1)
    one_hot = (vocab_iota == src).astype(jnp.float32)           # (B*S, V)
    # Embedding lookup as an exact fp32 one-hot matmul (no gather lowering).
    x = jnp.dot(one_hot, emb_ref[...], preferred_element_type=jnp.float32)
    pe = pe_ref[...]                                            # (S, D)
    x = x + jnp.concatenate([pe] * B, axis=0)                   # broadcast over batch

    # Additive fp32 mask bias: 0 where keep, -1e9 where masked.
    bias = (mask_ref[...].astype(jnp.float32) - 1.0) * 1000000000.0   # (B, 1, S)

    # Constant per-head lane masks (which lanes of D belong to head h).
    lane = lax.broadcasted_iota(jnp.int32, (1, 1, D), 2)
    head_masks = [
        ((lane >= h * D_K) & (lane < (h + 1) * D_K)).astype(jnp.float32)
        for h in range(N_HEADS)
    ]

    for layer in range(N_LAYERS):          # static unroll over encoder layers
        wsl = w_ref[layer]                 # (D, 2D + D_FF) = wq | wo | w1
        wq = wsl[:, 0:D].astype(bf16)
        wo = wsl[:, D:2 * D].astype(bf16)
        w1 = wsl[:, 2 * D:].astype(bf16)
        w2 = w2_ref[layer].astype(bf16)    # (D_FF, D)
        vecs = vec_ref[layer]              # (8, D_FF) bias / LN slab
        bq, bo, bf2 = vecs[0:1, :D], vecs[1:2, :D], vecs[2:3, :D]
        a1, be1 = vecs[3:4, :D], vecs[4:5, :D]
        a2, be2 = vecs[5:6, :D], vecs[6:7, :D]
        bf1 = vecs[7:8, :]

        # ---- multi-head self attention (q projection reused for q/k/v) ----
        qkv = jnp.dot(x.astype(bf16), wq,
                      preferred_element_type=jnp.float32) + bq   # (B*S, D)
        qkv_b = qkv.reshape(B, S, D)

        # Per-head scores stacked along the query/sublane axis so ONE softmax
        # covers all heads.
        # TODO(synk): confirm via pl.lower_as_mlir that this einsum emits no
        # hidden vxpose (below one MXU tile at S=D_K=8 either way).
        score_rows = []
        for h in range(N_HEADS):
            qh = qkv_b[:, :, h * D_K:(h + 1) * D_K].astype(bf16)
            score_rows.append(jnp.einsum('bqd,bkd->bqk', qh, qh,
                                         preferred_element_type=jnp.float32))
        scores = jnp.concatenate(score_rows, axis=1) * inv_sqrt_dk   # (B, H*S, S)
        attn = _softmax_last(scores + bias)                          # one softmax

        # Head contexts land directly in their lane slots (masked v): the sum
        # over heads is already the concatenated multi-head output.
        ctx = jnp.zeros((B, S, D), jnp.float32)
        for h in range(N_HEADS):
            ah = attn[:, h * S:(h + 1) * S, :].astype(bf16)
            vh = (qkv_b * head_masks[h]).astype(bf16)
            ctx = ctx + jnp.einsum('bqk,bkd->bqd', ah, vh,
                                   preferred_element_type=jnp.float32)

        attn_out = jnp.dot(ctx.reshape(BS, D).astype(bf16), wo,
                           preferred_element_type=jnp.float32) + bo
        x = _layernorm(x + attn_out, a1, be1)                    # dropout_1 = id

        # ---- position-wise feed forward ----
        h1 = jnp.dot(x.astype(bf16), w1,
                     preferred_element_type=jnp.float32) + bf1
        h1 = jnp.maximum(h1, 0.0)                                # ReLU (dropout = id)
        ff = jnp.dot(h1.astype(bf16), w2,
                     preferred_element_type=jnp.float32) + bf2
        x = _layernorm(x + ff, a2, be2)                          # dropout_2 = id

    # ---- final encoder LayerNorm ----
    x = _layernorm(x, fin_ref[0:1, :], fin_ref[1:2, :])
    out_ref[...] = x.reshape(B, S, D)


# ----------------------- wrapper / glue -----------------------
def _full_spec(shape):
    n = len(shape)
    return pl.BlockSpec(shape, lambda i, n=n: (0,) * n)


@jax.jit
def encoder_forward(src, mask, params):
    B, S = src.shape
    src2 = src.reshape(B * S, 1).astype(jnp.int32)   # only remaining wrapper glue
    maski = mask.astype(jnp.int32)

    in_specs = [
        _full_spec(src2.shape),
        _full_spec(maski.shape),
        _full_spec(params["embed"].shape),
        pl.BlockSpec((S, D_MODEL), lambda i: (0, 0)),     # DMA only pe[:S]
        _full_spec(params["w_slab"].shape),
        _full_spec(params["w2"].shape),
        _full_spec(params["vec_slab"].shape),
        _full_spec(params["fin_ln"].shape),
    ]

    return pl.pallas_call(
        encoder_kernel,
        out_shape=jax.ShapeDtypeStruct((B, S, D_MODEL), jnp.float32),
        grid_spec=pltpu.PrefetchScalarGridSpec(
            num_scalar_prefetch=0,
            grid=(1,),                                    # single invocation; tiny problem
            in_specs=in_specs,
            out_specs=_full_spec((B, S, D_MODEL)),
        ),
        compiler_params=pltpu.CompilerParams(
            dimension_semantics=("arbitrary",)),
    )(src2, maski, params["embed"], params["pe"], params["w_slab"],
      params["w2"], params["vec_slab"], params["fin_ln"])


# ----------------------- deterministic parameter init -----------------------
def init_params(key):
    keys = jax.random.split(key, 12)

    def lin(k, shape, fanin):
        return (jax.random.uniform(k, shape, jnp.float32, -1.0, 1.0)
                / math.sqrt(fanin))

    p = {}
    p["embed"] = jax.random.normal(keys[0], (VOCAB, D_MODEL), jnp.float32) * 0.1

    # positional encoding buffer (note: log(1000), as in the reference)
    den = jnp.exp(-jnp.arange(0, D_MODEL, 2, dtype=jnp.float32)
                  * math.log(1000.0) / D_MODEL)
    pos = jnp.arange(MAX_SEQ, dtype=jnp.float32).reshape(-1, 1)
    pe = jnp.zeros((MAX_SEQ, D_MODEL), jnp.float32)
    pe = pe.at[:, 1::2].set(jnp.cos(pos * den))
    pe = pe.at[:, 0::2].set(jnp.sin(pos * den))
    p["pe"] = pe

    # per-layer matmul weights, pre-packed wq|wo|w1 -> (L, D, 2D+D_FF)=(2,32,128)
    wq = lin(keys[1], (N_LAYERS, D_MODEL, D_MODEL), D_MODEL)   # fused per-head q proj
    wo = lin(keys[2], (N_LAYERS, D_MODEL, D_MODEL), D_MODEL)
    w1 = lin(keys[3], (N_LAYERS, D_MODEL, D_FF), D_MODEL)
    p["w_slab"] = jnp.concatenate([wq, wo, w1], axis=-1)
    p["w2"] = lin(keys[4], (N_LAYERS, D_FF, D_MODEL), D_FF)

    # per-layer bias / layernorm vectors packed into one (L, 8, D_FF) slab:
    # rows = bq, bo, bf2, a1, be1, a2, be2, bf1  (D-wide rows zero-padded to D_FF)
    bq = lin(keys[5], (N_LAYERS, D_MODEL), D_MODEL)
    bo = lin(keys[6], (N_LAYERS, D_MODEL), D_MODEL)
    bf1 = lin(keys[7], (N_LAYERS, D_FF), D_MODEL)
    bf2 = lin(keys[8], (N_LAYERS, D_MODEL), D_FF)
    ones = jnp.ones((N_LAYERS, D_MODEL), jnp.float32)
    zeros = jnp.zeros((N_LAYERS, D_MODEL), jnp.float32)

    def pad_d(v):   # (L, D) -> (L, 1, D_FF)
        return jnp.pad(v, ((0, 0), (0, D_FF - D_MODEL)))[:, None, :]

    p["vec_slab"] = jnp.concatenate(
        [pad_d(bq), pad_d(bo), pad_d(bf2),
         pad_d(ones), pad_d(zeros),       # a1, be1
         pad_d(ones), pad_d(zeros),       # a2, be2
         bf1[:, None, :]], axis=1)        # (L, 8, D_FF)

    # final LayerNorm: row 0 = alpha, row 1 = beta
    p["fin_ln"] = jnp.stack([jnp.ones((D_MODEL,), jnp.float32),
                             jnp.zeros((D_MODEL,), jnp.float32)], axis=0)
    return p


if __name__ == "__main__":
    key = jax.random.PRNGKey(0)
    pkey, skey = jax.random.split(key)
    params = init_params(pkey)

    src = jax.random.randint(skey, (BATCH, SEQ), 0, VOCAB, dtype=jnp.int32)
    mask = jnp.ones((BATCH, 1, SEQ), jnp.int32)
    mask = mask.at[1, 0, SEQ - 2:].set(0)   # pad last 2 tokens of batch 1

    out = encoder_forward(src, mask, params)
    jax.block_until_ready(out)

    assert out.shape == (BATCH, SEQ, D_MODEL)
    assert bool(jnp.all(jnp.isfinite(out)))
    print("KERNEL_OK")
</pallas_src>

<mosaic_0001>
module attributes {stable_mosaic.version = 11 : i64} {
  func.func @encoder_kernel(%arg0: i32, %arg1: memref<16x1xi32, #tpu.memory_space<vmem>>, %arg2: memref<2x1x8xi32, #tpu.memory_space<vmem>>, %arg3: memref<50x32xf32, #tpu.memory_space<vmem>>, %arg4: memref<8x32xf32, #tpu.memory_space<vmem>>, %arg5: memref<2x32x128xf32, #tpu.memory_space<vmem>>, %arg6: memref<2x64x32xf32, #tpu.memory_space<vmem>>, %arg7: memref<2x8x64xf32, #tpu.memory_space<vmem>>, %arg8: memref<2x32xf32, #tpu.memory_space<vmem>>, %arg9: memref<2x8x32xf32, #tpu.memory_space<vmem>>) attributes {dimension_semantics = [#tpu.dimension_semantics<arbitrary>], iteration_bounds = array<i64: 1>, scalar_prefetch = 0 : i64, scratch_operands = 0 : i64, tpu.core_type = #tpu.core_type<tc>, window_params = [{pipeline_mode = #tpu.pipeline_mode<synchronous>, transform_indices = @transform_0, window_bounds = array<i64: 16, 1>}, {pipeline_mode = #tpu.pipeline_mode<synchronous>, transform_indices = @transform_1, window_bounds = array<i64: 2, 1, 8>}, {pipeline_mode = #tpu.pipeline_mode<synchronous>, transform_indices = @transform_2, window_bounds = array<i64: 50, 32>}, {transform_indices = @transform_3, window_bounds = array<i64: 8, 32>}, {pipeline_mode = #tpu.pipeline_mode<synchronous>, transform_indices = @transform_4, window_bounds = array<i64: 2, 32, 128>}, {pipeline_mode = #tpu.pipeline_mode<synchronous>, transform_indices = @transform_5, window_bounds = array<i64: 2, 64, 32>}, {pipeline_mode = #tpu.pipeline_mode<synchronous>, transform_indices = @transform_6, window_bounds = array<i64: 2, 8, 64>}, {pipeline_mode = #tpu.pipeline_mode<synchronous>, transform_indices = @transform_7, window_bounds = array<i64: 2, 32>}, {pipeline_mode = #tpu.pipeline_mode<synchronous>, transform_indices = @transform_8, window_bounds = array<i64: 2, 8, 32>}]} {
    %c0 = arith.constant 0 : index
    %c0_0 = arith.constant 0 : index
    %0 = vector.load %arg1[%c0, %c0_0] : memref<16x1xi32, #tpu.memory_space<vmem>>, vector<16x1xi32>
    %1 = tpu.iota {dimensions = array<i32: 1>} : vector<16x50xi32>
    %2 = vector.broadcast %0 : vector<16x1xi32> to vector<16x50xi32>
    %3 = arith.cmpi eq, %1, %2 : vector<16x50xi32>
    %4 = arith.extui %3 : vector<16x50xi1> to vector<16x50xi32>
    %5 = arith.sitofp %4 : vector<16x50xi32> to vector<16x50xf32>
    %c0_1 = arith.constant 0 : index
    %c0_2 = arith.constant 0 : index
    %6 = vector.load %arg3[%c0_1, %c0_2] : memref<50x32xf32, #tpu.memory_space<vmem>>, vector<50x32xf32>
    %cst = arith.constant dense<0.000000e+00> : vector<16x32xf32>
    %7 = tpu.matmul %5, %6, %cst {dimension_numbers = #tpu.dot_dimension_numbers<[1], [0], [0], [1], [0, 0, 1, 1], [], []>} : vector<16x50xf32>, vector<50x32xf32>, vector<16x32xf32> -> vector<16x32xf32>
    %c0_3 = arith.constant 0 : index
    %c0_4 = arith.constant 0 : index
    %8 = vector.load %arg4[%c0_3, %c0_4] : memref<8x32xf32, #tpu.memory_space<vmem>>, vector<8x32xf32>
    %9 = tpu.concatenate %8, %8 in 0 : vector<8x32xf32>, vector<8x32xf32> -> vector<16x32xf32>
    %10 = arith.addf %7, %9 : vector<16x32xf32>
    %c0_5 = arith.constant 0 : index
    %c0_6 = arith.constant 0 : index
    %c0_7 = arith.constant 0 : index
    %11 = vector.load %arg2[%c0_5, %c0_6, %c0_7] : memref<2x1x8xi32, #tpu.memory_space<vmem>>, vector<2x1x8xi32>
    %12 = arith.sitofp %11 : vector<2x1x8xi32> to vector<2x1x8xf32>
    %cst_8 = arith.constant 1.000000e+00 : f32
    %13 = vector.broadcast %cst_8 : f32 to vector<2x1x8xf32>
    %14 = arith.subf %12, %13 : vector<2x1x8xf32>
    %cst_9 = arith.constant 1.000000e+09 : f32
    %15 = vector.broadcast %cst_9 : f32 to vector<2x1x8xf32>
    %16 = arith.mulf %14, %15 : vector<2x1x8xf32>
    %17 = tpu.iota {dimensions = array<i32: 2>} : vector<1x1x32xi32>
    %c0_i32 = arith.constant 0 : i32
    %18 = vector.broadcast %c0_i32 : i32 to vector<1x1x32xi32>
    %19 = arith.cmpi sge, %17, %18 : vector<1x1x32xi32>
    %c8_i32 = arith.constant 8 : i32
    %20 = vector.broadcast %c8_i32 : i32 to vector<1x1x32xi32>
    %21 = arith.cmpi slt, %17, %20 : vector<1x1x32xi32>
    %22 = arith.andi %19, %21 : vector<1x1x32xi1>
    %23 = arith.extui %22 : vector<1x1x32xi1> to vector<1x1x32xi32>
    %24 = arith.sitofp %23 : vector<1x1x32xi32> to vector<1x1x32xf32>
    %c8_i32_10 = arith.constant 8 : i32
    %25 = vector.broadcast %c8_i32_10 : i32 to vector<1x1x32xi32>
    %26 = arith.cmpi sge, %17, %25 : vector<1x1x32xi32>
    %c16_i32 = arith.constant 16 : i32
    %27 = vector.broadcast %c16_i32 : i32 to vector<1x1x32xi32>
    %28 = arith.cmpi slt, %17, %27 : vector<1x1x32xi32>
    %29 = arith.andi %26, %28 : vector<1x1x32xi1>
    %30 = arith.extui %29 : vector<1x1x32xi1> to vector<1x1x32xi32>
    %31 = arith.sitofp %30 : vector<1x1x32xi32> to vector<1x1x32xf32>
    %c16_i32_11 = arith.constant 16 : i32
    %32 = vector.broadcast %c16_i32_11 : i32 to vector<1x1x32xi32>
    %33 = arith.cmpi sge, %17, %32 : vector<1x1x32xi32>
    %c24_i32 = arith.constant 24 : i32
    %34 = vector.broadcast %c24_i32 : i32 to vector<1x1x32xi32>
    %35 = arith.cmpi slt, %17, %34 : vector<1x1x32xi32>
    %36 = arith.andi %33, %35 : vector<1x1x32xi1>
    %37 = arith.extui %36 : vector<1x1x32xi1> to vector<1x1x32xi32>
    %38 = arith.sitofp %37 : vector<1x1x32xi32> to vector<1x1x32xf32>
    %c24_i32_12 = arith.constant 24 : i32
    %39 = vector.broadcast %c24_i32_12 : i32 to vector<1x1x32xi32>
    %40 = arith.cmpi sge, %17, %39 : vector<1x1x32xi32>
    %c32_i32 = arith.constant 32 : i32
    %41 = vector.broadcast %c32_i32 : i32 to vector<1x1x32xi32>
    %42 = arith.cmpi slt, %17, %41 : vector<1x1x32xi32>
    %43 = arith.andi %40, %42 : vector<1x1x32xi1>
    %44 = arith.extui %43 : vector<1x1x32xi1> to vector<1x1x32xi32>
    %45 = arith.sitofp %44 : vector<1x1x32xi32> to vector<1x1x32xf32>
    %c0_13 = arith.constant 0 : index
    %c0_14 = arith.constant 0 : index
    %c0_15 = arith.constant 0 : index
    %46 = vector.load %arg5[%c0_13, %c0_14, %c0_15] : memref<2x32x128xf32, #tpu.memory_space<vmem>>, vector<1x32x128xf32>
    %47 = vector.shape_cast %46 : vector<1x32x128xf32> to vector<32x128xf32>
    %48 = vector.extract_strided_slice %47 {offsets = [0, 0], sizes = [32, 32], strides = [1, 1]} : vector<32x128xf32> to vector<32x32xf32>
    %49 = arith.truncf %48 : vector<32x32xf32> to vector<32x32xbf16>
    %50 = vector.extract_strided_slice %47 {offsets = [0, 32], sizes = [32, 32], strides = [1, 1]} : vector<32x128xf32> to vector<32x32xf32>
    %51 = arith.truncf %50 : vector<32x32xf32> to vector<32x32xbf16>
    %52 = vector.extract_strided_slice %47 {offsets = [0, 64], sizes = [32, 64], strides = [1, 1]} : vector<32x128xf32> to vector<32x64xf32>
    %53 = arith.truncf %52 : vector<32x64xf32> to vector<32x64xbf16>
    %c0_16 = arith.constant 0 : index
    %c0_17 = arith.constant 0 : index
    %c0_18 = arith.constant 0 : index
    %54 = vector.load %arg6[%c0_16, %c0_17, %c0_18] : memref<2x64x32xf32, #tpu.memory_space<vmem>>, vector<1x64x32xf32>
    %55 = vector.shape_cast %54 : vector<1x64x32xf32> to vector<64x32xf32>
    %56 = arith.truncf %55 : vector<64x32xf32> to vector<64x32xbf16>
    %c0_19 = arith.constant 0 : index
    %c0_20 = arith.constant 0 : index
    %c0_21 = arith.constant 0 : index
    %57 = vector.load %arg7[%c0_19, %c0_20, %c0_21] : memref<2x8x64xf32, #tpu.memory_space<vmem>>, vector<1x8x64xf32>
    %58 = vector.shape_cast %57 : vector<1x8x64xf32> to vector<8x64xf32>
    %59 = vector.extract_strided_slice %58 {offsets = [0, 0], sizes = [1, 32], strides = [1, 1]} : vector<8x64xf32> to vector<1x32xf32>
    %60 = vector.extract_strided_slice %58 {offsets = [1, 0], sizes = [1, 32], strides = [1, 1]} : vector<8x64xf32> to vector<1x32xf32>
    %61 = vector.extract_strided_slice %58 {offsets = [2, 0], sizes = [1, 32], strides = [1, 1]} : vector<8x64xf32> to vector<1x32xf32>
    %62 = vector.extract_strided_slice %58 {offsets = [3, 0], sizes = [1, 32], strides = [1, 1]} : vector<8x64xf32> to vector<1x32xf32>
    %63 = vector.extract_strided_slice %58 {offsets = [4, 0], sizes = [1, 32], strides = [1, 1]} : vector<8x64xf32> to vector<1x32xf32>
    %64 = vector.extract_strided_slice %58 {offsets = [5, 0], sizes = [1, 32], strides = [1, 1]} : vector<8x64xf32> to vector<1x32xf32>
    %65 = vector.extract_strided_slice %58 {offsets = [6, 0], sizes = [1, 32], strides = [1, 1]} : vector<8x64xf32> to vector<1x32xf32>
    %66 = vector.extract_strided_slice %58 {offsets = [7, 0], sizes = [1, 64], strides = [1, 1]} : vector<8x64xf32> to vector<1x64xf32>
    %67 = arith.truncf %10 : vector<16x32xf32> to vector<16x32xbf16>
    %cst_22 = arith.constant dense<0.000000e+00> : vector<16x32xf32>
    %68 = tpu.matmul %67, %49, %cst_22 {dimension_numbers = #tpu.dot_dimension_numbers<[1], [0], [0], [1], [0, 0, 1, 1], [], []>} : vector<16x32xbf16>, vector<32x32xbf16>, vector<16x32xf32> -> vector<16x32xf32>
    %69 = vector.broadcast %59 : vector<1x32xf32> to vector<16x32xf32>
    %70 = arith.addf %68, %69 : vector<16x32xf32>
    %71 = vector.shape_cast %70 : vector<16x32xf32> to vector<2x8x32xf32>
    %72 = vector.extract_strided_slice %71 {offsets = [0, 0, 0], sizes = [2, 8, 8], strides = [1, 1, 1]} : vector<2x8x32xf32> to vector<2x8x8xf32>
    %73 = arith.truncf %72 : vector<2x8x8xf32> to vector<2x8x8xbf16>
    "tpu.trace_start"() <{level = 10 : i32, message = "bqd,bkd->bqk"}> : () -> ()
    %cst_23 = arith.constant dense<0.000000e+00> : vector<2x8x8xf32>
    %74 = tpu.matmul %73, %73, %cst_23 {dimension_numbers = #tpu.dot_dimension_numbers<[2], [2], [1], [1], [0, 0, 0, 1, 1, 1], [0], [0]>} : vector<2x8x8xbf16>, vector<2x8x8xbf16>, vector<2x8x8xf32> -> vector<2x8x8xf32>
    "tpu.trace_stop"() : () -> ()
    %75 = vector.extract_strided_slice %71 {offsets = [0, 0, 8], sizes = [2, 8, 8], strides = [1, 1, 1]} : vector<2x8x32xf32> to vector<2x8x8xf32>
    %76 = arith.truncf %75 : vector<2x8x8xf32> to vector<2x8x8xbf16>
    "tpu.trace_start"() <{level = 10 : i32, message = "bqd,bkd->bqk"}> : () -> ()
    %cst_24 = arith.constant dense<0.000000e+00> : vector<2x8x8xf32>
    %77 = tpu.matmul %76, %76, %cst_24 {dimension_numbers = #tpu.dot_dimension_numbers<[2], [2], [1], [1], [0, 0, 0, 1, 1, 1], [0], [0]>} : vector<2x8x8xbf16>, vector<2x8x8xbf16>, vector<2x8x8xf32> -> vector<2x8x8xf32>
    "tpu.trace_stop"() : () -> ()
    %78 = vector.extract_strided_slice %71 {offsets = [0, 0, 16], sizes = [2, 8, 8], strides = [1, 1, 1]} : vector<2x8x32xf32> to vector<2x8x8xf32>
    %79 = arith.truncf %78 : vector<2x8x8xf32> to vector<2x8x8xbf16>
    "tpu.trace_start"() <{level = 10 : i32, message = "bqd,bkd->bqk"}> : () -> ()
    %cst_25 = arith.constant dense<0.000000e+00> : vector<2x8x8xf32>
    %80 = tpu.matmul %79, %79, %cst_25 {dimension_numbers = #tpu.dot_dimension_numbers<[2], [2], [1], [1], [0, 0, 0, 1, 1, 1], [0], [0]>} : vector<2x8x8xbf16>, vector<2x8x8xbf16>, vector<2x8x8xf32> -> vector<2x8x8xf32>
    "tpu.trace_stop"() : () -> ()
    %81 = vector.extract_strided_slice %71 {offsets = [0, 0, 24], sizes = [2, 8, 8], strides = [1, 1, 1]} : vector<2x8x32xf32> to vector<2x8x8xf32>
    %82 = arith.truncf %81 : vector<2x8x8xf32> to vector<2x8x8xbf16>
    "tpu.trace_start"() <{level = 10 : i32, message = "bqd,bkd->bqk"}> : () -> ()
    %cst_26 = arith.constant dense<0.000000e+00> : vector<2x8x8xf32>
    %83 = tpu.matmul %82, %82, %cst_26 {dimension_numbers = #tpu.dot_dimension_numbers<[2], [2], [1], [1], [0, 0, 0, 1, 1, 1], [0], [0]>} : vector<2x8x8xbf16>, vector<2x8x8xbf16>, vector<2x8x8xf32> -> vector<2x8x8xf32>
    "tpu.trace_stop"() : () -> ()
    %84 = tpu.concatenate %74, %77, %80, %83 in 1 : vector<2x8x8xf32>, vector<2x8x8xf32>, vector<2x8x8xf32>, vector<2x8x8xf32> -> vector<2x32x8xf32>
    %cst_27 = arith.constant 0.353553385 : f32
    %85 = vector.broadcast %cst_27 : f32 to vector<2x32x8xf32>
    %86 = arith.mulf %84, %85 : vector<2x32x8xf32>
    %87 = vector.broadcast %16 : vector<2x1x8xf32> to vector<2x32x8xf32>
    %88 = arith.addf %86, %87 : vector<2x32x8xf32>
    %cst_28 = arith.constant dense<0xFF800000> : vector<2x32xf32>
    %89 = vector.multi_reduction <maximumf>, %88, %cst_28 [2] : vector<2x32x8xf32> to vector<2x32xf32>
    %90 = vector.shape_cast %89 : vector<2x32xf32> to vector<2x32x1xf32>
    %91 = vector.broadcast %90 : vector<2x32x1xf32> to vector<2x32x8xf32>
    %92 = arith.subf %88, %91 : vector<2x32x8xf32>
    %93 = math.exp %92 : vector<2x32x8xf32>
    %cst_29 = arith.constant dense<0.000000e+00> : vector<2x32xf32>
    %94 = vector.multi_reduction <add>, %93, %cst_29 [2] : vector<2x32x8xf32> to vector<2x32xf32>
    %95 = vector.shape_cast %94 : vector<2x32xf32> to vector<2x32x1xf32>
    %96 = tpu.reciprocal %95 {approx = true} : vector<2x32x1xf32> -> vector<2x32x1xf32>
    %97 = vector.broadcast %96 : vector<2x32x1xf32> to vector<2x32x8xf32>
    %98 = arith.mulf %93, %97 : vector<2x32x8xf32>
    %cst_30 = arith.constant 0.000000e+00 : f32
    %99 = vector.broadcast %cst_30 : f32 to vector<2x8x32xf32>
    %100 = vector.extract_strided_slice %98 {offsets = [0, 0, 0], sizes = [2, 8, 8], strides = [1, 1, 1]} : vector<2x32x8xf32> to vector<2x8x8xf32>
    %101 = arith.truncf %100 : vector<2x8x8xf32> to vector<2x8x8xbf16>
    %102 = vector.broadcast %24 : vector<1x1x32xf32> to vector<2x8x32xf32>
    %103 = arith.mulf %71, %102 : vector<2x8x32xf32>
    %104 = arith.truncf %103 : vector<2x8x32xf32> to vector<2x8x32xbf16>
    "tpu.trace_start"() <{level = 10 : i32, message = "bqk,bkd->bqd"}> : () -> ()
    %cst_31 = arith.constant dense<0.000000e+00> : vector<2x8x32xf32>
    %105 = tpu.matmul %101, %104, %cst_31 {dimension_numbers = #tpu.dot_dimension_numbers<[2], [1], [1], [2], [0, 0, 0, 1, 1, 2], [0], [0]>} : vector<2x8x8xbf16>, vector<2x8x32xbf16>, vector<2x8x32xf32> -> vector<2x8x32xf32>
    "tpu.trace_stop"() : () -> ()
    %106 = arith.addf %99, %105 : vector<2x8x32xf32>
    %107 = vector.extract_strided_slice %98 {offsets = [0, 8, 0], sizes = [2, 8, 8], strides = [1, 1, 1]} : vector<2x32x8xf32> to vector<2x8x8xf32>
    %108 = arith.truncf %107 : vector<2x8x8xf32> to vector<2x8x8xbf16>
    %109 = vector.broadcast %31 : vector<1x1x32xf32> to vector<2x8x32xf32>
    %110 = arith.mulf %71, %109 : vector<2x8x32xf32>
    %111 = arith.truncf %110 : vector<2x8x32xf32> to vector<2x8x32xbf16>
    "tpu.trace_start"() <{level = 10 : i32, message = "bqk,bkd->bqd"}> : () -> ()
    %cst_32 = arith.constant dense<0.000000e+00> : vector<2x8x32xf32>
    %112 = tpu.matmul %108, %111, %cst_32 {dimension_numbers = #tpu.dot_dimension_numbers<[2], [1], [1], [2], [0, 0, 0, 1, 1, 2], [0], [0]>} : vector<2x8x8xbf16>, vector<2x8x32xbf16>, vector<2x8x32xf32> -> vector<2x8x32xf32>
    "tpu.trace_stop"() : () -> ()
    %113 = arith.addf %106, %112 : vector<2x8x32xf32>
    %114 = vector.extract_strided_slice %98 {offsets = [0, 16, 0], sizes = [2, 8, 8], strides = [1, 1, 1]} : vector<2x32x8xf32> to vector<2x8x8xf32>
    %115 = arith.truncf %114 : vector<2x8x8xf32> to vector<2x8x8xbf16>
    %116 = vector.broadcast %38 : vector<1x1x32xf32> to vector<2x8x32xf32>
    %117 = arith.mulf %71, %116 : vector<2x8x32xf32>
    %118 = arith.truncf %117 : vector<2x8x32xf32> to vector<2x8x32xbf16>
    "tpu.trace_start"() <{level = 10 : i32, message = "bqk,bkd->bqd"}> : () -> ()
    %cst_33 = arith.constant dense<0.000000e+00> : vector<2x8x32xf32>
    %119 = tpu.matmul %115, %118, %cst_33 {dimension_numbers = #tpu.dot_dimension_numbers<[2], [1], [1], [2], [0, 0, 0, 1, 1, 2], [0], [0]>} : vector<2x8x8xbf16>, vector<2x8x32xbf16>, vector<2x8x32xf32> -> vector<2x8x32xf32>
    "tpu.trace_stop"() : () -> ()
    %120 = arith.addf %113, %119 : vector<2x8x32xf32>
    %121 = vector.extract_strided_slice %98 {offsets = [0, 24, 0], sizes = [2, 8, 8], strides = [1, 1, 1]} : vector<2x32x8xf32> to vector<2x8x8xf32>
    %122 = arith.truncf %121 : vector<2x8x8xf32> to vector<2x8x8xbf16>
    %123 = vector.broadcast %45 : vector<1x1x32xf32> to vector<2x8x32xf32>
    %124 = arith.mulf %71, %123 : vector<2x8x32xf32>
    %125 = arith.truncf %124 : vector<2x8x32xf32> to vector<2x8x32xbf16>
    "tpu.trace_start"() <{level = 10 : i32, message = "bqk,bkd->bqd"}> : () -> ()
    %cst_34 = arith.constant dense<0.000000e+00> : vector<2x8x32xf32>
    %126 = tpu.matmul %122, %125, %cst_34 {dimension_numbers = #tpu.dot_dimension_numbers<[2], [1], [1], [2], [0, 0, 0, 1, 1, 2], [0], [0]>} : vector<2x8x8xbf16>, vector<2x8x32xbf16>, vector<2x8x32xf32> -> vector<2x8x32xf32>
    "tpu.trace_stop"() : () -> ()
    %127 = arith.addf %120, %126 : vector<2x8x32xf32>
    %128 = vector.shape_cast %127 : vector<2x8x32xf32> to vector<16x32xf32>
    %129 = arith.truncf %128 : vector<16x32xf32> to vector<16x32xbf16>
    %cst_35 = arith.constant dense<0.000000e+00> : vector<16x32xf32>
    %130 = tpu.matmul %129, %51, %cst_35 {dimension_numbers = #tpu.dot_dimension_numbers<[1], [0], [0], [1], [0, 0, 1, 1], [], []>} : vector<16x32xbf16>, vector<32x32xbf16>, vector<16x32xf32> -> vector<16x32xf32>
    %131 = vector.broadcast %60 : vector<1x32xf32> to vector<16x32xf32>
    %132 = arith.addf %130, %131 : vector<16x32xf32>
    %133 = arith.addf %10, %132 : vector<16x32xf32>
    %cst_36 = arith.constant dense<0.000000e+00> : vector<16xf32>
    %134 = vector.multi_reduction <add>, %133, %cst_36 [1] : vector<16x32xf32> to vector<16xf32>
    %135 = vector.shape_cast %134 : vector<16xf32> to vector<16x1xf32>
    %cst_37 = arith.constant 3.200000e+01 : f32
    %136 = vector.broadcast %cst_37 : f32 to vector<16x1xf32>
    %137 = arith.divf %135, %136 : vector<16x1xf32>
    %138 = vector.broadcast %137 : vector<16x1xf32> to vector<16x32xf32>
    %139 = arith.subf %133, %138 : vector<16x32xf32>
    %140 = arith.mulf %139, %139 : vector<16x32xf32>
    %cst_38 = arith.constant dense<0.000000e+00> : vector<16xf32>
    %141 = vector.multi_reduction <add>, %140, %cst_38 [1] : vector<16x32xf32> to vector<16xf32>
    %142 = vector.shape_cast %141 : vector<16xf32> to vector<16x1xf32>
    %cst_39 = arith.constant 0.0322580636 : f32
    %143 = vector.broadcast %cst_39 : f32 to vector<16x1xf32>
    %144 = arith.mulf %142, %143 : vector<16x1xf32>
    %145 = math.sqrt %144 : vector<16x1xf32>
    %cst_40 = arith.constant 9.99999997E-7 : f32
    %146 = vector.broadcast %cst_40 : f32 to vector<16x1xf32>
    %147 = arith.addf %145, %146 : vector<16x1xf32>
    %148 = vector.broadcast %147 : vector<16x1xf32> to vector<16x32xf32>
    %149 = arith.divf %139, %148 : vector<16x32xf32>
    %150 = vector.broadcast %62 : vector<1x32xf32> to vector<16x32xf32>
    %151 = arith.mulf %150, %149 : vector<16x32xf32>
    %152 = vector.broadcast %63 : vector<1x32xf32> to vector<16x32xf32>
    %153 = arith.addf %151, %152 : vector<16x32xf32>
    %154 = arith.truncf %153 : vector<16x32xf32> to vector<16x32xbf16>
    %cst_41 = arith.constant dense<0.000000e+00> : vector<16x64xf32>
    %155 = tpu.matmul %154, %53, %cst_41 {dimension_numbers = #tpu.dot_dimension_numbers<[1], [0], [0], [1], [0, 0, 1, 1], [], []>} : vector<16x32xbf16>, vector<32x64xbf16>, vector<16x64xf32> -> vector<16x64xf32>
    %156 = vector.broadcast %66 : vector<1x64xf32> to vector<16x64xf32>
    %157 = arith.addf %155, %156 : vector<16x64xf32>
    %cst_42 = arith.constant 0.000000e+00 : f32
    %158 = vector.broadcast %cst_42 : f32 to vector<16x64xf32>
    %159 = arith.maximumf %157, %158 : vector<16x64xf32>
    %160 = arith.truncf %159 : vector<16x64xf32> to vector<16x64xbf16>
    %cst_43 = arith.constant dense<0.000000e+00> : vector<16x32xf32>
    %161 = tpu.matmul %160, %56, %cst_43 {dimension_numbers = #tpu.dot_dimension_numbers<[1], [0], [0], [1], [0, 0, 1, 1], [], []>} : vector<16x64xbf16>, vector<64x32xbf16>, vector<16x32xf32> -> vector<16x32xf32>
    %162 = vector.broadcast %61 : vector<1x32xf32> to vector<16x32xf32>
    %163 = arith.addf %161, %162 : vector<16x32xf32>
    %164 = arith.addf %153, %163 : vector<16x32xf32>
    %cst_44 = arith.constant dense<0.000000e+00> : vector<16xf32>
    %165 = vector.multi_reduction <add>, %164, %cst_44 [1] : vector<16x32xf32> to vector<16xf32>
    %166 = vector.shape_cast %165 : vector<16xf32> to vector<16x1xf32>
    %cst_45 = arith.constant 3.200000e+01 : f32
    %167 = vector.broadcast %cst_45 : f32 to vector<16x1xf32>
    %168 = arith.divf %166, %167 : vector<16x1xf32>
    %169 = vector.broadcast %168 : vector<16x1xf32> to vector<16x32xf32>
    %170 = arith.subf %164, %169 : vector<16x32xf32>
    %171 = arith.mulf %170, %170 : vector<16x32xf32>
    %cst_46 = arith.constant dense<0.000000e+00> : vector<16xf32>
    %172 = vector.multi_reduction <add>, %171, %cst_46 [1] : vector<16x32xf32> to vector<16xf32>
    %173 = vector.shape_cast %172 : vector<16xf32> to vector<16x1xf32>
    %cst_47 = arith.constant 0.0322580636 : f32
    %174 = vector.broadcast %cst_47 : f32 to vector<16x1xf32>
    %175 = arith.mulf %173, %174 : vector<16x1xf32>
    %176 = math.sqrt %175 : vector<16x1xf32>
    %cst_48 = arith.constant 9.99999997E-7 : f32
    %177 = vector.broadcast %cst_48 : f32 to vector<16x1xf32>
    %178 = arith.addf %176, %177 : vector<16x1xf32>
    %179 = vector.broadcast %178 : vector<16x1xf32> to vector<16x32xf32>
    %180 = arith.divf %170, %179 : vector<16x32xf32>
    %181 = vector.broadcast %64 : vector<1x32xf32> to vector<16x32xf32>
    %182 = arith.mulf %181, %180 : vector<16x32xf32>
    %183 = vector.broadcast %65 : vector<1x32xf32> to vector<16x32xf32>
    %184 = arith.addf %182, %183 : vector<16x32xf32>
    %c1 = arith.constant 1 : index
    %c0_49 = arith.constant 0 : index
    %c0_50 = arith.constant 0 : index
    %185 = vector.load %arg5[%c1, %c0_49, %c0_50] : memref<2x32x128xf32, #tpu.memory_space<vmem>>, vector<1x32x128xf32>
    %186 = vector.shape_cast %185 : vector<1x32x128xf32> to vector<32x128xf32>
    %187 = vector.extract_strided_slice %186 {offsets = [0, 0], sizes = [32, 32], strides = [1, 1]} : vector<32x128xf32> to vector<32x32xf32>
    %188 = arith.truncf %187 : vector<32x32xf32> to vector<32x32xbf16>
    %189 = vector.extract_strided_slice %186 {offsets = [0, 32], sizes = [32, 32], strides = [1, 1]} : vector<32x128xf32> to vector<32x32xf32>
    %190 = arith.truncf %189 : vector<32x32xf32> to vector<32x32xbf16>
    %191 = vector.extract_strided_slice %186 {offsets = [0, 64], sizes = [32, 64], strides = [1, 1]} : vector<32x128xf32> to vector<32x64xf32>
    %192 = arith.truncf %191 : vector<32x64xf32> to vector<32x64xbf16>
    %c1_51 = arith.constant 1 : index
    %c0_52 = arith.constant 0 : index
    %c0_53 = arith.constant 0 : index
    %193 = vector.load %arg6[%c1_51, %c0_52, %c0_53] : memref<2x64x32xf32, #tpu.memory_space<vmem>>, vector<1x64x32xf32>
    %194 = vector.shape_cast %193 : vector<1x64x32xf32> to vector<64x32xf32>
    %195 = arith.truncf %194 : vector<64x32xf32> to vector<64x32xbf16>
    %c1_54 = arith.constant 1 : index
    %c0_55 = arith.constant 0 : index
    %c0_56 = arith.constant 0 : index
    %196 = vector.load %arg7[%c1_54, %c0_55, %c0_56] : memref<2x8x64xf32, #tpu.memory_space<vmem>>, vector<1x8x64xf32>
    %197 = vector.shape_cast %196 : vector<1x8x64xf32> to vector<8x64xf32>
    %198 = vector.extract_strided_slice %197 {offsets = [0, 0], sizes = [1, 32], strides = [1, 1]} : vector<8x64xf32> to vector<1x32xf32>
    %199 = vector.extract_strided_slice %197 {offsets = [1, 0], sizes = [1, 32], strides = [1, 1]} : vector<8x64xf32> to vector<1x32xf32>
    %200 = vector.extract_strided_slice %197 {offsets = [2, 0], sizes = [1, 32], strides = [1, 1]} : vector<8x64xf32> to vector<1x32xf32>
    %201 = vector.extract_strided_slice %197 {offsets = [3, 0], sizes = [1, 32], strides = [1, 1]} : vector<8x64xf32> to vector<1x32xf32>
    %202 = vector.extract_strided_slice %197 {offsets = [4, 0], sizes = [1, 32], strides = [1, 1]} : vector<8x64xf32> to vector<1x32xf32>
    %203 = vector.extract_strided_slice %197 {offsets = [5, 0], sizes = [1, 32], strides = [1, 1]} : vector<8x64xf32> to vector<1x32xf32>
    %204 = vector.extract_strided_slice %197 {offsets = [6, 0], sizes = [1, 32], strides = [1, 1]} : vector<8x64xf32> to vector<1x32xf32>
    %205 = vector.extract_strided_slice %197 {offsets = [7, 0], sizes = [1, 64], strides = [1, 1]} : vector<8x64xf32> to vector<1x64xf32>
    %206 = arith.truncf %184 : vector<16x32xf32> to vector<16x32xbf16>
    %cst_57 = arith.constant dense<0.000000e+00> : vector<16x32xf32>
    %207 = tpu.matmul %206, %188, %cst_57 {dimension_numbers = #tpu.dot_dimension_numbers<[1], [0], [0], [1], [0, 0, 1, 1], [], []>} : vector<16x32xbf16>, vector<32x32xbf16>, vector<16x32xf32> -> vector<16x32xf32>
    %208 = vector.broadcast %198 : vector<1x32xf32> to vector<16x32xf32>
    %209 = arith.addf %207, %208 : vector<16x32xf32>
    %210 = vector.shape_cast %209 : vector<16x32xf32> to vector<2x8x32xf32>
    %211 = vector.extract_strided_slice %210 {offsets = [0, 0, 0], sizes = [2, 8, 8], strides = [1, 1, 1]} : vector<2x8x32xf32> to vector<2x8x8xf32>
    %212 = arith.truncf %211 : vector<2x8x8xf32> to vector<2x8x8xbf16>
    "tpu.trace_start"() <{level = 10 : i32, message = "bqd,bkd->bqk"}> : () -> ()
    %cst_58 = arith.constant dense<0.000000e+00> : vector<2x8x8xf32>
    %213 = tpu.matmul %212, %212, %cst_58 {dimension_numbers = #tpu.dot_dimension_numbers<[2], [2], [1], [1], [0, 0, 0, 1, 1, 1], [0], [0]>} : vector<2x8x8xbf16>, vector<2x8x8xbf16>, vector<2x8x8xf32> -> vector<2x8x8xf32>
    "tpu.trace_stop"() : () -> ()
    %214 = vector.extract_strided_slice %210 {offsets = [0, 0, 8], sizes = [2, 8, 8], strides = [1, 1, 1]} : vector<2x8x32xf32> to vector<2x8x8xf32>
    %215 = arith.truncf %214 : vector<2x8x8xf32> to vector<2x8x8xbf16>
    "tpu.trace_start"() <{level = 10 : i32, message = "bqd,bkd->bqk"}> : () -> ()
    %cst_59 = arith.constant dense<0.000000e+00> : vector<2x8x8xf32>
    %216 = tpu.matmul %215, %215, %cst_59 {dimension_numbers = #tpu.dot_dimension_numbers<[2], [2], [1], [1], [0, 0, 0, 1, 1, 1], [0], [0]>} : vector<2x8x8xbf16>, vector<2x8x8xbf16>, vector<2x8x8xf32> -> vector<2x8x8xf32>
    "tpu.trace_stop"() : () -> ()
    %217 = vector.extract_strided_slice %210 {offsets = [0, 0, 16], sizes = [2, 8, 8], strides = [1, 1, 1]} : vector<2x8x32xf32> to vector<2x8x8xf32>
    %218 = arith.truncf %217 : vector<2x8x8xf32> to vector<2x8x8xbf16>
    "tpu.trace_start"() <{level = 10 : i32, message = "bqd,bkd->bqk"}> : () -> ()
    %cst_60 = arith.constant dense<0.000000e+00> : vector<2x8x8xf32>
    %219 = tpu.matmul %218, %218, %cst_60 {dimension_numbers = #tpu.dot_dimension_numbers<[2], [2], [1], [1], [0, 0, 0, 1, 1, 1], [0], [0]>} : vector<2x8x8xbf16>, vector<2x8x8xbf16>, vector<2x8x8xf32> -> vector<2x8x8xf32>
    "tpu.trace_stop"() : () -> ()
    %220 = vector.extract_strided_slice %210 {offsets = [0, 0, 24], sizes = [2, 8, 8], strides = [1, 1, 1]} : vector<2x8x32xf32> to vector<2x8x8xf32>
    %221 = arith.truncf %220 : vector<2x8x8xf32> to vector<2x8x8xbf16>
    "tpu.trace_start"() <{level = 10 : i32, message = "bqd,bkd->bqk"}> : () -> ()
    %cst_61 = arith.constant dense<0.000000e+00> : vector<2x8x8xf32>
    %222 = tpu.matmul %221, %221, %cst_61 {dimension_numbers = #tpu.dot_dimension_numbers<[2], [2], [1], [1], [0, 0, 0, 1, 1, 1], [0], [0]>} : vector<2x8x8xbf16>, vector<2x8x8xbf16>, vector<2x8x8xf32> -> vector<2x8x8xf32>
    "tpu.trace_stop"() : () -> ()
    %223 = tpu.concatenate %213, %216, %219, %222 in 1 : vector<2x8x8xf32>, vector<2x8x8xf32>, vector<2x8x8xf32>, vector<2x8x8xf32> -> vector<2x32x8xf32>
    %cst_62 = arith.constant 0.353553385 : f32
    %224 = vector.broadcast %cst_62 : f32 to vector<2x32x8xf32>
    %225 = arith.mulf %223, %224 : vector<2x32x8xf32>
    %226 = vector.broadcast %16 : vector<2x1x8xf32> to vector<2x32x8xf32>
    %227 = arith.addf %225, %226 : vector<2x32x8xf32>
    %cst_63 = arith.constant dense<0xFF800000> : vector<2x32xf32>
    %228 = vector.multi_reduction <maximumf>, %227, %cst_63 [2] : vector<2x32x8xf32> to vector<2x32xf32>
    %229 = vector.shape_cast %228 : vector<2x32xf32> to vector<2x32x1xf32>
    %230 = vector.broadcast %229 : vector<2x32x1xf32> to vector<2x32x8xf32>
    %231 = arith.subf %227, %230 : vector<2x32x8xf32>
    %232 = math.exp %231 : vector<2x32x8xf32>
    %cst_64 = arith.constant dense<0.000000e+00> : vector<2x32xf32>
    %233 = vector.multi_reduction <add>, %232, %cst_64 [2] : vector<2x32x8xf32> to vector<2x32xf32>
    %234 = vector.shape_cast %233 : vector<2x32xf32> to vector<2x32x1xf32>
    %235 = tpu.reciprocal %234 {approx = true} : vector<2x32x1xf32> -> vector<2x32x1xf32>
    %236 = vector.broadcast %235 : vector<2x32x1xf32> to vector<2x32x8xf32>
    %237 = arith.mulf %232, %236 : vector<2x32x8xf32>
    %cst_65 = arith.constant 0.000000e+00 : f32
    %238 = vector.broadcast %cst_65 : f32 to vector<2x8x32xf32>
    %239 = vector.extract_strided_slice %237 {offsets = [0, 0, 0], sizes = [2, 8, 8], strides = [1, 1, 1]} : vector<2x32x8xf32> to vector<2x8x8xf32>
    %240 = arith.truncf %239 : vector<2x8x8xf32> to vector<2x8x8xbf16>
    %241 = vector.broadcast %24 : vector<1x1x32xf32> to vector<2x8x32xf32>
    %242 = arith.mulf %210, %241 : vector<2x8x32xf32>
    %243 = arith.truncf %242 : vector<2x8x32xf32> to vector<2x8x32xbf16>
    "tpu.trace_start"() <{level = 10 : i32, message = "bqk,bkd->bqd"}> : () -> ()
    %cst_66 = arith.constant dense<0.000000e+00> : vector<2x8x32xf32>
    %244 = tpu.matmul %240, %243, %cst_66 {dimension_numbers = #tpu.dot_dimension_numbers<[2], [1], [1], [2], [0, 0, 0, 1, 1, 2], [0], [0]>} : vector<2x8x8xbf16>, vector<2x8x32xbf16>, vector<2x8x32xf32> -> vector<2x8x32xf32>
    "tpu.trace_stop"() : () -> ()
    %245 = arith.addf %238, %244 : vector<2x8x32xf32>
    %246 = vector.extract_strided_slice %237 {offsets = [0, 8, 0], sizes = [2, 8, 8], strides = [1, 1, 1]} : vector<2x32x8xf32> to vector<2x8x8xf32>
    %247 = arith.truncf %246 : vector<2x8x8xf32> to vector<2x8x8xbf16>
    %248 = vector.broadcast %31 : vector<1x1x32xf32> to vector<2x8x32xf32>
    %249 = arith.mulf %210, %248 : vector<2x8x32xf32>
    %250 = arith.truncf %249 : vector<2x8x32xf32> to vector<2x8x32xbf16>
    "tpu.trace_start"() <{level = 10 : i32, message = "bqk,bkd->bqd"}> : () -> ()
    %cst_67 = arith.constant dense<0.000000e+00> : vector<2x8x32xf32>
    %251 = tpu.matmul %247, %250, %cst_67 {dimension_numbers = #tpu.dot_dimension_numbers<[2], [1], [1], [2], [0, 0, 0, 1, 1, 2], [0], [0]>} : vector<2x8x8xbf16>, vector<2x8x32xbf16>, vector<2x8x32xf32> -> vector<2x8x32xf32>
    "tpu.trace_stop"() : () -> ()
    %252 = arith.addf %245, %251 : vector<2x8x32xf32>
    %253 = vector.extract_strided_slice %237 {offsets = [0, 16, 0], sizes = [2, 8, 8], strides = [1, 1, 1]} : vector<2x32x8xf32> to vector<2x8x8xf32>
    %254 = arith.truncf %253 : vector<2x8x8xf32> to vector<2x8x8xbf16>
    %255 = vector.broadcast %38 : vector<1x1x32xf32> to vector<2x8x32xf32>
    %256 = arith.mulf %210, %255 : vector<2x8x32xf32>
    %257 = arith.truncf %256 : vector<2x8x32xf32> to vector<2x8x32xbf16>
    "tpu.trace_start"() <{level = 10 : i32, message = "bqk,bkd->bqd"}> : () -> ()
    %cst_68 = arith.constant dense<0.000000e+00> : vector<2x8x32xf32>
    %258 = tpu.matmul %254, %257, %cst_68 {dimension_numbers = #tpu.dot_dimension_numbers<[2], [1], [1], [2], [0, 0, 0, 1, 1, 2], [0], [0]>} : vector<2x8x8xbf16>, vector<2x8x32xbf16>, vector<2x8x32xf32> -> vector<2x8x32xf32>
    "tpu.trace_stop"() : () -> ()
    %259 = arith.addf %252, %258 : vector<2x8x32xf32>
    %260 = vector.extract_strided_slice %237 {offsets = [0, 24, 0], sizes = [2, 8, 8], strides = [1, 1, 1]} : vector<2x32x8xf32> to vector<2x8x8xf32>
    %261 = arith.truncf %260 : vector<2x8x8xf32> to vector<2x8x8xbf16>
    %262 = vector.broadcast %45 : vector<1x1x32xf32> to vector<2x8x32xf32>
    %263 = arith.mulf %210, %262 : vector<2x8x32xf32>
    %264 = arith.truncf %263 : vector<2x8x32xf32> to vector<2x8x32xbf16>
    "tpu.trace_start"() <{level = 10 : i32, message = "bqk,bkd->bqd"}> : () -> ()
    %cst_69 = arith.constant dense<0.000000e+00> : vector<2x8x32xf32>
    %265 = tpu.matmul %261, %264, %cst_69 {dimension_numbers = #tpu.dot_dimension_numbers<[2], [1], [1], [2], [0, 0, 0, 1, 1, 2], [0], [0]>} : vector<2x8x8xbf16>, vector<2x8x32xbf16>, vector<2x8x32xf32> -> vector<2x8x32xf32>
    "tpu.trace_stop"() : () -> ()
    %266 = arith.addf %259, %265 : vector<2x8x32xf32>
    %267 = vector.shape_cast %266 : vector<2x8x32xf32> to vector<16x32xf32>
    %268 = arith.truncf %267 : vector<16x32xf32> to vector<16x32xbf16>
    %cst_70 = arith.constant dense<0.000000e+00> : vector<16x32xf32>
    %269 = tpu.matmul %268, %190, %cst_70 {dimension_numbers = #tpu.dot_dimension_numbers<[1], [0], [0], [1], [0, 0, 1, 1], [], []>} : vector<16x32xbf16>, vector<32x32xbf16>, vector<16x32xf32> -> vector<16x32xf32>
    %270 = vector.broadcast %199 : vector<1x32xf32> to vector<16x32xf32>
    %271 = arith.addf %269, %270 : vector<16x32xf32>
    %272 = arith.addf %184, %271 : vector<16x32xf32>
    %cst_71 = arith.constant dense<0.000000e+00> : vector<16xf32>
    %273 = vector.multi_reduction <add>, %272, %cst_71 [1] : vector<16x32xf32> to vector<16xf32>
    %274 = vector.shape_cast %273 : vector<16xf32> to vector<16x1xf32>
    %cst_72 = arith.constant 3.200000e+01 : f32
    %275 = vector.broadcast %cst_72 : f32 to vector<16x1xf32>
    %276 = arith.divf %274, %275 : vector<16x1xf32>
    %277 = vector.broadcast %276 : vector<16x1xf32> to vector<16x32xf32>
    %278 = arith.subf %272, %277 : vector<16x32xf32>
    %279 = arith.mulf %278, %278 : vector<16x32xf32>
    %cst_73 = arith.constant dense<0.000000e+00> : vector<16xf32>
    %280 = vector.multi_reduction <add>, %279, %cst_73 [1] : vector<16x32xf32> to vector<16xf32>
    %281 = vector.shape_cast %280 : vector<16xf32> to vector<16x1xf32>
    %cst_74 = arith.constant 0.0322580636 : f32
    %282 = vector.broadcast %cst_74 : f32 to vector<16x1xf32>
    %283 = arith.mulf %281, %282 : vector<16x1xf32>
    %284 = math.sqrt %283 : vector<16x1xf32>
    %cst_75 = arith.constant 9.99999997E-7 : f32
    %285 = vector.broadcast %cst_75 : f32 to vector<16x1xf32>
    %286 = arith.addf %284, %285 : vector<16x1xf32>
    %287 = vector.broadcast %286 : vector<16x1xf32> to vector<16x32xf32>
    %288 = arith.divf %278, %287 : vector<16x32xf32>
    %289 = vector.broadcast %201 : vector<1x32xf32> to vector<16x32xf32>
    %290 = arith.mulf %289, %288 : vector<16x32xf32>
    %291 = vector.broadcast %202 : vector<1x32xf32> to vector<16x32xf32>
    %292 = arith.addf %290, %291 : vector<16x32xf32>
    %293 = arith.truncf %292 : vector<16x32xf32> to vector<16x32xbf16>
    %cst_76 = arith.constant dense<0.000000e+00> : vector<16x64xf32>
    %294 = tpu.matmul %293, %192, %cst_76 {dimension_numbers = #tpu.dot_dimension_numbers<[1], [0], [0], [1], [0, 0, 1, 1], [], []>} : vector<16x32xbf16>, vector<32x64xbf16>, vector<16x64xf32> -> vector<16x64xf32>
    %295 = vector.broadcast %205 : vector<1x64xf32> to vector<16x64xf32>
    %296 = arith.addf %294, %295 : vector<16x64xf32>
    %cst_77 = arith.constant 0.000000e+00 : f32
    %297 = vector.broadcast %cst_77 : f32 to vector<16x64xf32>
    %298 = arith.maximumf %296, %297 : vector<16x64xf32>
    %299 = arith.truncf %298 : vector<16x64xf32> to vector<16x64xbf16>
    %cst_78 = arith.constant dense<0.000000e+00> : vector<16x32xf32>
    %300 = tpu.matmul %299, %195, %cst_78 {dimension_numbers = #tpu.dot_dimension_numbers<[1], [0], [0], [1], [0, 0, 1, 1], [], []>} : vector<16x64xbf16>, vector<64x32xbf16>, vector<16x32xf32> -> vector<16x32xf32>
    %301 = vector.broadcast %200 : vector<1x32xf32> to vector<16x32xf32>
    %302 = arith.addf %300, %301 : vector<16x32xf32>
    %303 = arith.addf %292, %302 : vector<16x32xf32>
    %cst_79 = arith.constant dense<0.000000e+00> : vector<16xf32>
    %304 = vector.multi_reduction <add>, %303, %cst_79 [1] : vector<16x32xf32> to vector<16xf32>
    %305 = vector.shape_cast %304 : vector<16xf32> to vector<16x1xf32>
    %cst_80 = arith.constant 3.200000e+01 : f32
    %306 = vector.broadcast %cst_80 : f32 to vector<16x1xf32>
    %307 = arith.divf %305, %306 : vector<16x1xf32>
    %308 = vector.broadcast %307 : vector<16x1xf32> to vector<16x32xf32>
    %309 = arith.subf %303, %308 : vector<16x32xf32>
    %310 = arith.mulf %309, %309 : vector<16x32xf32>
    %cst_81 = arith.constant dense<0.000000e+00> : vector<16xf32>
    %311 = vector.multi_reduction <add>, %310, %cst_81 [1] : vector<16x32xf32> to vector<16xf32>
    %312 = vector.shape_cast %311 : vector<16xf32> to vector<16x1xf32>
    %cst_82 = arith.constant 0.0322580636 : f32
    %313 = vector.broadcast %cst_82 : f32 to vector<16x1xf32>
    %314 = arith.mulf %312, %313 : vector<16x1xf32>
    %315 = math.sqrt %314 : vector<16x1xf32>
    %cst_83 = arith.constant 9.99999997E-7 : f32
    %316 = vector.broadcast %cst_83 : f32 to vector<16x1xf32>
    %317 = arith.addf %315, %316 : vector<16x1xf32>
    %318 = vector.broadcast %317 : vector<16x1xf32> to vector<16x32xf32>
    %319 = arith.divf %309, %318 : vector<16x32xf32>
    %320 = vector.broadcast %203 : vector<1x32xf32> to vector<16x32xf32>
    %321 = arith.mulf %320, %319 : vector<16x32xf32>
    %322 = vector.broadcast %204 : vector<1x32xf32> to vector<16x32xf32>
    %323 = arith.addf %321, %322 : vector<16x32xf32>
    %c0_84 = arith.constant 0 : index
    %c0_85 = arith.constant 0 : index
    %324 = vector.load %arg8[%c0_84, %c0_85] : memref<2x32xf32, #tpu.memory_space<vmem>>, vector<1x32xf32>
    %c1_86 = arith.constant 1 : index
    %c0_87 = arith.constant 0 : index
    %325 = vector.load %arg8[%c1_86, %c0_87] : memref<2x32xf32, #tpu.memory_space<vmem>>, vector<1x32xf32>
    %cst_88 = arith.constant dense<0.000000e+00> : vector<16xf32>
    %326 = vector.multi_reduction <add>, %323, %cst_88 [1] : vector<16x32xf32> to vector<16xf32>
    %327 = vector.shape_cast %326 : vector<16xf32> to vector<16x1xf32>
    %cst_89 = arith.constant 3.200000e+01 : f32
    %328 = vector.broadcast %cst_89 : f32 to vector<16x1xf32>
    %329 = arith.divf %327, %328 : vector<16x1xf32>
    %330 = vector.broadcast %329 : vector<16x1xf32> to vector<16x32xf32>
    %331 = arith.subf %323, %330 : vector<16x32xf32>
    %332 = arith.mulf %331, %331 : vector<16x32xf32>
    %cst_90 = arith.constant dense<0.000000e+00> : vector<16xf32>
    %333 = vector.multi_reduction <add>, %332, %cst_90 [1] : vector<16x32xf32> to vector<16xf32>
    %334 = vector.shape_cast %333 : vector<16xf32> to vector<16x1xf32>
    %cst_91 = arith.constant 0.0322580636 : f32
    %335 = vector.broadcast %cst_91 : f32 to vector<16x1xf32>
    %336 = arith.mulf %334, %335 : vector<16x1xf32>
    %337 = math.sqrt %336 : vector<16x1xf32>
    %cst_92 = arith.constant 9.99999997E-7 : f32
    %338 = vector.broadcast %cst_92 : f32 to vector<16x1xf32>
    %339 = arith.addf %337, %338 : vector<16x1xf32>
    %340 = vector.broadcast %339 : vector<16x1xf32> to vector<16x32xf32>
    %341 = arith.divf %331, %340 : vector<16x32xf32>
    %342 = vector.broadcast %324 : vector<1x32xf32> to vector<16x32xf32>
    %343 = arith.mulf %342, %341 : vector<16x32xf32>
    %344 = vector.broadcast %325 : vector<1x32xf32> to vector<16x32xf32>
    %345 = arith.addf %343, %344 : vector<16x32xf32>
    %346 = vector.shape_cast %345 : vector<16x32xf32> to vector<2x8x32xf32>
    %c0_93 = arith.constant 0 : index
    %c0_94 = arith.constant 0 : index
    %c0_95 = arith.constant 0 : index
    %347 = vector.load %arg9[%c0_93, %c0_94, %c0_95] : memref<2x8x32xf32, #tpu.memory_space<vmem>>, vector<2x8x32xf32>
    tpu.vector_store %arg9[%c0_93, %c0_94, %c0_95], %346 {strides = array<i32>} : memref<2x8x32xf32, #tpu.memory_space<vmem>>, vector<2x8x32xf32>,
    return
  }
  func.func @transform_0(%arg0: i32) -> (i32, i32) {
    %c0_i32 = arith.constant 0 : i32
    %c0_i32_0 = arith.constant 0 : i32
    %c0_i32_1 = arith.constant 0 : i32
    return %c0_i32, %c0_i32_0 : i32, i32
  }
  func.func @transform_1(%arg0: i32) -> (i32, i32, i32) {
    %c0_i32 = arith.constant 0 : i32
    %c0_i32_0 = arith.constant 0 : i32
    %c0_i32_1 = arith.constant 0 : i32
    %c0_i32_2 = arith.constant 0 : i32
    return %c0_i32, %c0_i32_0, %c0_i32_1 : i32, i32, i32
  }
  func.func @transform_2(%arg0: i32) -> (i32, i32) {
    %c0_i32 = arith.constant 0 : i32
    %c0_i32_0 = arith.constant 0 : i32
    %c0_i32_1 = arith.constant 0 : i32
    return %c0_i32, %c0_i32_0 : i32, i32
  }
  func.func @transform_3(%arg0: i32) -> (i32, i32) {
    %c0_i32 = arith.constant 0 : i32
    %c0_i32_0 = arith.constant 0 : i32
    %c0_i32_1 = arith.constant 0 : i32
    return %c0_i32, %c0_i32_0 : i32, i32
  }
  func.func @transform_4(%arg0: i32) -> (i32, i32, i32) {
    %c0_i32 = arith.constant 0 : i32
    %c0_i32_0 = arith.constant 0 : i32
    %c0_i32_1 = arith.constant 0 : i32
    %c0_i32_2 = arith.constant 0 : i32
    return %c0_i32, %c0_i32_0, %c0_i32_1 : i32, i32, i32
  }
  func.func @transform_5(%arg0: i32) -> (i32, i32, i32) {
    %c0_i32 = arith.constant 0 : i32
    %c0_i32_0 = arith.constant 0 : i32
    %c0_i32_1 = arith.constant 0 : i32
    %c0_i32_2 = arith.constant 0 : i32
    return %c0_i32, %c0_i32_0, %c0_i32_1 : i32, i32, i32
  }
  func.func @transform_6(%arg0: i32) -> (i32, i32, i32) {
    %c0_i32 = arith.constant 0 : i32
    %c0_i32_0 = arith.constant 0 : i32
    %c0_i32_1 = arith.constant 0 : i32
    %c0_i32_2 = arith.constant 0 : i32
    return %c0_i32, %c0_i32_0, %c0_i32_1 : i32, i32, i32
  }
  func.func @transform_7(%arg0: i32) -> (i32, i32) {
    %c0_i32 = arith.constant 0 : i32
    %c0_i32_0 = arith.constant 0 : i32
    %c0_i32_1 = arith.constant 0 : i32
    return %c0_i32, %c0_i32_0 : i32, i32
  }
  func.func @transform_8(%arg0: i32) -> (i32, i32, i32) {
    %c0_i32 = arith.constant 0 : i32
    %c0_i32_0 = arith.constant 0 : i32
    %c0_i32_1 = arith.constant 0 : i32
    %c0_i32_2 = arith.constant 0 : i32
    return %c0_i32, %c0_i32_0, %c0_i32_1 : i32, i32, i32
  }
}

</mosaic_0001>

<llo_original>
// kernel: encoder_forward.1
$region0: #{encoder_forward.1}
  #allocation0 [shape = 'u32[]', space=smem, size = 0x4, offset = 0x4, fixed_abs, tag = 'smem constant byte address 0x4 - core index']
  #allocation1 [shape = 'u32[144,128]{1,0:T(1,128)}', space=vmem, size = 0x12000, scoped, tag = 'internal scratch']
  %s0 = inlined_call_operand.vmem [shape: s32[16,1], index: 0, kind: input, shape index: {}]
  %s1 = inlined_call_operand.vmem [shape: s32[2,1,8], index: 1, kind: input, shape index: {}]
  %s2 = inlined_call_operand.vmem [shape: f32[50,32], index: 2, kind: input, shape index: {}]
  %s3 = inlined_call_operand.vmem [shape: f32[80,32], index: 3, kind: input, shape index: {}]
  %s4 = inlined_call_operand.vmem [shape: f32[2,32,128], index: 4, kind: input, shape index: {}]
  %s5 = inlined_call_operand.vmem [shape: f32[2,64,32], index: 5, kind: input, shape index: {}]
  %s6 = inlined_call_operand.vmem [shape: f32[2,8,64], index: 6, kind: input, shape index: {}]
  %s7 = inlined_call_operand.vmem [shape: f32[2,32], index: 7, kind: input, shape index: {}]
  %s8 = inlined_call_operand.hbm [shape: f32[2,8,32], index: 8, kind: output, shape index: {}]
  %s9 = sld [smem:[#allocation0]]
  $region42: #{encoder_forward.1} parent=0
    _
  %s11 = ssub.s32 1, %s9
  %s12 = scalar_select 0, %s11, %s9
  $region1: #{encoder_forward.1} parent=0
    #allocation2 [shape = 'u8[8192]{0}', space=vmem, size = 0x2000, scoped, tag = 'output window, operand 0, single buffered']
    #allocation3 [shape = 's32[1]{0}', space=sflag, size = 0x4, scoped, tag = 'scoped memory for encoder_forward.1']
    %13 = vsyncpa [#allocation3], 0
    // Predicated region
    $region2: #{encoder_forward.1} parent=1 // pred_check
      _
    $region3: #{encoder_forward.1} parent=1 // pred_check_branch
      %15 = sbr.rel (0) target = $region5
    $region4: #{encoder_forward.1} parent=1 // pred_region
      _
    $region5: #{encoder_forward.1} parent=1 // pred_fallthru
      _
    // Predicated region
    $region6: #{encoder_forward.1} parent=1 // pred_check
      _
    $region7: #{encoder_forward.1} parent=1 // pred_check_branch
      %17 = sbr.rel (0) target = $region9
    $region8: #{encoder_forward.1} parent=1 // pred_region
      _
    $region9: #{encoder_forward.1} parent=1 // pred_fallthru
      _
    // Predicated region
    $region10: #{encoder_forward.1} parent=1 // pred_check
      _
    $region11: #{encoder_forward.1} parent=1 // pred_check_branch
      %19 = sbr.rel (0) target = $region13
    $region12: #{encoder_forward.1} parent=1 // pred_region
      _
    $region13: #{encoder_forward.1} parent=1 // pred_fallthru
      _
    // Predicated region
    $region14: #{encoder_forward.1} parent=1 // pred_check
      _
    $region15: #{encoder_forward.1} parent=1 // pred_check_branch
      %21 = sbr.rel (0) target = $region17
    $region16: #{encoder_forward.1} parent=1 // pred_region
      _
    $region17: #{encoder_forward.1} parent=1 // pred_fallthru
      _
    // Predicated region
    $region18: #{encoder_forward.1} parent=1 // pred_check
      _
    $region19: #{encoder_forward.1} parent=1 // pred_check_branch
      %23 = sbr.rel (0) target = $region21
    $region20: #{encoder_forward.1} parent=1 // pred_region
      _
    $region21: #{encoder_forward.1} parent=1 // pred_fallthru
      _
    // Predicated region
    $region22: #{encoder_forward.1} parent=1 // pred_check
      _
    $region23: #{encoder_forward.1} parent=1 // pred_check_branch
      %25 = sbr.rel (0) target = $region25
    $region24: #{encoder_forward.1} parent=1 // pred_region
      _
    $region25: #{encoder_forward.1} parent=1 // pred_fallthru
      _
    // Predicated region
    $region26: #{encoder_forward.1} parent=1 // pred_check
      _
    $region27: #{encoder_forward.1} parent=1 // pred_check_branch
      %27 = sbr.rel (0) target = $region29
    $region28: #{encoder_forward.1} parent=1 // pred_region
      _
    $region29: #{encoder_forward.1} parent=1 // pred_fallthru
      _
    // Predicated region
    $region30: #{encoder_forward.1} parent=1 // pred_check
      _
    $region31: #{encoder_forward.1} parent=1 // pred_check_branch
      %29 = sbr.rel (0) target = $region33
    $region32: #{encoder_forward.1} parent=1 // pred_region
      _
    $region33: #{encoder_forward.1} parent=1 // pred_fallthru
      _
    %v31 = vld [vmem:[%s0] sm:$0xff]
    %v32 = vld [vmem:[%s0 + $0x8] sm:$0xff]
    %v33 = vlaneseq
    %v34 = vand.u32 %v33, 127
    %35 = vset.pattern.permute.xlu0 0
    %36 = vperm.xlu0 %35, %v31
    %v37 = vpop.permute.xlu0 %36
    %38 = vset.pattern.permute.xlu0 0
    %39 = vperm.xlu0 %38, %v32
    %v40 = vpop.permute.xlu0 %39
    %vm41 = vcmp.eq.s32.totalorder %v34, %v37
    %vm42 = vcmp.eq.s32.totalorder %v34, %v40
    %v43 = vsel %vm41, 1, 0
    %v44 = vsel %vm42, 1, 0
    %v45 = vcvt.s32.f32 %v43
    %v46 = vcvt.s32.f32 %v44
    %v47 = vld [vmem:[%s2] sm:$0xff]
    %v48 = vld [vmem:[%s2 + $0x8] sm:$0xff]
    %v49 = vld [vmem:[%s2 + $0x10] sm:$0xff]
    %v50 = vld [vmem:[%s2 + $0x18] sm:$0xff]
    %v51 = vld [vmem:[%s2 + $0x20] sm:$0xff]
    %v52 = vld [vmem:[%s2 + $0x28] sm:$0xff]
    %v53 = vld [vmem:[%s2 + $0x30] sm:$0x3]
    %v54 = vld [vmem:[%s3] sm:$0xff]
    %vm55 = vcmask 408576
    %v57 = vsel %vm55, %v45, 0
    %v60 = vsel %vm55, %v46, 0
    %vm62 = vcmask 1041408
    %v64 = vsel %vm62, %v53, 0
    %66 = vmatprep.subr.mxu0 0.0
    %67 = vmatpush1.msra.mxu0 %v47
    %68 = vmatprep.subr.mxu0 0.0
    %69 = vmatpush1.msra.mxu0 %v48
    %70 = vmatprep.subr.mxu0 0.0
    %71 = vmatpush1.msra.mxu0 %v49
    %72 = vmatprep.subr.mxu0 0.0
    %73 = vmatpush1.msra.mxu0 %v50
    %74 = vmatprep.subr.mxu0 0.0
    %75 = vmatpush1.msra.mxu0 %v51
    %76 = vmatprep.subr.mxu0 0.0
    %77 = vmatpush1.msra.mxu0 %v52
    %78 = vmatprep.subr.mxu0 0.0
    %79 = vmatpush1.msra.mxu0 %v64
    %80 = vmatprep.subr.mxu0 0.0
    %81 = vmatpush1.msra.mxu0 0.0
    %82 = vmatprep.subr.mxu0 0.0
    %83 = vmatpush1.msra.mxu0 0.0
    %84 = vmatprep.subr.mxu0 0.0
    %85 = vmatpush1.msra.mxu0 0.0
    %86 = vmatprep.subr.mxu0 0.0
    %87 = vmatpush1.msra.mxu0 0.0
    %88 = vmatprep.subr.mxu0 0.0
    %89 = vmatpush1.msra.mxu0 0.0
    %90 = vmatprep.subr.mxu0 0.0
    %91 = vmatpush1.msra.mxu0 0.0
    %92 = vmatprep.subr.mxu0 0.0
    %93 = vmatpush1.msra.mxu0 0.0
    %94 = vmatprep.subr.mxu0 0.0
    %95 = vmatpush1.msra.mxu0 0.0
    %96 = vmatprep.subr.mxu0 0.0
    %97 = vmatpush1.msra.mxu0 0.0
    %98 = vmatprep.subr.mxu0 0.0
    %99 = vmatpush1.msra.mxu0 0.0
    %100 = vmatprep.subr.mxu0 0.0
    %101 = vmatpush1.msra.mxu0 0.0
    %102 = vmatprep.subr.mxu0 0.0
    %103 = vmatpush1.msra.mxu0 0.0
    %104 = vmatprep.subr.mxu0 0.0
    %105 = vmatpush1.msra.mxu0 0.0
    %106 = vmatprep.subr.mxu0 0.0
    %107 = vmatpush1.msra.mxu0 0.0
    %108 = vmatprep.subr.mxu0 0.0
    %109 = vmatpush1.msra.mxu0 0.0
    %110 = vmatprep.subr.mxu0 0.0
    %111 = vmatpush1.msra.mxu0 0.0
    %112 = vmatprep.subr.mxu0 0.0
    %113 = vmatpush1.msra.mxu0 0.0
    %114 = vmatprep.subr.mxu0 0.0
    %115 = vmatpush1.msra.mxu0 0.0
    %116 = vmatprep.subr.mxu0 0.0
    %117 = vmatpush1.msra.mxu0 0.0
    %118 = vmatprep.subr.mxu0 0.0
    %119 = vmatpush1.msra.mxu0 0.0
    %120 = vmatprep.subr.mxu0 0.0
    %121 = vmatpush1.msra.mxu0 0.0
    %122 = vmatprep.subr.mxu0 0.0
    %123 = vmatpush1.msra.mxu0 0.0
    %124 = vmatprep.subr.mxu0 0.0
    %125 = vmatpush1.msra.mxu0 0.0
    %126 = vmatprep.subr.mxu0 0.0
    %127 = vmatpush1.msra.mxu0 0.0
    %128 = vmatprep.subr.mxu0 0.0
    %129 = vmatpush1.msra.mxu0 0.0
    %130 = vmatprep.mubr.f32.mxu0 0.0
    %131 = vmatmul.mubr.f32.gmra.mrb[0].mxu0 %v57
    %v132 = vpop.f32.mrb[0].mxu0
    %v133 = vadd.f32 %v54, %v132
    %v134 = vpop.f32.mrb[0].mxu0
    %135 = vmatprep.mubr.f32.mxu0 0.0
    %136 = vmatmul.mubr.f32.gmra.mrb[0].mxu0 %v60
    %v137 = vpop.f32.mrb[0].mxu0
    %v138 = vadd.f32 %v54, %v137
    %v139 = vpop.f32.mrb[0].mxu0
    %140 = vdwg.mxu0
    %v141 = vld [vmem:[%s1] sm:$0x1]
    %v142 = vld [vmem:[%s1 + $0x1] sm:$0x1]
    %v143 = vcvt.s32.f32 %v141
    %v144 = vcvt.s32.f32 %v142
    %v145 = vsub.f32 %v143, 1.0
    %v146 = vsub.f32 %v144, 1.0
    %v147 = vmul.f32 %v145, 1e+09
    %v148 = vmul.f32 %v146, 1e+09
    %vm149 = vcmp.ge.s32.totalorder %v34, 0
    %vm150 = vcmp.lt.s32.totalorder %v34, 8
    %vm151 = vmand %vm149, %vm150
    %v152 = vsel %vm151, 1, 0
    %v153 = vcvt.s32.f32 %v152
    %vm154 = vcmp.ge.s32.totalorder %v34, 8
    %vm155 = vcmp.lt.s32.totalorder %v34, 16
    %vm156 = vmand %vm154, %vm155
    %v157 = vsel %vm156, 1, 0
    %v158 = vcvt.s32.f32 %v157
    %vm159 = vcmp.ge.s32.totalorder %v34, 16
    %vm160 = vcmp.lt.s32.totalorder %v34, 24
    %vm161 = vmand %vm159, %vm160
    %v162 = vsel %vm161, 1, 0
    %v163 = vcvt.s32.f32 %v162
    %vm164 = vcmp.ge.s32.totalorder %v34, 24
    %vm165 = vcmp.lt.s32.totalorder %v34, 32
    %vm166 = vmand %vm164, %vm165
    %v167 = vsel %vm166, 1, 0
    %v168 = vcvt.s32.f32 %v167
    %v169 = vld [vmem:[%s4] sm:$0xff]
    %v170 = vld [vmem:[%s4 + $0x8] sm:$0xff]
    %v171 = vld [vmem:[%s4 + $0x10] sm:$0xff]
    %v172 = vld [vmem:[%s4 + $0x18] sm:$0xff]
    %v173 = vpack.c.bf16 %v170, %v169
    %v174 = vpack.c.bf16 %v172, %v171
    %v175 = vld [vmem:[%s5] sm:$0xff]
    %v176 = vld [vmem:[%s5 + $0x8] sm:$0xff]
    %v177 = vld [vmem:[%s5 + $0x10] sm:$0xff]
    %v178 = vld [vmem:[%s5 + $0x18] sm:$0xff]
    %v179 = vld [vmem:[%s5 + $0x20] sm:$0xff]
    %v180 = vld [vmem:[%s5 + $0x28] sm:$0xff]
    %v181 = vld [vmem:[%s5 + $0x30] sm:$0xff]
    %v182 = vld [vmem:[%s5 + $0x38] sm:$0xff]
    %v183 = vpack.c.bf16 %v176, %v175
    %v184 = vpack.c.bf16 %v178, %v177
    %v185 = vpack.c.bf16 %v180, %v179
    %v186 = vpack.c.bf16 %v182, %v181
    %v187 = vld [vmem:[%s6] sm:$0xff]
    %v188 = vpack.c.bf16 %v138, %v133
    %v189 = vlaneseq
    %v190 = vshrl.u32 %v189, 7
    %v191 = vsub.s32 0, %v190
    %v192 = vrot.slane %v187, %v191
    %vm193 = vcmask 261120
    %v195 = vsel %vm193, %v188, 0
    %197 = vmatprep.subr.bf16.mxu0 0
    %198 = vmatpush1.bf16.msra.mxu0 %v173
    %199 = vmatprep.subr.bf16.mxu0 0
    %200 = vmatpush1.bf16.msra.mxu0 %v174
    %201 = vmatprep.subr.bf16.mxu0 0
    %202 = vmatpush1.bf16.msra.mxu0 0
    %203 = vmatprep.subr.bf16.mxu0 0
    %204 = vmatpush1.bf16.msra.mxu0 0
    %205 = vmatprep.subr.bf16.mxu0 0
    %206 = vmatpush1.bf16.msra.mxu0 0
    %207 = vmatprep.subr.bf16.mxu0 0
    %208 = vmatpush1.bf16.msra.mxu0 0
    %209 = vmatprep.subr.bf16.mxu0 0
    %210 = vmatpush1.bf16.msra.mxu0 0
    %211 = vmatprep.subr.bf16.mxu0 0
    %212 = vmatpush1.bf16.msra.mxu0 0
    %213 = vmatprep.subr.bf16.mxu0 0
    %214 = vmatpush1.bf16.msra.mxu0 0
    %215 = vmatprep.subr.bf16.mxu0 0
    %216 = vmatpush1.bf16.msra.mxu0 0
    %217 = vmatprep.subr.bf16.mxu0 0
    %218 = vmatpush1.bf16.msra.mxu0 0
    %219 = vmatprep.subr.bf16.mxu0 0
    %220 = vmatpush1.bf16.msra.mxu0 0
    %221 = vmatprep.subr.bf16.mxu0 0
    %222 = vmatpush1.bf16.msra.mxu0 0
    %223 = vmatprep.subr.bf16.mxu0 0
    %224 = vmatpush1.bf16.msra.mxu0 0
    %225 = vmatprep.subr.bf16.mxu0 0
    %226 = vmatpush1.bf16.msra.mxu0 0
    %227 = vmatprep.subr.bf16.mxu0 0
    %228 = vmatpush1.bf16.msra.mxu0 0
    %229 = vmatprep.mubr.bf16.mxu0 0
    %230 = vmatmul.mubr.bf16.gmra.mrb[0].mxu0 %v195
    %v231 = vpop.f32.mrb[0].mxu0
    %v232 = vadd.f32 %v192, %v231
    %v233 = vpop.f32.mrb[0].mxu0
    %v234 = vpop.f32.mrb[0].mxu0
    %v235 = vadd.f32 %v192, %v234
    %v236 = vpop.f32.mrb[0].mxu0
    %237 = vdwg.mxu0
    %v238 = vpack.c.bf16 %v232, %v232
    %v239 = vpack.c.bf16 %v235, %v235
    %vm240 = vcmask 64512
    %v242 = vsel %vm240, %v238, 0
    %244 = vmatprep.subr.bf16.mxu0 0
    %245 = vmatpush1.bf16.xpose.msra.mxu0 %v242
    %246 = vmatprep.subr.bf16.mxu0 0
    %247 = vmatpush1.bf16.xpose.msra.mxu0 0
    %248 = vmatprep.subr.bf16.mxu0 0
    %249 = vmatpush1.bf16.xpose.msra.mxu0 0
    %250 = vmatprep.subr.bf16.mxu0 0
    %251 = vmatpush1.bf16.xpose.msra.mxu0 0
    %252 = vmatprep.subr.bf16.mxu0 0
    %253 = vmatpush1.bf16.xpose.msra.mxu0 0
    %254 = vmatprep.subr.bf16.mxu0 0
    %255 = vmatpush1.bf16.xpose.msra.mxu0 0
    %256 = vmatprep.subr.bf16.mxu0 0
    %257 = vmatpush1.bf16.xpose.msra.mxu0 0
    %258 = vmatprep.subr.bf16.mxu0 0
    %259 = vmatpush1.bf16.xpose.msra.mxu0 0
    %260 = vmatprep.subr.bf16.mxu0 0
    %261 = vmatpush1.bf16.xpose.msra.mxu0 0
    %262 = vmatprep.subr.bf16.mxu0 0
    %263 = vmatpush1.bf16.xpose.msra.mxu0 0
    %264 = vmatprep.subr.bf16.mxu0 0
    %265 = vmatpush1.bf16.xpose.msra.mxu0 0
    %266 = vmatprep.subr.bf16.mxu0 0
    %267 = vmatpush1.bf16.xpose.msra.mxu0 0
    %268 = vmatprep.subr.bf16.mxu0 0
    %269 = vmatpush1.bf16.xpose.msra.mxu0 0
    %270 = vmatprep.subr.bf16.mxu0 0
    %271 = vmatpush1.bf16.xpose.msra.mxu0 0
    %272 = vmatprep.subr.bf16.mxu0 0
    %273 = vmatpush1.bf16.xpose.msra.mxu0 0
    %274 = vmatprep.subr.bf16.mxu0 0
    %275 = vmatpush1.bf16.xpose.msra.mxu0 0
    %276 = vmatprep.mubr.bf16.mxu0 0
    %277 = vmatmul.mubr.bf16.gmra.mrb[0].mxu0 %v242
    %v278 = vpop.f32.mrb[0].mxu0
    %v279 = vadd.f32 0.0, %v278
    %v280 = vpop.f32.mrb[0].mxu0
    %v281 = vpop.f32.mrb[0].mxu0
    %v282 = vpop.f32.mrb[0].mxu0
    %283 = vdwg.mxu0
    %v285 = vsel %vm240, %v239, 0
    %287 = vmatprep.subr.bf16.mxu0 0
    %288 = vmatpush1.bf16.xpose.msra.mxu0 %v285
    %289 = vmatprep.subr.bf16.mxu0 0
    %290 = vmatpush1.bf16.xpose.msra.mxu0 0
    %291 = vmatprep.subr.bf16.mxu0 0
    %292 = vmatpush1.bf16.xpose.msra.mxu0 0
    %293 = vmatprep.subr.bf16.mxu0 0
    %294 = vmatpush1.bf16.xpose.msra.mxu0 0
    %295 = vmatprep.subr.bf16.mxu0 0
    %296 = vmatpush1.bf16.xpose.msra.mxu0 0
    %297 = vmatprep.subr.bf16.mxu0 0
    %298 = vmatpush1.bf16.xpose.msra.mxu0 0
    %299 = vmatprep.subr.bf16.mxu0 0
    %300 = vmatpush1.bf16.xpose.msra.mxu0 0
    %301 = vmatprep.subr.bf16.mxu0 0
    %302 = vmatpush1.bf16.xpose.msra.mxu0 0
    %303 = vmatprep.subr.bf16.mxu0 0
    %304 = vmatpush1.bf16.xpose.msra.mxu0 0
    %305 = vmatprep.subr.bf16.mxu0 0
    %306 = vmatpush1.bf16.xpose.msra.mxu0 0
    %307 = vmatprep.subr.bf16.mxu0 0
    %308 = vmatpush1.bf16.xpose.msra.mxu0 0
    %309 = vmatprep.subr.bf16.mxu0 0
    %310 = vmatpush1.bf16.xpose.msra.mxu0 0
    %311 = vmatprep.subr.bf16.mxu0 0
    %312 = vmatpush1.bf16.xpose.msra.mxu0 0
    %313 = vmatprep.subr.bf16.mxu0 0
    %314 = vmatpush1.bf16.xpose.msra.mxu0 0
    %315 = vmatprep.subr.bf16.mxu0 0
    %316 = vmatpush1.bf16.xpose.msra.mxu0 0
    %317 = vmatprep.subr.bf16.mxu0 0
    %318 = vmatpush1.bf16.xpose.msra.mxu0 0
    %319 = vmatprep.mubr.bf16.mxu0 0
    %320 = vmatmul.mubr.bf16.gmra.mrb[0].mxu0 %v285
    %v321 = vpop.f32.mrb[0].mxu0
    %v322 = vadd.f32 0.0, %v321
    %v323 = vpop.f32.mrb[0].mxu0
    %v324 = vpop.f32.mrb[0].mxu0
    %v325 = vpop.f32.mrb[0].mxu0
    %326 = vdwg.mxu0
    %328 = vrot.lane.b32.xlu0 %v238, 120
    %v329 = vpop.permute.xlu0 %328
    %v331 = vsel %vm240, %v329, 0
    %333 = vmatprep.subr.bf16.mxu0 0
    %334 = vmatpush1.bf16.xpose.msra.mxu0 %v331
    %335 = vmatprep.subr.bf16.mxu0 0
    %336 = vmatpush1.bf16.xpose.msra.mxu0 0
    %337 = vmatprep.subr.bf16.mxu0 0
    %338 = vmatpush1.bf16.xpose.msra.mxu0 0
    %339 = vmatprep.subr.bf16.mxu0 0
    %340 = vmatpush1.bf16.xpose.msra.mxu0 0
    %341 = vmatprep.subr.bf16.mxu0 0
    %342 = vmatpush1.bf16.xpose.msra.mxu0 0
    %343 = vmatprep.subr.bf16.mxu0 0
    %344 = vmatpush1.bf16.xpose.msra.mxu0 0
    %345 = vmatprep.subr.bf16.mxu0 0
    %346 = vmatpush1.bf16.xpose.msra.mxu0 0
    %347 = vmatprep.subr.bf16.mxu0 0
    %348 = vmatpush1.bf16.xpose.msra.mxu0 0
    %349 = vmatprep.subr.bf16.mxu0 0
    %350 = vmatpush1.bf16.xpose.msra.mxu0 0
    %351 = vmatprep.subr.bf16.mxu0 0
    %352 = vmatpush1.bf16.xpose.msra.mxu0 0
    %353 = vmatprep.subr.bf16.mxu0 0
    %354 = vmatpush1.bf16.xpose.msra.mxu0 0
    %355 = vmatprep.subr.bf16.mxu0 0
    %356 = vmatpush1.bf16.xpose.msra.mxu0 0
    %357 = vmatprep.subr.bf16.mxu0 0
    %358 = vmatpush1.bf16.xpose.msra.mxu0 0
    %359 = vmatprep.subr.bf16.mxu0 0
    %360 = vmatpush1.bf16.xpose.msra.mxu0 0
    %361 = vmatprep.subr.bf16.mxu0 0
    %362 = vmatpush1.bf16.xpose.msra.mxu0 0
    %363 = vmatprep.subr.bf16.mxu0 0
    %364 = vmatpush1.bf16.xpose.msra.mxu0 0
    %365 = vmatprep.mubr.bf16.mxu0 0
    %366 = vmatmul.mubr.bf16.gmra.mrb[0].mxu0 %v331
    %v367 = vpop.f32.mrb[0].mxu0
    %v368 = vadd.f32 0.0, %v367
    %v369 = vpop.f32.mrb[0].mxu0
    %v370 = vpop.f32.mrb[0].mxu0
    %v371 = vpop.f32.mrb[0].mxu0
    %372 = vdwg.mxu0
    %374 = vrot.lane.b32.xlu0 %v239, 120
    %v375 = vpop.permute.xlu0 %374
    %v377 = vsel %vm240, %v375, 0
    %379 = vmatprep.subr.bf16.mxu0 0
    %380 = vmatpush1.bf16.xpose.msra.mxu0 %v377
    %381 = vmatprep.subr.bf16.mxu0 0
    %382 = vmatpush1.bf16.xpose.msra.mxu0 0
    %383 = vmatprep.subr.bf16.mxu0 0
    %384 = vmatpush1.bf16.xpose.msra.mxu0 0
    %385 = vmatprep.subr.bf16.mxu0 0
    %386 = vmatpush1.bf16.xpose.msra.mxu0 0
    %387 = vmatprep.subr.bf16.mxu0 0
    %388 = vmatpush1.bf16.xpose.msra.mxu0 0
    %389 = vmatprep.subr.bf16.mxu0 0
    %390 = vmatpush1.bf16.xpose.msra.mxu0 0
    %391 = vmatprep.subr.bf16.mxu0 0
    %392 = vmatpush1.bf16.xpose.msra.mxu0 0
    %393 = vmatprep.subr.bf16.mxu0 0
    %394 = vmatpush1.bf16.xpose.msra.mxu0 0
    %395 = vmatprep.subr.bf16.mxu0 0
    %396 = vmatpush1.bf16.xpose.msra.mxu0 0
    %397 = vmatprep.subr.bf16.mxu0 0
    %398 = vmatpush1.bf16.xpose.msra.mxu0 0
    %399 = vmatprep.subr.bf16.mxu0 0
    %400 = vmatpush1.bf16.xpose.msra.mxu0 0
    %401 = vmatprep.subr.bf16.mxu0 0
    %402 = vmatpush1.bf16.xpose.msra.mxu0 0
    %403 = vmatprep.subr.bf16.mxu0 0
    %404 = vmatpush1.bf16.xpose.msra.mxu0 0
    %405 = vmatprep.subr.bf16.mxu0 0
    %406 = vmatpush1.bf16.xpose.msra.mxu0 0
    %407 = vmatprep.subr.bf16.mxu0 0
    %408 = vmatpush1.bf16.xpose.msra.mxu0 0
    %409 = vmatprep.subr.bf16.mxu0 0
    %410 = vmatpush1.bf16.xpose.msra.mxu0 0
    %411 = vmatprep.mubr.bf16.mxu0 0
    %412 = vmatmul.mubr.bf16.gmra.mrb[0].mxu0 %v377
    %v413 = vpop.f32.mrb[0].mxu0
    %v414 = vadd.f32 0.0, %v413
    %v415 = vpop.f32.mrb[0].mxu0
    %v416 = vpop.f32.mrb[0].mxu0
    %v417 = vpop.f32.mrb[0].mxu0
    %418 = vdwg.mxu0
    %419 = vrot.lane.b32.xlu0 %v238, 112
    %v420 = vpop.permute.xlu0 %419
    %v422 = vsel %vm240, %v420, 0
    %424 = vmatprep.subr.bf16.mxu0 0
    %425 = vmatpush1.bf16.xpose.msra.mxu0 %v422
    %426 = vmatprep.subr.bf16.mxu0 0
    %427 = vmatpush1.bf16.xpose.msra.mxu0 0
    %428 = vmatprep.subr.bf16.mxu0 0
    %429 = vmatpush1.bf16.xpose.msra.mxu0 0
    %430 = vmatprep.subr.bf16.mxu0 0
    %431 = vmatpush1.bf16.xpose.msra.mxu0 0
    %432 = vmatprep.subr.bf16.mxu0 0
    %433 = vmatpush1.bf16.xpose.msra.mxu0 0
    %434 = vmatprep.subr.bf16.mxu0 0
    %435 = vmatpush1.bf16.xpose.msra.mxu0 0
    %436 = vmatprep.subr.bf16.mxu0 0
    %437 = vmatpush1.bf16.xpose.msra.mxu0 0
    %438 = vmatprep.subr.bf16.mxu0 0
    %439 = vmatpush1.bf16.xpose.msra.mxu0 0
    %440 = vmatprep.subr.bf16.mxu0 0
    %441 = vmatpush1.bf16.xpose.msra.mxu0 0
    %442 = vmatprep.subr.bf16.mxu0 0
    %443 = vmatpush1.bf16.xpose.msra.mxu0 0
    %444 = vmatprep.subr.bf16.mxu0 0
    %445 = vmatpush1.bf16.xpose.msra.mxu0 0
    %446 = vmatprep.subr.bf16.mxu0 0
    %447 = vmatpush1.bf16.xpose.msra.mxu0 0
    %448 = vmatprep.subr.bf16.mxu0 0
    %449 = vmatpush1.bf16.xpose.msra.mxu0 0
    %450 = vmatprep.subr.bf16.mxu0 0
    %451 = vmatpush1.bf16.xpose.msra.mxu0 0
    %452 = vmatprep.subr.bf16.mxu0 0
    %453 = vmatpush1.bf16.xpose.msra.mxu0 0
    %454 = vmatprep.subr.bf16.mxu0 0
    %455 = vmatpush1.bf16.xpose.msra.mxu0 0
    %456 = vmatprep.mubr.bf16.mxu0 0
    %457 = vmatmul.mubr.bf16.gmra.mrb[0].mxu0 %v422
    %v458 = vpop.f32.mrb[0].mxu0
    %v459 = vadd.f32 0.0, %v458
    %v460 = vpop.f32.mrb[0].mxu0
    %v461 = vpop.f32.mrb[0].mxu0
    %v462 = vpop.f32.mrb[0].mxu0
    %463 = vdwg.mxu0
    %464 = vrot.lane.b32.xlu0 %v239, 112
    %v465 = vpop.permute.xlu0 %464
    %v467 = vsel %vm240, %v465, 0
    %469 = vmatprep.subr.bf16.mxu0 0
    %470 = vmatpush1.bf16.xpose.msra.mxu0 %v467
    %471 = vmatprep.subr.bf16.mxu0 0
    %472 = vmatpush1.bf16.xpose.msra.mxu0 0
    %473 = vmatprep.subr.bf16.mxu0 0
    %474 = vmatpush1.bf16.xpose.msra.mxu0 0
    %475 = vmatprep.subr.bf16.mxu0 0
    %476 = vmatpush1.bf16.xpose.msra.mxu0 0
    %477 = vmatprep.subr.bf16.mxu0 0
    %478 = vmatpush1.bf16.xpose.msra.mxu0 0
    %479 = vmatprep.subr.bf16.mxu0 0
    %480 = vmatpush1.bf16.xpose.msra.mxu0 0
    %481 = vmatprep.subr.bf16.mxu0 0
    %482 = vmatpush1.bf16.xpose.msra.mxu0 0
    %483 = vmatprep.subr.bf16.mxu0 0
    %484 = vmatpush1.bf16.xpose.msra.mxu0 0
    %485 = vmatprep.subr.bf16.mxu0 0
    %486 = vmatpush1.bf16.xpose.msra.mxu0 0
    %487 = vmatprep.subr.bf16.mxu0 0
    %488 = vmatpush1.bf16.xpose.msra.mxu0 0
    %489 = vmatprep.subr.bf16.mxu0 0
    %490 = vmatpush1.bf16.xpose.msra.mxu0 0
    %491 = vmatprep.subr.bf16.mxu0 0
    %492 = vmatpush1.bf16.xpose.msra.mxu0 0
    %493 = vmatprep.subr.bf16.mxu0 0
    %494 = vmatpush1.bf16.xpose.msra.mxu0 0
    %495 = vmatprep.subr.bf16.mxu0 0
    %496 = vmatpush1.bf16.xpose.msra.mxu0 0
    %497 = vmatprep.subr.bf16.mxu0 0
    %498 = vmatpush1.bf16.xpose.msra.mxu0 0
    %499 = vmatprep.subr.bf16.mxu0 0
    %500 = vmatpush1.bf16.xpose.msra.mxu0 0
    %501 = vmatprep.mubr.bf16.mxu0 0
    %502 = vmatmul.mubr.bf16.gmra.mrb[0].mxu0 %v467
    %v503 = vpop.f32.mrb[0].mxu0
    %v504 = vadd.f32 0.0, %v503
    %v505 = vpop.f32.mrb[0].mxu0
    %v506 = vpop.f32.mrb[0].mxu0
    %v507 = vpop.f32.mrb[0].mxu0
    %508 = vdwg.mxu0
    %509 = vrot.lane.b32.xlu0 %v238, 104
    %v510 = vpop.permute.xlu0 %509
    %v512 = vsel %vm240, %v510, 0
    %514 = vmatprep.subr.bf16.mxu0 0
    %515 = vmatpush1.bf16.xpose.msra.mxu0 %v512
    %516 = vmatprep.subr.bf16.mxu0 0
    %517 = vmatpush1.bf16.xpose.msra.mxu0 0
    %518 = vmatprep.subr.bf16.mxu0 0
    %519 = vmatpush1.bf16.xpose.msra.mxu0 0
    %520 = vmatprep.subr.bf16.mxu0 0
    %521 = vmatpush1.bf16.xpose.msra.mxu0 0
    %522 = vmatprep.subr.bf16.mxu0 0
    %523 = vmatpush1.bf16.xpose.msra.mxu0 0
    %524 = vmatprep.subr.bf16.mxu0 0
    %525 = vmatpush1.bf16.xpose.msra.mxu0 0
    %526 = vmatprep.subr.bf16.mxu0 0
    %527 = vmatpush1.bf16.xpose.msra.mxu0 0
    %528 = vmatprep.subr.bf16.mxu0 0
    %529 = vmatpush1.bf16.xpose.msra.mxu0 0
    %530 = vmatprep.subr.bf16.mxu0 0
    %531 = vmatpush1.bf16.xpose.msra.mxu0 0
    %532 = vmatprep.subr.bf16.mxu0 0
    %533 = vmatpush1.bf16.xpose.msra.mxu0 0
    %534 = vmatprep.subr.bf16.mxu0 0
    %535 = vmatpush1.bf16.xpose.msra.mxu0 0
    %536 = vmatprep.subr.bf16.mxu0 0
    %537 = vmatpush1.bf16.xpose.msra.mxu0 0
    %538 = vmatprep.subr.bf16.mxu0 0
    %539 = vmatpush1.bf16.xpose.msra.mxu0 0
    %540 = vmatprep.subr.bf16.mxu0 0
    %541 = vmatpush1.bf16.xpose.msra.mxu0 0
    %542 = vmatprep.subr.bf16.mxu0 0
    %543 = vmatpush1.bf16.xpose.msra.mxu0 0
    %544 = vmatprep.subr.bf16.mxu0 0
    %545 = vmatpush1.bf16.xpose.msra.mxu0 0
    %546 = vmatprep.mubr.bf16.mxu0 0
    %547 = vmatmul.mubr.bf16.gmra.mrb[0].mxu0 %v512
    %v548 = vpop.f32.mrb[0].mxu0
    %v549 = vadd.f32 0.0, %v548
    %v550 = vpop.f32.mrb[0].mxu0
    %v551 = vpop.f32.mrb[0].mxu0
    %v552 = vpop.f32.mrb[0].mxu0
    %553 = vdwg.mxu0
    %554 = vrot.lane.b32.xlu0 %v239, 104
    %v555 = vpop.permute.xlu0 %554
    %v557 = vsel %vm240, %v555, 0
    %559 = vmatprep.subr.bf16.mxu0 0
    %560 = vmatpush1.bf16.xpose.msra.mxu0 %v557
    %561 = vmatprep.subr.bf16.mxu0 0
    %562 = vmatpush1.bf16.xpose.msra.mxu0 0
    %563 = vmatprep.subr.bf16.mxu0 0
    %564 = vmatpush1.bf16.xpose.msra.mxu0 0
    %565 = vmatprep.subr.bf16.mxu0 0
    %566 = vmatpush1.bf16.xpose.msra.mxu0 0
    %567 = vmatprep.subr.bf16.mxu0 0
    %568 = vmatpush1.bf16.xpose.msra.mxu0 0
    %569 = vmatprep.subr.bf16.mxu0 0
    %570 = vmatpush1.bf16.xpose.msra.mxu0 0
    %571 = vmatprep.subr.bf16.mxu0 0
    %572 = vmatpush1.bf16.xpose.msra.mxu0 0
    %573 = vmatprep.subr.bf16.mxu0 0
    %574 = vmatpush1.bf16.xpose.msra.mxu0 0
    %575 = vmatprep.subr.bf16.mxu0 0
    %576 = vmatpush1.bf16.xpose.msra.mxu0 0
    %577 = vmatprep.subr.bf16.mxu0 0
    %578 = vmatpush1.bf16.xpose.msra.mxu0 0
    %579 = vmatprep.subr.bf16.mxu0 0
    %580 = vmatpush1.bf16.xpose.msra.mxu0 0
    %581 = vmatprep.subr.bf16.mxu0 0
    %582 = vmatpush1.bf16.xpose.msra.mxu0 0
    %583 = vmatprep.subr.bf16.mxu0 0
    %584 = vmatpush1.bf16.xpose.msra.mxu0 0
    %585 = vmatprep.subr.bf16.mxu0 0
    %586 = vmatpush1.bf16.xpose.msra.mxu0 0
    %587 = vmatprep.subr.bf16.mxu0 0
    %588 = vmatpush1.bf16.xpose.msra.mxu0 0
    %589 = vmatprep.subr.bf16.mxu0 0
    %590 = vmatpush1.bf16.xpose.msra.mxu0 0
    %591 = vmatprep.mubr.bf16.mxu0 0
    %592 = vmatmul.mubr.bf16.gmra.mrb[0].mxu0 %v557
    %v593 = vpop.f32.mrb[0].mxu0
    %v594 = vadd.f32 0.0, %v593
    %v595 = vpop.f32.mrb[0].mxu0
    %v596 = vpop.f32.mrb[0].mxu0
    %v597 = vpop.f32.mrb[0].mxu0
    %598 = vdwg.mxu0
    %v599 = vmul.f32 %v279, 0.35355338
    %v600 = vmul.f32 %v368, 0.35355338
    %v601 = vmul.f32 %v459, 0.35355338
    %v602 = vmul.f32 %v549, 0.35355338
    %v603 = vmul.f32 %v322, 0.35355338
    %v604 = vmul.f32 %v414, 0.35355338
    %v605 = vmul.f32 %v504, 0.35355338
    %v606 = vmul.f32 %v594, 0.35355338
    %v609 = vlaneseq
    %v610 = vshrl.u32 %v609, 7
    %v611 = vsub.s32 0, %v610
    %v612 = vrot.slane %v147, %v611
    %v613 = vlaneseq
    %v614 = vshrl.u32 %v613, 7
    %v615 = vsub.s32 0, %v614
    %v616 = vrot.slane %v148, %v615
    %v619 = vadd.f32 %v599, %v612
    %v620 = vadd.f32 %v600, %v612
    %v621 = vadd.f32 %v601, %v612
    %v622 = vadd.f32 %v602, %v612
    %v623 = vadd.f32 %v603, %v616
    %v624 = vadd.f32 %v604, %v616
    %v625 = vadd.f32 %v605, %v616
    %v626 = vadd.f32 %v606, %v616
    %v627 = vsel %vm240, %v619, -inf
    %628 = vmax.xlane.f32.xlu0 %v627
    %v629 = vpop.xlane.xlu0 %628
    %v630 = vsel %vm240, %v620, -inf
    %631 = vmax.xlane.f32.xlu0 %v630
    %v632 = vpop.xlane.xlu0 %631
    %v633 = vsel %vm240, %v621, -inf
    %634 = vmax.xlane.f32.xlu0 %v633
    %v635 = vpop.xlane.xlu0 %634
    %v636 = vsel %vm240, %v622, -inf
    %637 = vmax.xlane.f32.xlu0 %v636
    %v638 = vpop.xlane.xlu0 %637
    %v639 = vsel %vm240, %v623, -inf
    %640 = vmax.xlane.f32.xlu0 %v639
    %v641 = vpop.xlane.xlu0 %640
    %v642 = vsel %vm240, %v624, -inf
    %643 = vmax.xlane.f32.xlu0 %v642
    %v644 = vpop.xlane.xlu0 %643
    %v645 = vsel %vm240, %v625, -inf
    %646 = vmax.xlane.f32.xlu0 %v645
    %v647 = vpop.xlane.xlu0 %646
    %v648 = vsel %vm240, %v626, -inf
    %649 = vmax.xlane.f32.xlu0 %v648
    %v650 = vpop.xlane.xlu0 %649
    %v651 = vsub.f32 %v619, %v629
    %v652 = vsub.f32 %v620, %v632
    %v653 = vsub.f32 %v621, %v635
    %v654 = vsub.f32 %v622, %v638
    %v655 = vsub.f32 %v623, %v641
    %v656 = vsub.f32 %v624, %v644
    %v657 = vsub.f32 %v625, %v647
    %v658 = vsub.f32 %v626, %v650
    %v659 = vmul.f32 %v651, 1.442695
    %v660 = vpow.pop %v659
    %v661 = vmul.f32 %v652, 1.442695
    %v662 = vpow.pop %v661
    %v663 = vmul.f32 %v653, 1.442695
    %v664 = vpow.pop %v663
    %v665 = vmul.f32 %v654, 1.442695
    %v666 = vpow.pop %v665
    %v667 = vmul.f32 %v655, 1.442695
    %v668 = vpow.pop %v667
    %v669 = vmul.f32 %v656, 1.442695
    %v670 = vpow.pop %v669
    %v671 = vmul.f32 %v657, 1.442695
    %v672 = vpow.pop %v671
    %v673 = vmul.f32 %v658, 1.442695
    %v674 = vpow.pop %v673
    %v675 = vsel %vm240, %v660, 0.0
    %676 = vadd.xlane.f32.xlu0 %v675
    %v677 = vpop.xlane.xlu0 %676
    %v678 = vsel %vm240, %v662, 0.0
    %679 = vadd.xlane.f32.xlu0 %v678
    %v680 = vpop.xlane.xlu0 %679
    %v681 = vsel %vm240, %v664, 0.0
    %682 = vadd.xlane.f32.xlu0 %v681
    %v683 = vpop.xlane.xlu0 %682
    %v684 = vsel %vm240, %v666, 0.0
    %685 = vadd.xlane.f32.xlu0 %v684
    %v686 = vpop.xlane.xlu0 %685
    %v687 = vsel %vm240, %v668, 0.0
    %688 = vadd.xlane.f32.xlu0 %v687
    %v689 = vpop.xlane.xlu0 %688
    %v690 = vsel %vm240, %v670, 0.0
    %691 = vadd.xlane.f32.xlu0 %v690
    %v692 = vpop.xlane.xlu0 %691
    %v693 = vsel %vm240, %v672, 0.0
    %694 = vadd.xlane.f32.xlu0 %v693
    %v695 = vpop.xlane.xlu0 %694
    %v696 = vsel %vm240, %v674, 0.0
    %697 = vadd.xlane.f32.xlu0 %v696
    %v698 = vpop.xlane.xlu0 %697
    %v699 = vrcp.pop %v677
    %v700 = vrcp.pop %v680
    %v701 = vrcp.pop %v683
    %v702 = vrcp.pop %v686
    %v703 = vrcp.pop %v689
    %v704 = vrcp.pop %v692
    %v705 = vrcp.pop %v695
    %v706 = vrcp.pop %v698
    %v707 = vmul.f32 %v660, %v699
    %v708 = vmul.f32 %v662, %v700
    %v709 = vmul.f32 %v664, %v701
    %v710 = vmul.f32 %v666, %v702
    %v711 = vmul.f32 %v668, %v703
    %v712 = vmul.f32 %v670, %v704
    %v713 = vmul.f32 %v672, %v705
    %v714 = vmul.f32 %v674, %v706
    %v715 = vpack.c.bf16 %v707, %v707
    %v716 = vpack.c.bf16 %v711, %v711
    %v717 = vmul.f32 %v232, %v153
    %v718 = vmul.f32 %v235, %v153
    %v719 = vpack.c.bf16 %v717, %v717
    %v720 = vpack.c.bf16 %v718, %v718
    %v721 = vpack.c.bf16 %v708, %v708
    %v722 = vpack.c.bf16 %v712, %v712
    %v723 = vmul.f32 %v232, %v158
    %v724 = vmul.f32 %v235, %v158
    %v725 = vpack.c.bf16 %v723, %v723
    %v726 = vpack.c.bf16 %v724, %v724
    %v728 = vsel %vm240, %v721, 0
    %vm730 = vcmask 1043456
    %v732 = vsel %vm730, %v725, 0
    %734 = vmatprep.subr.bf16.mxu0 0
    %735 = vmatpush1.bf16.msra.mxu0 %v732
    %736 = vmatprep.subr.bf16.mxu0 0
    %737 = vmatpush1.bf16.msra.mxu0 0
    %738 = vmatprep.subr.bf16.mxu0 0
    %739 = vmatpush1.bf16.msra.mxu0 0
    %740 = vmatprep.subr.bf16.mxu0 0
    %741 = vmatpush1.bf16.msra.mxu0 0
    %742 = vmatprep.subr.bf16.mxu0 0
    %743 = vmatpush1.bf16.msra.mxu0 0
    %744 = vmatprep.subr.bf16.mxu0 0
    %745 = vmatpush1.bf16.msra.mxu0 0
    %746 = vmatprep.subr.bf16.mxu0 0
    %747 = vmatpush1.bf16.msra.mxu0 0
    %748 = vmatprep.subr.bf16.mxu0 0
    %749 = vmatpush1.bf16.msra.mxu0 0
    %750 = vmatprep.subr.bf16.mxu0 0
    %751 = vmatpush1.bf16.msra.mxu0 0
    %752 = vmatprep.subr.bf16.mxu0 0
    %753 = vmatpush1.bf16.msra.mxu0 0
    %754 = vmatprep.subr.bf16.mxu0 0
    %755 = vmatpush1.bf16.msra.mxu0 0
    %756 = vmatprep.subr.bf16.mxu0 0
    %757 = vmatpush1.bf16.msra.mxu0 0
    %758 = vmatprep.subr.bf16.mxu0 0
    %759 = vmatpush1.bf16.msra.mxu0 0
    %760 = vmatprep.subr.bf16.mxu0 0
    %761 = vmatpush1.bf16.msra.mxu0 0
    %762 = vmatprep.subr.bf16.mxu0 0
    %763 = vmatpush1.bf16.msra.mxu0 0
    %764 = vmatprep.subr.bf16.mxu0 0
    %765 = vmatpush1.bf16.msra.mxu0 0
    %766 = vmatprep.mubr.bf16.mxu0 0
    %767 = vmatmul.mubr.bf16.gmra.mrb[0].mxu0 %v728
    %v768 = vpop.f32.mrb[0].mxu0
    %v769 = vadd.f32 0.0, %v768
    %v770 = vpop.f32.mrb[0].mxu0
    %v771 = vpop.f32.mrb[0].mxu0
    %v772 = vpop.f32.mrb[0].mxu0
    %773 = vdwg.mxu0
    %v775 = vsel %vm240, %v722, 0
    %v778 = vsel %vm730, %v726, 0
    %780 = vmatprep.subr.bf16.mxu0 0
    %781 = vmatpush1.bf16.msra.mxu0 %v778
    %782 = vmatprep.subr.bf16.mxu0 0
    %783 = vmatpush1.bf16.msra.mxu0 0
    %784 = vmatprep.subr.bf16.mxu0 0
    %785 = vmatpush1.bf16.msra.mxu0 0
    %786 = vmatprep.subr.bf16.mxu0 0
    %787 = vmatpush1.bf16.msra.mxu0 0
    %788 = vmatprep.subr.bf16.mxu0 0
    %789 = vmatpush1.bf16.msra.mxu0 0
    %790 = vmatprep.subr.bf16.mxu0 0
    %791 = vmatpush1.bf16.msra.mxu0 0
    %792 = vmatprep.subr.bf16.mxu0 0
    %793 = vmatpush1.bf16.msra.mxu0 0
    %794 = vmatprep.subr.bf16.mxu0 0
    %795 = vmatpush1.bf16.msra.mxu0 0
    %796 = vmatprep.subr.bf16.mxu0 0
    %797 = vmatpush1.bf16.msra.mxu0 0
    %798 = vmatprep.subr.bf16.mxu0 0
    %799 = vmatpush1.bf16.msra.mxu0 0
    %800 = vmatprep.subr.bf16.mxu0 0
    %801 = vmatpush1.bf16.msra.mxu0 0
    %802 = vmatprep.subr.bf16.mxu0 0
    %803 = vmatpush1.bf16.msra.mxu0 0
    %804 = vmatprep.subr.bf16.mxu0 0
    %805 = vmatpush1.bf16.msra.mxu0 0
    %806 = vmatprep.subr.bf16.mxu0 0
    %807 = vmatpush1.bf16.msra.mxu0 0
    %808 = vmatprep.subr.bf16.mxu0 0
    %809 = vmatpush1.bf16.msra.mxu0 0
    %810 = vmatprep.subr.bf16.mxu0 0
    %811 = vmatpush1.bf16.msra.mxu0 0
    %812 = vmatprep.mubr.bf16.mxu0 0
    %813 = vmatmul.mubr.bf16.gmra.mrb[0].mxu0 %v775
    %v814 = vpop.f32.mrb[0].mxu0
    %v815 = vadd.f32 0.0, %v814
    %v816 = vpop.f32.mrb[0].mxu0
    %v817 = vpop.f32.mrb[0].mxu0
    %v818 = vpop.f32.mrb[0].mxu0
    %819 = vdwg.mxu0
    %v821 = vsel %vm240, %v715, 0
    %v824 = vsel %vm730, %v719, 0
    %826 = vmatprep.subr.bf16.mxu0 0
    %827 = vmatpush1.bf16.msra.mxu0 %v824
    %828 = vmatprep.subr.bf16.mxu0 0
    %829 = vmatpush1.bf16.msra.mxu0 0
    %830 = vmatprep.subr.bf16.mxu0 0
    %831 = vmatpush1.bf16.msra.mxu0 0
    %832 = vmatprep.subr.bf16.mxu0 0
    %833 = vmatpush1.bf16.msra.mxu0 0
    %834 = vmatprep.subr.bf16.mxu0 0
    %835 = vmatpush1.bf16.msra.mxu0 0
    %836 = vmatprep.subr.bf16.mxu0 0
    %837 = vmatpush1.bf16.msra.mxu0 0
    %838 = vmatprep.subr.bf16.mxu0 0
    %839 = vmatpush1.bf16.msra.mxu0 0
    %840 = vmatprep.subr.bf16.mxu0 0
    %841 = vmatpush1.bf16.msra.mxu0 0
    %842 = vmatprep.subr.bf16.mxu0 0
    %843 = vmatpush1.bf16.msra.mxu0 0
    %844 = vmatprep.subr.bf16.mxu0 0
    %845 = vmatpush1.bf16.msra.mxu0 0
    %846 = vmatprep.subr.bf16.mxu0 0
    %847 = vmatpush1.bf16.msra.mxu0 0
    %848 = vmatprep.subr.bf16.mxu0 0
    %849 = vmatpush1.bf16.msra.mxu0 0
    %850 = vmatprep.subr.bf16.mxu0 0
    %851 = vmatpush1.bf16.msra.mxu0 0
    %852 = vmatprep.subr.bf16.mxu0 0
    %853 = vmatpush1.bf16.msra.mxu0 0
    %854 = vmatprep.subr.bf16.mxu0 0
    %855 = vmatpush1.bf16.msra.mxu0 0
    %856 = vmatprep.subr.bf16.mxu0 0
    %857 = vmatpush1.bf16.msra.mxu0 0
    %858 = vmatprep.mubr.bf16.mxu0 0
    %859 = vmatmul.mubr.bf16.gmra.mrb[0].mxu0 %v821
    %v860 = vpop.f32.mrb[0].mxu0
    %v861 = vadd.f32 %v769, %v860
    %v862 = vpop.f32.mrb[0].mxu0
    %v863 = vpop.f32.mrb[0].mxu0
    %v864 = vpop.f32.mrb[0].mxu0
    %865 = vdwg.mxu0
    %v867 = vsel %vm240, %v716, 0
    %v870 = vsel %vm730, %v720, 0
    %872 = vmatprep.subr.bf16.mxu0 0
    %873 = vmatpush1.bf16.msra.mxu0 %v870
    %874 = vmatprep.subr.bf16.mxu0 0
    %875 = vmatpush1.bf16.msra.mxu0 0
    %876 = vmatprep.subr.bf16.mxu0 0
    %877 = vmatpush1.bf16.msra.mxu0 0
    %878 = vmatprep.subr.bf16.mxu0 0
    %879 = vmatpush1.bf16.msra.mxu0 0
    %880 = vmatprep.subr.bf16.mxu0 0
    %881 = vmatpush1.bf16.msra.mxu0 0
    %882 = vmatprep.subr.bf16.mxu0 0
    %883 = vmatpush1.bf16.msra.mxu0 0
    %884 = vmatprep.subr.bf16.mxu0 0
    %885 = vmatpush1.bf16.msra.mxu0 0
    %886 = vmatprep.subr.bf16.mxu0 0
    %887 = vmatpush1.bf16.msra.mxu0 0
    %888 = vmatprep.subr.bf16.mxu0 0
    %889 = vmatpush1.bf16.msra.mxu0 0
    %890 = vmatprep.subr.bf16.mxu0 0
    %891 = vmatpush1.bf16.msra.mxu0 0
    %892 = vmatprep.subr.bf16.mxu0 0
    %893 = vmatpush1.bf16.msra.mxu0 0
    %894 = vmatprep.subr.bf16.mxu0 0
    %895 = vmatpush1.bf16.msra.mxu0 0
    %896 = vmatprep.subr.bf16.mxu0 0
    %897 = vmatpush1.bf16.msra.mxu0 0
    %898 = vmatprep.subr.bf16.mxu0 0
    %899 = vmatpush1.bf16.msra.mxu0 0
    %900 = vmatprep.subr.bf16.mxu0 0
    %901 = vmatpush1.bf16.msra.mxu0 0
    %902 = vmatprep.subr.bf16.mxu0 0
    %903 = vmatpush1.bf16.msra.mxu0 0
    %904 = vmatprep.mubr.bf16.mxu0 0
    %905 = vmatmul.mubr.bf16.gmra.mrb[0].mxu0 %v867
    %v906 = vpop.f32.mrb[0].mxu0
    %v907 = vadd.f32 %v815, %v906
    %v908 = vpop.f32.mrb[0].mxu0
    %v909 = vpop.f32.mrb[0].mxu0
    %v910 = vpop.f32.mrb[0].mxu0
    %911 = vdwg.mxu0
    %v912 = vpack.c.bf16 %v709, %v709
    %v913 = vpack.c.bf16 %v713, %v713
    %v914 = vmul.f32 %v232, %v163
    %v915 = vmul.f32 %v235, %v163
    %v916 = vpack.c.bf16 %v914, %v914
    %v917 = vpack.c.bf16 %v915, %v915
    %v919 = vsel %vm240, %v912, 0
    %v922 = vsel %vm730, %v916, 0
    %924 = vmatprep.subr.bf16.mxu0 0
    %925 = vmatpush1.bf16.msra.mxu0 %v922
    %926 = vmatprep.subr.bf16.mxu0 0
    %927 = vmatpush1.bf16.msra.mxu0 0
    %928 = vmatprep.subr.bf16.mxu0 0
    %929 = vmatpush1.bf16.msra.mxu0 0
    %930 = vmatprep.subr.bf16.mxu0 0
    %931 = vmatpush1.bf16.msra.mxu0 0
    %932 = vmatprep.subr.bf16.mxu0 0
    %933 = vmatpush1.bf16.msra.mxu0 0
    %934 = vmatprep.subr.bf16.mxu0 0
    %935 = vmatpush1.bf16.msra.mxu0 0
    %936 = vmatprep.subr.bf16.mxu0 0
    %937 = vmatpush1.bf16.msra.mxu0 0
    %938 = vmatprep.subr.bf16.mxu0 0
    %939 = vmatpush1.bf16.msra.mxu0 0
    %940 = vmatprep.subr.bf16.mxu0 0
    %941 = vmatpush1.bf16.msra.mxu0 0
    %942 = vmatprep.subr.bf16.mxu0 0
    %943 = vmatpush1.bf16.msra.mxu0 0
    %944 = vmatprep.subr.bf16.mxu0 0
    %945 = vmatpush1.bf16.msra.mxu0 0
    %946 = vmatprep.subr.bf16.mxu0 0
    %947 = vmatpush1.bf16.msra.mxu0 0
    %948 = vmatprep.subr.bf16.mxu0 0
    %949 = vmatpush1.bf16.msra.mxu0 0
    %950 = vmatprep.subr.bf16.mxu0 0
    %951 = vmatpush1.bf16.msra.mxu0 0
    %952 = vmatprep.subr.bf16.mxu0 0
    %953 = vmatpush1.bf16.msra.mxu0 0
    %954 = vmatprep.subr.bf16.mxu0 0
    %955 = vmatpush1.bf16.msra.mxu0 0
    %956 = vmatprep.mubr.bf16.mxu0 0
    %957 = vmatmul.mubr.bf16.gmra.mrb[0].mxu0 %v919
    %v958 = vpop.f32.mrb[0].mxu0
    %v959 = vadd.f32 0.0, %v958
    %v960 = vpop.f32.mrb[0].mxu0
    %v961 = vpop.f32.mrb[0].mxu0
    %v962 = vpop.f32.mrb[0].mxu0
    %963 = vdwg.mxu0
    %v965 = vsel %vm240, %v913, 0
    %v968 = vsel %vm730, %v917, 0
    %970 = vmatprep.subr.bf16.mxu0 0
    %971 = vmatpush1.bf16.msra.mxu0 %v968
    %972 = vmatprep.subr.bf16.mxu0 0
    %973 = vmatpush1.bf16.msra.mxu0 0
    %974 = vmatprep.subr.bf16.mxu0 0
    %975 = vmatpush1.bf16.msra.mxu0 0
    %976 = vmatprep.subr.bf16.mxu0 0
    %977 = vmatpush1.bf16.msra.mxu0 0
    %978 = vmatprep.subr.bf16.mxu0 0
    %979 = vmatpush1.bf16.msra.mxu0 0
    %980 = vmatprep.subr.bf16.mxu0 0
    %981 = vmatpush1.bf16.msra.mxu0 0
    %982 = vmatprep.subr.bf16.mxu0 0
    %983 = vmatpush1.bf16.msra.mxu0 0
    %984 = vmatprep.subr.bf16.mxu0 0
    %985 = vmatpush1.bf16.msra.mxu0 0
    %986 = vmatprep.subr.bf16.mxu0 0
    %987 = vmatpush1.bf16.msra.mxu0 0
    %988 = vmatprep.subr.bf16.mxu0 0
    %989 = vmatpush1.bf16.msra.mxu0 0
    %990 = vmatprep.subr.bf16.mxu0 0
    %991 = vmatpush1.bf16.msra.mxu0 0
    %992 = vmatprep.subr.bf16.mxu0 0
    %993 = vmatpush1.bf16.msra.mxu0 0
    %994 = vmatprep.subr.bf16.mxu0 0
    %995 = vmatpush1.bf16.msra.mxu0 0
    %996 = vmatprep.subr.bf16.mxu0 0
    %997 = vmatpush1.bf16.msra.mxu0 0
    %998 = vmatprep.subr.bf16.mxu0 0
    %999 = vmatpush1.bf16.msra.mxu0 0
    %1000 = vmatprep.subr.bf16.mxu0 0
    %1001 = vmatpush1.bf16.msra.mxu0 0
    %1002 = vmatprep.mubr.bf16.mxu0 0
    %1003 = vmatmul.mubr.bf16.gmra.mrb[0].mxu0 %v965
    %v1004 = vpop.f32.mrb[0].mxu0
    %v1005 = vadd.f32 0.0, %v1004
    %v1006 = vpop.f32.mrb[0].mxu0
    %v1007 = vpop.f32.mrb[0].mxu0
    %v1008 = vpop.f32.mrb[0].mxu0
    %1009 = vdwg.mxu0
    %v1010 = vadd.f32 %v861, %v959
    %v1011 = vadd.f32 %v907, %v1005
    %v1012 = vpack.c.bf16 %v710, %v710
    %v1013 = vpack.c.bf16 %v714, %v714
    %v1014 = vmul.f32 %v232, %v168
    %v1015 = vmul.f32 %v235, %v168
    %v1016 = vpack.c.bf16 %v1014, %v1014
    %v1017 = vpack.c.bf16 %v1015, %v1015
    %v1019 = vsel %vm240, %v1012, 0
    %v1022 = vsel %vm730, %v1016, 0
    %1024 = vmatprep.subr.bf16.mxu0 0
    %1025 = vmatpush1.bf16.msra.mxu0 %v1022
    %1026 = vmatprep.subr.bf16.mxu0 0
    %1027 = vmatpush1.bf16.msra.mxu0 0
    %1028 = vmatprep.subr.bf16.mxu0 0
    %1029 = vmatpush1.bf16.msra.mxu0 0
    %1030 = vmatprep.subr.bf16.mxu0 0
    %1031 = vmatpush1.bf16.msra.mxu0 0
    %1032 = vmatprep.subr.bf16.mxu0 0
    %1033 = vmatpush1.bf16.msra.mxu0 0
    %1034 = vmatprep.subr.bf16.mxu0 0
    %1035 = vmatpush1.bf16.msra.mxu0 0
    %1036 = vmatprep.subr.bf16.mxu0 0
    %1037 = vmatpush1.bf16.msra.mxu0 0
    %1038 = vmatprep.subr.bf16.mxu0 0
    %1039 = vmatpush1.bf16.msra.mxu0 0
    %1040 = vmatprep.subr.bf16.mxu0 0
    %1041 = vmatpush1.bf16.msra.mxu0 0
    %1042 = vmatprep.subr.bf16.mxu0 0
    %1043 = vmatpush1.bf16.msra.mxu0 0
    %1044 = vmatprep.subr.bf16.mxu0 0
    %1045 = vmatpush1.bf16.msra.mxu0 0
    %1046 = vmatprep.subr.bf16.mxu0 0
    %1047 = vmatpush1.bf16.msra.mxu0 0
    %1048 = vmatprep.subr.bf16.mxu0 0
    %1049 = vmatpush1.bf16.msra.mxu0 0
    %1050 = vmatprep.subr.bf16.mxu0 0
    %1051 = vmatpush1.bf16.msra.mxu0 0
    %1052 = vmatprep.subr.bf16.mxu0 0
    %1053 = vmatpush1.bf16.msra.mxu0 0
    %1054 = vmatprep.subr.bf16.mxu0 0
    %1055 = vmatpush1.bf16.msra.mxu0 0
    %1056 = vmatprep.mubr.bf16.mxu0 0
    %1057 = vmatmul.mubr.bf16.gmra.mrb[0].mxu0 %v1019
    %v1058 = vpop.f32.mrb[0].mxu0
    %v1059 = vadd.f32 0.0, %v1058
    %v1060 = vpop.f32.mrb[0].mxu0
    %v1061 = vpop.f32.mrb[0].mxu0
    %v1062 = vpop.f32.mrb[0].mxu0
    %1063 = vdwg.mxu0
    %v1065 = vsel %vm240, %v1013, 0
    %v1068 = vsel %vm730, %v1017, 0
    %1070 = vmatprep.subr.bf16.mxu0 0
    %1071 = vmatpush1.bf16.msra.mxu0 %v1068
    %1072 = vmatprep.subr.bf16.mxu0 0
    %1073 = vmatpush1.bf16.msra.mxu0 0
    %1074 = vmatprep.subr.bf16.mxu0 0
    %1075 = vmatpush1.bf16.msra.mxu0 0
    %1076 = vmatprep.subr.bf16.mxu0 0
    %1077 = vmatpush1.bf16.msra.mxu0 0
    %1078 = vmatprep.subr.bf16.mxu0 0
    %1079 = vmatpush1.bf16.msra.mxu0 0
    %1080 = vmatprep.subr.bf16.mxu0 0
    %1081 = vmatpush1.bf16.msra.mxu0 0
    %1082 = vmatprep.subr.bf16.mxu0 0
    %1083 = vmatpush1.bf16.msra.mxu0 0
    %1084 = vmatprep.subr.bf16.mxu0 0
    %1085 = vmatpush1.bf16.msra.mxu0 0
    %1086 = vmatprep.subr.bf16.mxu0 0
    %1087 = vmatpush1.bf16.msra.mxu0 0
    %1088 = vmatprep.subr.bf16.mxu0 0
    %1089 = vmatpush1.bf16.msra.mxu0 0
    %1090 = vmatprep.subr.bf16.mxu0 0
    %1091 = vmatpush1.bf16.msra.mxu0 0
    %1092 = vmatprep.subr.bf16.mxu0 0
    %1093 = vmatpush1.bf16.msra.mxu0 0
    %1094 = vmatprep.subr.bf16.mxu0 0
    %1095 = vmatpush1.bf16.msra.mxu0 0
    %1096 = vmatprep.subr.bf16.mxu0 0
    %1097 = vmatpush1.bf16.msra.mxu0 0
    %1098 = vmatprep.subr.bf16.mxu0 0
    %1099 = vmatpush1.bf16.msra.mxu0 0
    %1100 = vmatprep.subr.bf16.mxu0 0
    %1101 = vmatpush1.bf16.msra.mxu0 0
    %1102 = vmatprep.mubr.bf16.mxu0 0
    %1103 = vmatmul.mubr.bf16.gmra.mrb[0].mxu0 %v1065
    %v1104 = vpop.f32.mrb[0].mxu0
    %v1105 = vadd.f32 0.0, %v1104
    %v1106 = vpop.f32.mrb[0].mxu0
    %v1107 = vpop.f32.mrb[0].mxu0
    %v1108 = vpop.f32.mrb[0].mxu0
    %1109 = vdwg.mxu0
    %v1110 = vadd.f32 %v1010, %v1059
    %v1111 = vadd.f32 %v1011, %v1105
    %v1112 = vpack.c.bf16 %v1111, %v1110
    %v1113 = vlaneseq
    %v1114 = vshrl.u32 %v1113, 7
    %v1115 = vsub.s32 1, %v1114
    %v1116 = vrot.slane %v187, %v1115
    %1119 = vrot.lane.b32.xlu0 %v173, 96
    %v1120 = vpop.permute.xlu0 %1119
    %1121 = vrot.lane.b32.xlu0 %v174, 96
    %v1122 = vpop.permute.xlu0 %1121
    %v1126 = vsel %vm193, %v1112, 0
    %1128 = vmatprep.subr.bf16.mxu0 0
    %1129 = vmatpush1.bf16.msra.mxu0 %v1120
    %1130 = vmatprep.subr.bf16.mxu0 0
    %1131 = vmatpush1.bf16.msra.mxu0 %v1122
    %1132 = vmatprep.subr.bf16.mxu0 0
    %1133 = vmatpush1.bf16.msra.mxu0 0
    %1134 = vmatprep.subr.bf16.mxu0 0
    %1135 = vmatpush1.bf16.msra.mxu0 0
    %1136 = vmatprep.subr.bf16.mxu0 0
    %1137 = vmatpush1.bf16.msra.mxu0 0
    %1138 = vmatprep.subr.bf16.mxu0 0
    %1139 = vmatpush1.bf16.msra.mxu0 0
    %1140 = vmatprep.subr.bf16.mxu0 0
    %1141 = vmatpush1.bf16.msra.mxu0 0
    %1142 = vmatprep.subr.bf16.mxu0 0
    %1143 = vmatpush1.bf16.msra.mxu0 0
    %1144 = vmatprep.subr.bf16.mxu0 0
    %1145 = vmatpush1.bf16.msra.mxu0 0
    %1146 = vmatprep.subr.bf16.mxu0 0
    %1147 = vmatpush1.bf16.msra.mxu0 0
    %1148 = vmatprep.subr.bf16.mxu0 0
    %1149 = vmatpush1.bf16.msra.mxu0 0
    %1150 = vmatprep.subr.bf16.mxu0 0
    %1151 = vmatpush1.bf16.msra.mxu0 0
    %1152 = vmatprep.subr.bf16.mxu0 0
    %1153 = vmatpush1.bf16.msra.mxu0 0
    %1154 = vmatprep.subr.bf16.mxu0 0
    %1155 = vmatpush1.bf16.msra.mxu0 0
    %1156 = vmatprep.subr.bf16.mxu0 0
    %1157 = vmatpush1.bf16.msra.mxu0 0
    %1158 = vmatprep.subr.bf16.mxu0 0
    %1159 = vmatpush1.bf16.msra.mxu0 0
    %1160 = vmatprep.mubr.bf16.mxu0 0
    %1161 = vmatmul.mubr.bf16.gmra.mrb[0].mxu0 %v1126
    %v1162 = vpop.f32.mrb[0].mxu0
    %v1163 = vadd.f32 %v1116, %v1162
    %v1164 = vpop.f32.mrb[0].mxu0
    %v1165 = vpop.f32.mrb[0].mxu0
    %v1166 = vadd.f32 %v1116, %v1165
    %v1167 = vpop.f32.mrb[0].mxu0
    %1168 = vdwg.mxu0
    %v1169 = vadd.f32 %v133, %v1163
    %v1170 = vadd.f32 %v138, %v1166
    %v1171 = vsel %vm193, %v1169, 0.0
    %1172 = vadd.xlane.f32.xlu0 %v1171
    %v1173 = vpop.xlane.xlu0 %1172
    %v1174 = vsel %vm193, %v1170, 0.0
    %1175 = vadd.xlane.f32.xlu0 %v1174
    %v1176 = vpop.xlane.xlu0 %1175
    %v1177 = vrcp.pop 32.0
    %v1178 = vmul.f32 %v1173, %v1177
    %v1179 = vmul.f32 %v1176, %v1177
    %v1180 = vsub.f32 %v1169, %v1178
    %v1181 = vsub.f32 %v1170, %v1179
    %v1182 = vmul.f32 %v1180, %v1180
    %v1183 = vmul.f32 %v1181, %v1181
    %v1184 = vsel %vm193, %v1182, 0.0
    %1185 = vadd.xlane.f32.xlu0 %v1184
    %v1186 = vpop.xlane.xlu0 %1185
    %v1187 = vsel %vm193, %v1183, 0.0
    %1188 = vadd.xlane.f32.xlu0 %v1187
    %v1189 = vpop.xlane.xlu0 %1188
    %v1190 = vmul.f32 %v1186, 0.032258064
    %v1191 = vmul.f32 %v1189, 0.032258064
    %v1192 = vrsqrt.pop %v1190
    %v1193 = vmul.f32 %v1190, %v1192
    %vm1194 = vcmp.eq.f32.partialorder %v1190, inf
    %v1195 = vsel %vm1194, %v1190, %v1193
    %vm1196 = vcmp.eq.f32.partialorder %v1190, 0.0
    %v1197 = vand.u32 %v1190, 2147483648
    %v1198 = vsel %vm1196, %v1197, %v1195
    %v1199 = vrsqrt.pop %v1191
    %v1200 = vmul.f32 %v1191, %v1199
    %vm1201 = vcmp.eq.f32.partialorder %v1191, inf
    %v1202 = vsel %vm1201, %v1191, %v1200
    %vm1203 = vcmp.eq.f32.partialorder %v1191, 0.0
    %v1204 = vand.u32 %v1191, 2147483648
    %v1205 = vsel %vm1203, %v1204, %v1202
    %v1206 = vadd.f32 %v1198, 1e-06
    %v1207 = vadd.f32 %v1205, 1e-06
    %v1208 = vrcp.pop %v1206
    %v1209 = vmul.f32 %v1180, %v1208
    %v1210 = vrcp.pop %v1207
    %v1211 = vmul.f32 %v1181, %v1210
    %v1212 = vlaneseq
    %v1213 = vshrl.u32 %v1212, 7
    %v1214 = vsub.s32 3, %v1213
    %v1215 = vrot.slane %v187, %v1214
    %v1216 = vmul.f32 %v1215, %v1209
    %v1217 = vmul.f32 %v1215, %v1211
    %v1218 = vlaneseq
    %v1219 = vshrl.u32 %v1218, 7
    %v1220 = vsub.s32 4, %v1219
    %v1221 = vrot.slane %v187, %v1220
    %v1222 = vadd.f32 %v1216, %v1221
    %v1223 = vadd.f32 %v1217, %v1221
    %v1224 = vpack.c.bf16 %v1223, %v1222
    %v1225 = vlaneseq
    %v1226 = vshrl.u32 %v1225, 7
    %v1227 = vsub.s32 7, %v1226
    %v1228 = vrot.slane %v187, %v1227
    %1229 = vrot.lane.b32.xlu0 %v173, 64
    %v1230 = vpop.permute.xlu0 %1229
    %1231 = vrot.lane.b32.xlu0 %v174, 64
    %v1232 = vpop.permute.xlu0 %1231
    %v1236 = vsel %vm193, %v1224, 0
    %1238 = vmatprep.subr.bf16.mxu0 0
    %1239 = vmatpush1.bf16.msra.mxu0 %v1230
    %1240 = vmatprep.subr.bf16.mxu0 0
    %1241 = vmatpush1.bf16.msra.mxu0 %v1232
    %1242 = vmatprep.subr.bf16.mxu0 0
    %1243 = vmatpush1.bf16.msra.mxu0 0
    %1244 = vmatprep.subr.bf16.mxu0 0
    %1245 = vmatpush1.bf16.msra.mxu0 0
    %1246 = vmatprep.subr.bf16.mxu0 0
    %1247 = vmatpush1.bf16.msra.mxu0 0
    %1248 = vmatprep.subr.bf16.mxu0 0
    %1249 = vmatpush1.bf16.msra.mxu0 0
    %1250 = vmatprep.subr.bf16.mxu0 0
    %1251 = vmatpush1.bf16.msra.mxu0 0
    %1252 = vmatprep.subr.bf16.mxu0 0
    %1253 = vmatpush1.bf16.msra.mxu0 0
    %1254 = vmatprep.subr.bf16.mxu0 0
    %1255 = vmatpush1.bf16.msra.mxu0 0
    %1256 = vmatprep.subr.bf16.mxu0 0
    %1257 = vmatpush1.bf16.msra.mxu0 0
    %1258 = vmatprep.subr.bf16.mxu0 0
    %1259 = vmatpush1.bf16.msra.mxu0 0
    %1260 = vmatprep.subr.bf16.mxu0 0
    %1261 = vmatpush1.bf16.msra.mxu0 0
    %1262 = vmatprep.subr.bf16.mxu0 0
    %1263 = vmatpush1.bf16.msra.mxu0 0
    %1264 = vmatprep.subr.bf16.mxu0 0
    %1265 = vmatpush1.bf16.msra.mxu0 0
    %1266 = vmatprep.subr.bf16.mxu0 0
    %1267 = vmatpush1.bf16.msra.mxu0 0
    %1268 = vmatprep.subr.bf16.mxu0 0
    %1269 = vmatpush1.bf16.msra.mxu0 0
    %1270 = vmatprep.mubr.bf16.mxu0 0
    %1271 = vmatmul.mubr.bf16.gmra.mrb[0].mxu0 %v1236
    %v1272 = vpop.f32.mrb[0].mxu0
    %v1273 = vadd.f32 %v1228, %v1272
    %v1274 = vpop.f32.mrb[0].mxu0
    %v1275 = vpop.f32.mrb[0].mxu0
    %v1276 = vadd.f32 %v1228, %v1275
    %v1277 = vpop.f32.mrb[0].mxu0
    %1278 = vdwg.mxu0
    %v1279 = vmax.f32 %v1273, 0.0
    %v1280 = vmax.f32 %v1276, 0.0
    %v1281 = vpack.c.bf16 %v1280, %v1279
    %v1282 = vlaneseq
    %v1283 = vshrl.u32 %v1282, 7
    %v1284 = vsub.s32 2, %v1283
    %v1285 = vrot.slane %v187, %v1284
    %vm1286 = vcmask 523264
    %v1288 = vsel %vm1286, %v1281, 0
    %1290 = vmatprep.subr.bf16.mxu0 0
    %1291 = vmatpush1.bf16.msra.mxu0 %v183
    %1292 = vmatprep.subr.bf16.mxu0 0
    %1293 = vmatpush1.bf16.msra.mxu0 %v184
    %1294 = vmatprep.subr.bf16.mxu0 0
    %1295 = vmatpush1.bf16.msra.mxu0 %v185
    %1296 = vmatprep.subr.bf16.mxu0 0
    %1297 = vmatpush1.bf16.msra.mxu0 %v186
    %1298 = vmatprep.subr.bf16.mxu0 0
    %1299 = vmatpush1.bf16.msra.mxu0 0
    %1300 = vmatprep.subr.bf16.mxu0 0
    %1301 = vmatpush1.bf16.msra.mxu0 0
    %1302 = vmatprep.subr.bf16.mxu0 0
    %1303 = vmatpush1.bf16.msra.mxu0 0
    %1304 = vmatprep.subr.bf16.mxu0 0
    %1305 = vmatpush1.bf16.msra.mxu0 0
    %1306 = vmatprep.subr.bf16.mxu0 0
    %1307 = vmatpush1.bf16.msra.mxu0 0
    %1308 = vmatprep.subr.bf16.mxu0 0
    %1309 = vmatpush1.bf16.msra.mxu0 0
    %1310 = vmatprep.subr.bf16.mxu0 0
    %1311 = vmatpush1.bf16.msra.mxu0 0
    %1312 = vmatprep.subr.bf16.mxu0 0
    %1313 = vmatpush1.bf16.msra.mxu0 0
    %1314 = vmatprep.subr.bf16.mxu0 0
    %1315 = vmatpush1.bf16.msra.mxu0 0
    %1316 = vmatprep.subr.bf16.mxu0 0
    %1317 = vmatpush1.bf16.msra.mxu0 0
    %1318 = vmatprep.subr.bf16.mxu0 0
    %1319 = vmatpush1.bf16.msra.mxu0 0
    %1320 = vmatprep.subr.bf16.mxu0 0
    %1321 = vmatpush1.bf16.msra.mxu0 0
    %1322 = vmatprep.mubr.bf16.mxu0 0
    %1323 = vmatmul.mubr.bf16.gmra.mrb[0].mxu0 %v1288
    %v1324 = vpop.f32.mrb[0].mxu0
    %v1325 = vadd.f32 %v1285, %v1324
    %v1326 = vpop.f32.mrb[0].mxu0
    %v1327 = vpop.f32.mrb[0].mxu0
    %v1328 = vadd.f32 %v1285, %v1327
    %v1329 = vpop.f32.mrb[0].mxu0
    %1330 = vdwg.mxu0
    %v1331 = vadd.f32 %v1222, %v1325
    %v1332 = vadd.f32 %v1223, %v1328
    %v1333 = vsel %vm193, %v1331, 0.0
    %1334 = vadd.xlane.f32.xlu0 %v1333
    %v1335 = vpop.xlane.xlu0 %1334
    %v1336 = vsel %vm193, %v1332, 0.0
    %1337 = vadd.xlane.f32.xlu0 %v1336
    %v1338 = vpop.xlane.xlu0 %1337
    %v1339 = vmul.f32 %v1335, %v1177
    %v1340 = vmul.f32 %v1338, %v1177
    %v1341 = vsub.f32 %v1331, %v1339
    %v1342 = vsub.f32 %v1332, %v1340
    %v1343 = vmul.f32 %v1341, %v1341
    %v1344 = vmul.f32 %v1342, %v1342
    %v1345 = vsel %vm193, %v1343, 0.0
    %1346 = vadd.xlane.f32.xlu0 %v1345
    %v1347 = vpop.xlane.xlu0 %1346
    %v1348 = vsel %vm193, %v1344, 0.0
    %1349 = vadd.xlane.f32.xlu0 %v1348
    %v1350 = vpop.xlane.xlu0 %1349
    %v1351 = vmul.f32 %v1347, 0.032258064
    %v1352 = vmul.f32 %v1350, 0.032258064
    %v1353 = vrsqrt.pop %v1351
    %v1354 = vmul.f32 %v1351, %v1353
    %vm1355 = vcmp.eq.f32.partialorder %v1351, inf
    %v1356 = vsel %vm1355, %v1351, %v1354
    %vm1357 = vcmp.eq.f32.partialorder %v1351, 0.0
    %v1358 = vand.u32 %v1351, 2147483648
    %v1359 = vsel %vm1357, %v1358, %v1356
    %v1360 = vrsqrt.pop %v1352
    %v1361 = vmul.f32 %v1352, %v1360
    %vm1362 = vcmp.eq.f32.partialorder %v1352, inf
    %v1363 = vsel %vm1362, %v1352, %v1361
    %vm1364 = vcmp.eq.f32.partialorder %v1352, 0.0
    %v1365 = vand.u32 %v1352, 2147483648
    %v1366 = vsel %vm1364, %v1365, %v1363
    %v1367 = vadd.f32 %v1359, 1e-06
    %v1368 = vadd.f32 %v1366, 1e-06
    %v1369 = vrcp.pop %v1367
    %v1370 = vmul.f32 %v1341, %v1369
    %v1371 = vrcp.pop %v1368
    %v1372 = vmul.f32 %v1342, %v1371
    %v1373 = vlaneseq
    %v1374 = vshrl.u32 %v1373, 7
    %v1375 = vsub.s32 5, %v1374
    %v1376 = vrot.slane %v187, %v1375
    %v1377 = vmul.f32 %v1376, %v1370
    %v1378 = vmul.f32 %v1376, %v1372
    %v1379 = vlaneseq
    %v1380 = vshrl.u32 %v1379, 7
    %v1381 = vsub.s32 6, %v1380
    %v1382 = vrot.slane %v187, %v1381
    %v1383 = vadd.f32 %v1377, %v1382
    %v1384 = vadd.f32 %v1378, %v1382
    %s1385 = scalar_lea.vmem %s4, 32
    %v1386 = vld [vmem:[%s1385] sm:$0xff]
    %v1387 = vld [vmem:[%s1385 + $0x8] sm:$0xff]
    %v1388 = vld [vmem:[%s1385 + $0x10] sm:$0xff]
    %v1389 = vld [vmem:[%s1385 + $0x18] sm:$0xff]
    %v1390 = vpack.c.bf16 %v1387, %v1386
    %v1391 = vpack.c.bf16 %v1389, %v1388
    %s1392 = scalar_lea.vmem %s5, 64
    %v1393 = vld [vmem:[%s1392] sm:$0xff]
    %v1394 = vld [vmem:[%s1392 + $0x8] sm:$0xff]
    %v1395 = vld [vmem:[%s1392 + $0x10] sm:$0xff]
    %v1396 = vld [vmem:[%s1392 + $0x18] sm:$0xff]
    %v1397 = vld [vmem:[%s1392 + $0x20] sm:$0xff]
    %v1398 = vld [vmem:[%s1392 + $0x28] sm:$0xff]
    %v1399 = vld [vmem:[%s1392 + $0x30] sm:$0xff]
    %v1400 = vld [vmem:[%s1392 + $0x38] sm:$0xff]
    %v1401 = vpack.c.bf16 %v1394, %v1393
    %v1402 = vpack.c.bf16 %v1396, %v1395
    %v1403 = vpack.c.bf16 %v1398, %v1397
    %v1404 = vpack.c.bf16 %v1400, %v1399
    %s1405 = scalar_lea.vmem %s6, 8
    %v1406 = vld [vmem:[%s1405] sm:$0xff]
    %v1407 = vpack.c.bf16 %v1384, %v1383
    %v1408 = vlaneseq
    %v1409 = vshrl.u32 %v1408, 7
    %v1410 = vsub.s32 0, %v1409
    %v1411 = vrot.slane %v1406, %v1410
    %v1413 = vsel %vm193, %v1407, 0
    %1415 = vmatprep.subr.bf16.mxu0 0
    %1416 = vmatpush1.bf16.msra.mxu0 %v1390
    %1417 = vmatprep.subr.bf16.mxu0 0
    %1418 = vmatpush1.bf16.msra.mxu0 %v1391
    %1419 = vmatprep.subr.bf16.mxu0 0
    %1420 = vmatpush1.bf16.msra.mxu0 0
    %1421 = vmatprep.subr.bf16.mxu0 0
    %1422 = vmatpush1.bf16.msra.mxu0 0
    %1423 = vmatprep.subr.bf16.mxu0 0
    %1424 = vmatpush1.bf16.msra.mxu0 0
    %1425 = vmatprep.subr.bf16.mxu0 0
    %1426 = vmatpush1.bf16.msra.mxu0 0
    %1427 = vmatprep.subr.bf16.mxu0 0
    %1428 = vmatpush1.bf16.msra.mxu0 0
    %1429 = vmatprep.subr.bf16.mxu0 0
    %1430 = vmatpush1.bf16.msra.mxu0 0
    %1431 = vmatprep.subr.bf16.mxu0 0
    %1432 = vmatpush1.bf16.msra.mxu0 0
    %1433 = vmatprep.subr.bf16.mxu0 0
    %1434 = vmatpush1.bf16.msra.mxu0 0
    %1435 = vmatprep.subr.bf16.mxu0 0
    %1436 = vmatpush1.bf16.msra.mxu0 0
    %1437 = vmatprep.subr.bf16.mxu0 0
    %1438 = vmatpush1.bf16.msra.mxu0 0
    %1439 = vmatprep.subr.bf16.mxu0 0
    %1440 = vmatpush1.bf16.msra.mxu0 0
    %1441 = vmatprep.subr.bf16.mxu0 0
    %1442 = vmatpush1.bf16.msra.mxu0 0
    %1443 = vmatprep.subr.bf16.mxu0 0
    %1444 = vmatpush1.bf16.msra.mxu0 0
    %1445 = vmatprep.subr.bf16.mxu0 0
    %1446 = vmatpush1.bf16.msra.mxu0 0
    %1447 = vmatprep.mubr.bf16.mxu0 0
    %1448 = vmatmul.mubr.bf16.gmra.mrb[0].mxu0 %v1413
    %v1449 = vpop.f32.mrb[0].mxu0
    %v1450 = vadd.f32 %v1411, %v1449
    %v1451 = vpop.f32.mrb[0].mxu0
    %v1452 = vpop.f32.mrb[0].mxu0
    %v1453 = vadd.f32 %v1411, %v1452
    %v1454 = vpop.f32.mrb[0].mxu0
    %1455 = vdwg.mxu0
    %v1456 = vpack.c.bf16 %v1450, %v1450
    %v1457 = vpack.c.bf16 %v1453, %v1453
    %v1459 = vsel %vm240, %v1456, 0
    %1461 = vmatprep.subr.bf16.mxu0 0
    %1462 = vmatpush1.bf16.xpose.msra.mxu0 %v1459
    %1463 = vmatprep.subr.bf16.mxu0 0
    %1464 = vmatpush1.bf16.xpose.msra.mxu0 0
    %1465 = vmatprep.subr.bf16.mxu0 0
    %1466 = vmatpush1.bf16.xpose.msra.mxu0 0
    %1467 = vmatprep.subr.bf16.mxu0 0
    %1468 = vmatpush1.bf16.xpose.msra.mxu0 0
    %1469 = vmatprep.subr.bf16.mxu0 0
    %1470 = vmatpush1.bf16.xpose.msra.mxu0 0
    %1471 = vmatprep.subr.bf16.mxu0 0
    %1472 = vmatpush1.bf16.xpose.msra.mxu0 0
    %1473 = vmatprep.subr.bf16.mxu0 0
    %1474 = vmatpush1.bf16.xpose.msra.mxu0 0
    %1475 = vmatprep.subr.bf16.mxu0 0
    %1476 = vmatpush1.bf16.xpose.msra.mxu0 0
    %1477 = vmatprep.subr.bf16.mxu0 0
    %1478 = vmatpush1.bf16.xpose.msra.mxu0 0
    %1479 = vmatprep.subr.bf16.mxu0 0
    %1480 = vmatpush1.bf16.xpose.msra.mxu0 0
    %1481 = vmatprep.subr.bf16.mxu0 0
    %1482 = vmatpush1.bf16.xpose.msra.mxu0 0
    %1483 = vmatprep.subr.bf16.mxu0 0
    %1484 = vmatpush1.bf16.xpose.msra.mxu0 0
    %1485 = vmatprep.subr.bf16.mxu0 0
    %1486 = vmatpush1.bf16.xpose.msra.mxu0 0
    %1487 = vmatprep.subr.bf16.mxu0 0
    %1488 = vmatpush1.bf16.xpose.msra.mxu0 0
    %1489 = vmatprep.subr.bf16.mxu0 0
    %1490 = vmatpush1.bf16.xpose.msra.mxu0 0
    %1491 = vmatprep.subr.bf16.mxu0 0
    %1492 = vmatpush1.bf16.xpose.msra.mxu0 0
    %1493 = vmatprep.mubr.bf16.mxu0 0
    %1494 = vmatmul.mubr.bf16.gmra.mrb[0].mxu0 %v1459
    %v1495 = vpop.f32.mrb[0].mxu0
    %v1496 = vadd.f32 0.0, %v1495
    %v1497 = vpop.f32.mrb[0].mxu0
    %v1498 = vpop.f32.mrb[0].mxu0
    %v1499 = vpop.f32.mrb[0].mxu0
    %1500 = vdwg.mxu0
    %v1502 = vsel %vm240, %v1457, 0
    %1504 = vmatprep.subr.bf16.mxu0 0
    %1505 = vmatpush1.bf16.xpose.msra.mxu0 %v1502
    %1506 = vmatprep.subr.bf16.mxu0 0
    %1507 = vmatpush1.bf16.xpose.msra.mxu0 0
    %1508 = vmatprep.subr.bf16.mxu0 0
    %1509 = vmatpush1.bf16.xpose.msra.mxu0 0
    %1510 = vmatprep.subr.bf16.mxu0 0
    %1511 = vmatpush1.bf16.xpose.msra.mxu0 0
    %1512 = vmatprep.subr.bf16.mxu0 0
    %1513 = vmatpush1.bf16.xpose.msra.mxu0 0
    %1514 = vmatprep.subr.bf16.mxu0 0
    %1515 = vmatpush1.bf16.xpose.msra.mxu0 0
    %1516 = vmatprep.subr.bf16.mxu0 0
    %1517 = vmatpush1.bf16.xpose.msra.mxu0 0
    %1518 = vmatprep.subr.bf16.mxu0 0
    %1519 = vmatpush1.bf16.xpose.msra.mxu0 0
    %1520 = vmatprep.subr.bf16.mxu0 0
    %1521 = vmatpush1.bf16.xpose.msra.mxu0 0
    %1522 = vmatprep.subr.bf16.mxu0 0
    %1523 = vmatpush1.bf16.xpose.msra.mxu0 0
    %1524 = vmatprep.subr.bf16.mxu0 0
    %1525 = vmatpush1.bf16.xpose.msra.mxu0 0
    %1526 = vmatprep.subr.bf16.mxu0 0
    %1527 = vmatpush1.bf16.xpose.msra.mxu0 0
    %1528 = vmatprep.subr.bf16.mxu0 0
    %1529 = vmatpush1.bf16.xpose.msra.mxu0 0
    %1530 = vmatprep.subr.bf16.mxu0 0
    %1531 = vmatpush1.bf16.xpose.msra.mxu0 0
    %1532 = vmatprep.subr.bf16.mxu0 0
    %1533 = vmatpush1.bf16.xpose.msra.mxu0 0
    %1534 = vmatprep.subr.bf16.mxu0 0
    %1535 = vmatpush1.bf16.xpose.msra.mxu0 0
    %1536 = vmatprep.mubr.bf16.mxu0 0
    %1537 = vmatmul.mubr.bf16.gmra.mrb[0].mxu0 %v1502
    %v1538 = vpop.f32.mrb[0].mxu0
    %v1539 = vadd.f32 0.0, %v1538
    %v1540 = vpop.f32.mrb[0].mxu0
    %v1541 = vpop.f32.mrb[0].mxu0
    %v1542 = vpop.f32.mrb[0].mxu0
    %1543 = vdwg.mxu0
    %1545 = vrot.lane.b32.xlu0 %v1456, 120
    %v1546 = vpop.permute.xlu0 %1545
    %v1548 = vsel %vm240, %v1546, 0
    %1550 = vmatprep.subr.bf16.mxu0 0
    %1551 = vmatpush1.bf16.xpose.msra.mxu0 %v1548
    %1552 = vmatprep.subr.bf16.mxu0 0
    %1553 = vmatpush1.bf16.xpose.msra.mxu0 0
    %1554 = vmatprep.subr.bf16.mxu0 0
    %1555 = vmatpush1.bf16.xpose.msra.mxu0 0
    %1556 = vmatprep.subr.bf16.mxu0 0
    %1557 = vmatpush1.bf16.xpose.msra.mxu0 0
    %1558 = vmatprep.subr.bf16.mxu0 0
    %1559 = vmatpush1.bf16.xpose.msra.mxu0 0
    %1560 = vmatprep.subr.bf16.mxu0 0
    %1561 = vmatpush1.bf16.xpose.msra.mxu0 0
    %1562 = vmatprep.subr.bf16.mxu0 0
    %1563 = vmatpush1.bf16.xpose.msra.mxu0 0
    %1564 = vmatprep.subr.bf16.mxu0 0
    %1565 = vmatpush1.bf16.xpose.msra.mxu0 0
    %1566 = vmatprep.subr.bf16.mxu0 0
    %1567 = vmatpush1.bf16.xpose.msra.mxu0 0
    %1568 = vmatprep.subr.bf16.mxu0 0
    %1569 = vmatpush1.bf16.xpose.msra.mxu0 0
    %1570 = vmatprep.subr.bf16.mxu0 0
    %1571 = vmatpush1.bf16.xpose.msra.mxu0 0
    %1572 = vmatprep.subr.bf16.mxu0 0
    %1573 = vmatpush1.bf16.xpose.msra.mxu0 0
    %1574 = vmatprep.subr.bf16.mxu0 0
    %1575 = vmatpush1.bf16.xpose.msra.mxu0 0
    %1576 = vmatprep.subr.bf16.mxu0 0
    %1577 = vmatpush1.bf16.xpose.msra.mxu0 0
    %1578 = vmatprep.subr.bf16.mxu0 0
    %1579 = vmatpush1.bf16.xpose.msra.mxu0 0
    %1580 = vmatprep.subr.bf16.mxu0 0
    %1581 = vmatpush1.bf16.xpose.msra.mxu0 0
    %1582 = vmatprep.mubr.bf16.mxu0 0
    %1583 = vmatmul.mubr.bf16.gmra.mrb[0].mxu0 %v1548
    %v1584 = vpop.f32.mrb[0].mxu0
    %v1585 = vadd.f32 0.0, %v1584
    %v1586 = vpop.f32.mrb[0].mxu0
    %v1587 = vpop.f32.mrb[0].mxu0
    %v1588 = vpop.f32.mrb[0].mxu0
    %1589 = vdwg.mxu0
    %1591 = vrot.lane.b32.xlu0 %v1457, 120
    %v1592 = vpop.permute.xlu0 %1591
    %v1594 = vsel %vm240, %v1592, 0
    %1596 = vmatprep.subr.bf16.mxu0 0
    %1597 = vmatpush1.bf16.xpose.msra.mxu0 %v1594
    %1598 = vmatprep.subr.bf16.mxu0 0
    %1599 = vmatpush1.bf16.xpose.msra.mxu0 0
    %1600 = vmatprep.subr.bf16.mxu0 0
    %1601 = vmatpush1.bf16.xpose.msra.mxu0 0
    %1602 = vmatprep.subr.bf16.mxu0 0
    %1603 = vmatpush1.bf16.xpose.msra.mxu0 0
    %1604 = vmatprep.subr.bf16.mxu0 0
    %1605 = vmatpush1.bf16.xpose.msra.mxu0 0
    %1606 = vmatprep.subr.bf16.mxu0 0
    %1607 = vmatpush1.bf16.xpose.msra.mxu0 0
    %1608 = vmatprep.subr.bf16.mxu0 0
    %1609 = vmatpush1.bf16.xpose.msra.mxu0 0
    %1610 = vmatprep.subr.bf16.mxu0 0
    %1611 = vmatpush1.bf16.xpose.msra.mxu0 0
    %1612 = vmatprep.subr.bf16.mxu0 0
    %1613 = vmatpush1.bf16.xpose.msra.mxu0 0
    %1614 = vmatprep.subr.bf16.mxu0 0
    %1615 = vmatpush1.bf16.xpose.msra.mxu0 0
    %1616 = vmatprep.subr.bf16.mxu0 0
    %1617 = vmatpush1.bf16.xpose.msra.mxu0 0
    %1618 = vmatprep.subr.bf16.mxu0 0
    %1619 = vmatpush1.bf16.xpose.msra.mxu0 0
    %1620 = vmatprep.subr.bf16.mxu0 0
    %1621 = vmatpush1.bf16.xpose.msra.mxu0 0
    %1622 = vmatprep.subr.bf16.mxu0 0
    %1623 = vmatpush1.bf16.xpose.msra.mxu0 0
    %1624 = vmatprep.subr.bf16.mxu0 0
    %1625 = vmatpush1.bf16.xpose.msra.mxu0 0
    %1626 = vmatprep.subr.bf16.mxu0 0
    %1627 = vmatpush1.bf16.xpose.msra.mxu0 0
    %1628 = vmatprep.mubr.bf16.mxu0 0
    %1629 = vmatmul.mubr.bf16.gmra.mrb[0].mxu0 %v1594
    %v1630 = vpop.f32.mrb[0].mxu0
    %v1631 = vadd.f32 0.0, %v1630
    %v1632 = vpop.f32.mrb[0].mxu0
    %v1633 = vpop.f32.mrb[0].mxu0
    %v1634 = vpop.f32.mrb[0].mxu0
    %1635 = vdwg.mxu0
    %1636 = vrot.lane.b32.xlu0 %v1456, 112
    %v1637 = vpop.permute.xlu0 %1636
    %v1639 = vsel %vm240, %v1637, 0
    %1641 = vmatprep.subr.bf16.mxu0 0
    %1642 = vmatpush1.bf16.xpose.msra.mxu0 %v1639
    %1643 = vmatprep.subr.bf16.mxu0 0
    %1644 = vmatpush1.bf16.xpose.msra.mxu0 0
    %1645 = vmatprep.subr.bf16.mxu0 0
    %1646 = vmatpush1.bf16.xpose.msra.mxu0 0
    %1647 = vmatprep.subr.bf16.mxu0 0
    %1648 = vmatpush1.bf16.xpose.msra.mxu0 0
    %1649 = vmatprep.subr.bf16.mxu0 0
    %1650 = vmatpush1.bf16.xpose.msra.mxu0 0
    %1651 = vmatprep.subr.bf16.mxu0 0
    %1652 = vmatpush1.bf16.xpose.msra.mxu0 0
    %1653 = vmatprep.subr.bf16.mxu0 0
    %1654 = vmatpush1.bf16.xpose.msra.mxu0 0
    %1655 = vmatprep.subr.bf16.mxu0 0
    %1656 = vmatpush1.bf16.xpose.msra.mxu0 0
    %1657 = vmatprep.subr.bf16.mxu0 0
    %1658 = vmatpush1.bf16.xpose.msra.mxu0 0
    %1659 = vmatprep.subr.bf16.mxu0 0
    %1660 = vmatpush1.bf16.xpose.msra.mxu0 0
    %1661 = vmatprep.subr.bf16.mxu0 0
    %1662 = vmatpush1.bf16.xpose.msra.mxu0 0
    %1663 = vmatprep.subr.bf16.mxu0 0
    %1664 = vmatpush1.bf16.xpose.msra.mxu0 0
    %1665 = vmatprep.subr.bf16.mxu0 0
    %1666 = vmatpush1.bf16.xpose.msra.mxu0 0
    %1667 = vmatprep.subr.bf16.mxu0 0
    %1668 = vmatpush1.bf16.xpose.msra.mxu0 0
    %1669 = vmatprep.subr.bf16.mxu0 0
    %1670 = vmatpush1.bf16.xpose.msra.mxu0 0
    %1671 = vmatprep.subr.bf16.mxu0 0
    %1672 = vmatpush1.bf16.xpose.msra.mxu0 0
    %1673 = vmatprep.mubr.bf16.mxu0 0
    %1674 = vmatmul.mubr.bf16.gmra.mrb[0].mxu0 %v1639
    %v1675 = vpop.f32.mrb[0].mxu0
    %v1676 = vadd.f32 0.0, %v1675
    %v1677 = vpop.f32.mrb[0].mxu0
    %v1678 = vpop.f32.mrb[0].mxu0
    %v1679 = vpop.f32.mrb[0].mxu0
    %1680 = vdwg.mxu0
    %1681 = vrot.lane.b32.xlu0 %v1457, 112
    %v1682 = vpop.permute.xlu0 %1681
    %v1684 = vsel %vm240, %v1682, 0
    %1686 = vmatprep.subr.bf16.mxu0 0
    %1687 = vmatpush1.bf16.xpose.msra.mxu0 %v1684
    %1688 = vmatprep.subr.bf16.mxu0 0
    %1689 = vmatpush1.bf16.xpose.msra.mxu0 0
    %1690 = vmatprep.subr.bf16.mxu0 0
    %1691 = vmatpush1.bf16.xpose.msra.mxu0 0
    %1692 = vmatprep.subr.bf16.mxu0 0
    %1693 = vmatpush1.bf16.xpose.msra.mxu0 0
    %1694 = vmatprep.subr.bf16.mxu0 0
    %1695 = vmatpush1.bf16.xpose.msra.mxu0 0
    %1696 = vmatprep.subr.bf16.mxu0 0
    %1697 = vmatpush1.bf16.xpose.msra.mxu0 0
    %1698 = vmatprep.subr.bf16.mxu0 0
    %1699 = vmatpush1.bf16.xpose.msra.mxu0 0
    %1700 = vmatprep.subr.bf16.mxu0 0
    %1701 = vmatpush1.bf16.xpose.msra.mxu0 0
    %1702 = vmatprep.subr.bf16.mxu0 0
    %1703 = vmatpush1.bf16.xpose.msra.mxu0 0
    %1704 = vmatprep.subr.bf16.mxu0 0
    %1705 = vmatpush1.bf16.xpose.msra.mxu0 0
    %1706 = vmatprep.subr.bf16.mxu0 0
    %1707 = vmatpush1.bf16.xpose.msra.mxu0 0
    %1708 = vmatprep.subr.bf16.mxu0 0
    %1709 = vmatpush1.bf16.xpose.msra.mxu0 0
    %1710 = vmatprep.subr.bf16.mxu0 0
    %1711 = vmatpush1.bf16.xpose.msra.mxu0 0
    %1712 = vmatprep.subr.bf16.mxu0 0
    %1713 = vmatpush1.bf16.xpose.msra.mxu0 0
    %1714 = vmatprep.subr.bf16.mxu0 0
    %1715 = vmatpush1.bf16.xpose.msra.mxu0 0
    %1716 = vmatprep.subr.bf16.mxu0 0
    %1717 = vmatpush1.bf16.xpose.msra.mxu0 0
    %1718 = vmatprep.mubr.bf16.mxu0 0
    %1719 = vmatmul.mubr.bf16.gmra.mrb[0].mxu0 %v1684
    %v1720 = vpop.f32.mrb[0].mxu0
    %v1721 = vadd.f32 0.0, %v1720
    %v1722 = vpop.f32.mrb[0].mxu0
    %v1723 = vpop.f32.mrb[0].mxu0
    %v1724 = vpop.f32.mrb[0].mxu0
    %1725 = vdwg.mxu0
    %1726 = vrot.lane.b32.xlu0 %v1456, 104
    %v1727 = vpop.permute.xlu0 %1726
    %v1729 = vsel %vm240, %v1727, 0
    %1731 = vmatprep.subr.bf16.mxu0 0
    %1732 = vmatpush1.bf16.xpose.msra.mxu0 %v1729
    %1733 = vmatprep.subr.bf16.mxu0 0
    %1734 = vmatpush1.bf16.xpose.msra.mxu0 0
    %1735 = vmatprep.subr.bf16.mxu0 0
    %1736 = vmatpush1.bf16.xpose.msra.mxu0 0
    %1737 = vmatprep.subr.bf16.mxu0 0
    %1738 = vmatpush1.bf16.xpose.msra.mxu0 0
    %1739 = vmatprep.subr.bf16.mxu0 0
    %1740 = vmatpush1.bf16.xpose.msra.mxu0 0
    %1741 = vmatprep.subr.bf16.mxu0 0
    %1742 = vmatpush1.bf16.xpose.msra.mxu0 0
    %1743 = vmatprep.subr.bf16.mxu0 0
    %1744 = vmatpush1.bf16.xpose.msra.mxu0 0
    %1745 = vmatprep.subr.bf16.mxu0 0
    %1746 = vmatpush1.bf16.xpose.msra.mxu0 0
    %1747 = vmatprep.subr.bf16.mxu0 0
    %1748 = vmatpush1.bf16.xpose.msra.mxu0 0
    %1749 = vmatprep.subr.bf16.mxu0 0
    %1750 = vmatpush1.bf16.xpose.msra.mxu0 0
    %1751 = vmatprep.subr.bf16.mxu0 0
    %1752 = vmatpush1.bf16.xpose.msra.mxu0 0
    %1753 = vmatprep.subr.bf16.mxu0 0
    %1754 = vmatpush1.bf16.xpose.msra.mxu0 0
    %1755 = vmatprep.subr.bf16.mxu0 0
    %1756 = vmatpush1.bf16.xpose.msra.mxu0 0
    %1757 = vmatprep.subr.bf16.mxu0 0
    %1758 = vmatpush1.bf16.xpose.msra.mxu0 0
    %1759 = vmatprep.subr.bf16.mxu0 0
    %1760 = vmatpush1.bf16.xpose.msra.mxu0 0
    %1761 = vmatprep.subr.bf16.mxu0 0
    %1762 = vmatpush1.bf16.xpose.msra.mxu0 0
    %1763 = vmatprep.mubr.bf16.mxu0 0
    %1764 = vmatmul.mubr.bf16.gmra.mrb[0].mxu0 %v1729
    %v1765 = vpop.f32.mrb[0].mxu0
    %v1766 = vadd.f32 0.0, %v1765
    %v1767 = vpop.f32.mrb[0].mxu0
    %v1768 = vpop.f32.mrb[0].mxu0
    %v1769 = vpop.f32.mrb[0].mxu0
    %1770 = vdwg.mxu0
    %1771 = vrot.lane.b32.xlu0 %v1457, 104
    %v1772 = vpop.permute.xlu0 %1771
    %v1774 = vsel %vm240, %v1772, 0
    %1776 = vmatprep.subr.bf16.mxu0 0
    %1777 = vmatpush1.bf16.xpose.msra.mxu0 %v1774
    %1778 = vmatprep.subr.bf16.mxu0 0
    %1779 = vmatpush1.bf16.xpose.msra.mxu0 0
    %1780 = vmatprep.subr.bf16.mxu0 0
    %1781 = vmatpush1.bf16.xpose.msra.mxu0 0
    %1782 = vmatprep.subr.bf16.mxu0 0
    %1783 = vmatpush1.bf16.xpose.msra.mxu0 0
    %1784 = vmatprep.subr.bf16.mxu0 0
    %1785 = vmatpush1.bf16.xpose.msra.mxu0 0
    %1786 = vmatprep.subr.bf16.mxu0 0
    %1787 = vmatpush1.bf16.xpose.msra.mxu0 0
    %1788 = vmatprep.subr.bf16.mxu0 0
    %1789 = vmatpush1.bf16.xpose.msra.mxu0 0
    %1790 = vmatprep.subr.bf16.mxu0 0
    %1791 = vmatpush1.bf16.xpose.msra.mxu0 0
    %1792 = vmatprep.subr.bf16.mxu0 0
    %1793 = vmatpush1.bf16.xpose.msra.mxu0 0
    %1794 = vmatprep.subr.bf16.mxu0 0
    %1795 = vmatpush1.bf16.xpose.msra.mxu0 0
    %1796 = vmatprep.subr.bf16.mxu0 0
    %1797 = vmatpush1.bf16.xpose.msra.mxu0 0
    %1798 = vmatprep.subr.bf16.mxu0 0
    %1799 = vmatpush1.bf16.xpose.msra.mxu0 0
    %1800 = vmatprep.subr.bf16.mxu0 0
    %1801 = vmatpush1.bf16.xpose.msra.mxu0 0
    %1802 = vmatprep.subr.bf16.mxu0 0
    %1803 = vmatpush1.bf16.xpose.msra.mxu0 0
    %1804 = vmatprep.subr.bf16.mxu0 0
    %1805 = vmatpush1.bf16.xpose.msra.mxu0 0
    %1806 = vmatprep.subr.bf16.mxu0 0
    %1807 = vmatpush1.bf16.xpose.msra.mxu0 0
    %1808 = vmatprep.mubr.bf16.mxu0 0
    %1809 = vmatmul.mubr.bf16.gmra.mrb[0].mxu0 %v1774
    %v1810 = vpop.f32.mrb[0].mxu0
    %v1811 = vadd.f32 0.0, %v1810
    %v1812 = vpop.f32.mrb[0].mxu0
    %v1813 = vpop.f32.mrb[0].mxu0
    %v1814 = vpop.f32.mrb[0].mxu0
    %1815 = vdwg.mxu0
    %v1816 = vmul.f32 %v1496, 0.35355338
    %v1817 = vmul.f32 %v1585, 0.35355338
    %v1818 = vmul.f32 %v1676, 0.35355338
    %v1819 = vmul.f32 %v1766, 0.35355338
    %v1820 = vmul.f32 %v1539, 0.35355338
    %v1821 = vmul.f32 %v1631, 0.35355338
    %v1822 = vmul.f32 %v1721, 0.35355338
    %v1823 = vmul.f32 %v1811, 0.35355338
    %v1824 = vadd.f32 %v1816, %v612
    %v1825 = vadd.f32 %v1817, %v612
    %v1826 = vadd.f32 %v1818, %v612
    %v1827 = vadd.f32 %v1819, %v612
    %v1828 = vadd.f32 %v1820, %v616
    %v1829 = vadd.f32 %v1821, %v616
    %v1830 = vadd.f32 %v1822, %v616
    %v1831 = vadd.f32 %v1823, %v616
    %v1832 = vsel %vm240, %v1824, -inf
    %1833 = vmax.xlane.f32.xlu0 %v1832
    %v1834 = vpop.xlane.xlu0 %1833
    %v1835 = vsel %vm240, %v1825, -inf
    %1836 = vmax.xlane.f32.xlu0 %v1835
    %v1837 = vpop.xlane.xlu0 %1836
    %v1838 = vsel %vm240, %v1826, -inf
    %1839 = vmax.xlane.f32.xlu0 %v1838
    %v1840 = vpop.xlane.xlu0 %1839
    %v1841 = vsel %vm240, %v1827, -inf
    %1842 = vmax.xlane.f32.xlu0 %v1841
    %v1843 = vpop.xlane.xlu0 %1842
    %v1844 = vsel %vm240, %v1828, -inf
    %1845 = vmax.xlane.f32.xlu0 %v1844
    %v1846 = vpop.xlane.xlu0 %1845
    %v1847 = vsel %vm240, %v1829, -inf
    %1848 = vmax.xlane.f32.xlu0 %v1847
    %v1849 = vpop.xlane.xlu0 %1848
    %v1850 = vsel %vm240, %v1830, -inf
    %1851 = vmax.xlane.f32.xlu0 %v1850
    %v1852 = vpop.xlane.xlu0 %1851
    %v1853 = vsel %vm240, %v1831, -inf
    %1854 = vmax.xlane.f32.xlu0 %v1853
    %v1855 = vpop.xlane.xlu0 %1854
    %v1856 = vsub.f32 %v1824, %v1834
    %v1857 = vsub.f32 %v1825, %v1837
    %v1858 = vsub.f32 %v1826, %v1840
    %v1859 = vsub.f32 %v1827, %v1843
    %v1860 = vsub.f32 %v1828, %v1846
    %v1861 = vsub.f32 %v1829, %v1849
    %v1862 = vsub.f32 %v1830, %v1852
    %v1863 = vsub.f32 %v1831, %v1855
    %v1864 = vmul.f32 %v1856, 1.442695
    %v1865 = vpow.pop %v1864
    %v1866 = vmul.f32 %v1857, 1.442695
    %v1867 = vpow.pop %v1866
    %v1868 = vmul.f32 %v1858, 1.442695
    %v1869 = vpow.pop %v1868
    %v1870 = vmul.f32 %v1859, 1.442695
    %v1871 = vpow.pop %v1870
    %v1872 = vmul.f32 %v1860, 1.442695
    %v1873 = vpow.pop %v1872
    %v1874 = vmul.f32 %v1861, 1.442695
    %v1875 = vpow.pop %v1874
    %v1876 = vmul.f32 %v1862, 1.442695
    %v1877 = vpow.pop %v1876
    %v1878 = vmul.f32 %v1863, 1.442695
    %v1879 = vpow.pop %v1878
    %v1880 = vsel %vm240, %v1865, 0.0
    %1881 = vadd.xlane.f32.xlu0 %v1880
    %v1882 = vpop.xlane.xlu0 %1881
    %v1883 = vsel %vm240, %v1867, 0.0
    %1884 = vadd.xlane.f32.xlu0 %v1883
    %v1885 = vpop.xlane.xlu0 %1884
    %v1886 = vsel %vm240, %v1869, 0.0
    %1887 = vadd.xlane.f32.xlu0 %v1886
    %v1888 = vpop.xlane.xlu0 %1887
    %v1889 = vsel %vm240, %v1871, 0.0
    %1890 = vadd.xlane.f32.xlu0 %v1889
    %v1891 = vpop.xlane.xlu0 %1890
    %v1892 = vsel %vm240, %v1873, 0.0
    %1893 = vadd.xlane.f32.xlu0 %v1892
    %v1894 = vpop.xlane.xlu0 %1893
    %v1895 = vsel %vm240, %v1875, 0.0
    %1896 = vadd.xlane.f32.xlu0 %v1895
    %v1897 = vpop.xlane.xlu0 %1896
    %v1898 = vsel %vm240, %v1877, 0.0
    %1899 = vadd.xlane.f32.xlu0 %v1898
    %v1900 = vpop.xlane.xlu0 %1899
    %v1901 = vsel %vm240, %v1879, 0.0
    %1902 = vadd.xlane.f32.xlu0 %v1901
    %v1903 = vpop.xlane.xlu0 %1902
    %v1904 = vrcp.pop %v1882
    %v1905 = vrcp.pop %v1885
    %v1906 = vrcp.pop %v1888
    %v1907 = vrcp.pop %v1891
    %v1908 = vrcp.pop %v1894
    %v1909 = vrcp.pop %v1897
    %v1910 = vrcp.pop %v1900
    %v1911 = vrcp.pop %v1903
    %v1912 = vmul.f32 %v1865, %v1904
    %v1913 = vmul.f32 %v1867, %v1905
    %v1914 = vmul.f32 %v1869, %v1906
    %v1915 = vmul.f32 %v1871, %v1907
    %v1916 = vmul.f32 %v1873, %v1908
    %v1917 = vmul.f32 %v1875, %v1909
    %v1918 = vmul.f32 %v1877, %v1910
    %v1919 = vmul.f32 %v1879, %v1911
    %v1920 = vpack.c.bf16 %v1912, %v1912
    %v1921 = vpack.c.bf16 %v1916, %v1916
    %v1922 = vmul.f32 %v1450, %v153
    %v1923 = vmul.f32 %v1453, %v153
    %v1924 = vpack.c.bf16 %v1922, %v1922
    %v1925 = vpack.c.bf16 %v1923, %v1923
    %v1926 = vpack.c.bf16 %v1913, %v1913
    %v1927 = vpack.c.bf16 %v1917, %v1917
    %v1928 = vmul.f32 %v1450, %v158
    %v1929 = vmul.f32 %v1453, %v158
    %v1930 = vpack.c.bf16 %v1928, %v1928
    %v1931 = vpack.c.bf16 %v1929, %v1929
    %v1933 = vsel %vm240, %v1926, 0
    %v1936 = vsel %vm730, %v1930, 0
    %1938 = vmatprep.subr.bf16.mxu0 0
    %1939 = vmatpush1.bf16.msra.mxu0 %v1936
    %1940 = vmatprep.subr.bf16.mxu0 0
    %1941 = vmatpush1.bf16.msra.mxu0 0
    %1942 = vmatprep.subr.bf16.mxu0 0
    %1943 = vmatpush1.bf16.msra.mxu0 0
    %1944 = vmatprep.subr.bf16.mxu0 0
    %1945 = vmatpush1.bf16.msra.mxu0 0
    %1946 = vmatprep.subr.bf16.mxu0 0
    %1947 = vmatpush1.bf16.msra.mxu0 0
    %1948 = vmatprep.subr.bf16.mxu0 0
    %1949 = vmatpush1.bf16.msra.mxu0 0
    %1950 = vmatprep.subr.bf16.mxu0 0
    %1951 = vmatpush1.bf16.msra.mxu0 0
    %1952 = vmatprep.subr.bf16.mxu0 0
    %1953 = vmatpush1.bf16.msra.mxu0 0
    %1954 = vmatprep.subr.bf16.mxu0 0
    %1955 = vmatpush1.bf16.msra.mxu0 0
    %1956 = vmatprep.subr.bf16.mxu0 0
    %1957 = vmatpush1.bf16.msra.mxu0 0
    %1958 = vmatprep.subr.bf16.mxu0 0
    %1959 = vmatpush1.bf16.msra.mxu0 0
    %1960 = vmatprep.subr.bf16.mxu0 0
    %1961 = vmatpush1.bf16.msra.mxu0 0
    %1962 = vmatprep.subr.bf16.mxu0 0
    %1963 = vmatpush1.bf16.msra.mxu0 0
    %1964 = vmatprep.subr.bf16.mxu0 0
    %1965 = vmatpush1.bf16.msra.mxu0 0
    %1966 = vmatprep.subr.bf16.mxu0 0
    %1967 = vmatpush1.bf16.msra.mxu0 0
    %1968 = vmatprep.subr.bf16.mxu0 0
    %1969 = vmatpush1.bf16.msra.mxu0 0
    %1970 = vmatprep.mubr.bf16.mxu0 0
    %1971 = vmatmul.mubr.bf16.gmra.mrb[0].mxu0 %v1933
    %v1972 = vpop.f32.mrb[0].mxu0
    %v1973 = vadd.f32 0.0, %v1972
    %v1974 = vpop.f32.mrb[0].mxu0
    %v1975 = vpop.f32.mrb[0].mxu0
    %v1976 = vpop.f32.mrb[0].mxu0
    %1977 = vdwg.mxu0
    %v1979 = vsel %vm240, %v1927, 0
    %v1982 = vsel %vm730, %v1931, 0
    %1984 = vmatprep.subr.bf16.mxu0 0
    %1985 = vmatpush1.bf16.msra.mxu0 %v1982
    %1986 = vmatprep.subr.bf16.mxu0 0
    %1987 = vmatpush1.bf16.msra.mxu0 0
    %1988 = vmatprep.subr.bf16.mxu0 0
    %1989 = vmatpush1.bf16.msra.mxu0 0
    %1990 = vmatprep.subr.bf16.mxu0 0
    %1991 = vmatpush1.bf16.msra.mxu0 0
    %1992 = vmatprep.subr.bf16.mxu0 0
    %1993 = vmatpush1.bf16.msra.mxu0 0
    %1994 = vmatprep.subr.bf16.mxu0 0
    %1995 = vmatpush1.bf16.msra.mxu0 0
    %1996 = vmatprep.subr.bf16.mxu0 0
    %1997 = vmatpush1.bf16.msra.mxu0 0
    %1998 = vmatprep.subr.bf16.mxu0 0
    %1999 = vmatpush1.bf16.msra.mxu0 0
    %2000 = vmatprep.subr.bf16.mxu0 0
    %2001 = vmatpush1.bf16.msra.mxu0 0
    %2002 = vmatprep.subr.bf16.mxu0 0
    %2003 = vmatpush1.bf16.msra.mxu0 0
    %2004 = vmatprep.subr.bf16.mxu0 0
    %2005 = vmatpush1.bf16.msra.mxu0 0
    %2006 = vmatprep.subr.bf16.mxu0 0
    %2007 = vmatpush1.bf16.msra.mxu0 0
    %2008 = vmatprep.subr.bf16.mxu0 0
    %2009 = vmatpush1.bf16.msra.mxu0 0
    %2010 = vmatprep.subr.bf16.mxu0 0
    %2011 = vmatpush1.bf16.msra.mxu0 0
    %2012 = vmatprep.subr.bf16.mxu0 0
    %2013 = vmatpush1.bf16.msra.mxu0 0
    %2014 = vmatprep.subr.bf16.mxu0 0
    %2015 = vmatpush1.bf16.msra.mxu0 0
    %2016 = vmatprep.mubr.bf16.mxu0 0
    %2017 = vmatmul.mubr.bf16.gmra.mrb[0].mxu0 %v1979
    %v2018 = vpop.f32.mrb[0].mxu0
    %v2019 = vadd.f32 0.0, %v2018
    %v2020 = vpop.f32.mrb[0].mxu0
    %v2021 = vpop.f32.mrb[0].mxu0
    %v2022 = vpop.f32.mrb[0].mxu0
    %2023 = vdwg.mxu0
    %v2025 = vsel %vm240, %v1920, 0
    %v2028 = vsel %vm730, %v1924, 0
    %2030 = vmatprep.subr.bf16.mxu0 0
    %2031 = vmatpush1.bf16.msra.mxu0 %v2028
    %2032 = vmatprep.subr.bf16.mxu0 0
    %2033 = vmatpush1.bf16.msra.mxu0 0
    %2034 = vmatprep.subr.bf16.mxu0 0
    %2035 = vmatpush1.bf16.msra.mxu0 0
    %2036 = vmatprep.subr.bf16.mxu0 0
    %2037 = vmatpush1.bf16.msra.mxu0 0
    %2038 = vmatprep.subr.bf16.mxu0 0
    %2039 = vmatpush1.bf16.msra.mxu0 0
    %2040 = vmatprep.subr.bf16.mxu0 0
    %2041 = vmatpush1.bf16.msra.mxu0 0
    %2042 = vmatprep.subr.bf16.mxu0 0
    %2043 = vmatpush1.bf16.msra.mxu0 0
    %2044 = vmatprep.subr.bf16.mxu0 0
    %2045 = vmatpush1.bf16.msra.mxu0 0
    %2046 = vmatprep.subr.bf16.mxu0 0
    %2047 = vmatpush1.bf16.msra.mxu0 0
    %2048 = vmatprep.subr.bf16.mxu0 0
    %2049 = vmatpush1.bf16.msra.mxu0 0
    %2050 = vmatprep.subr.bf16.mxu0 0
    %2051 = vmatpush1.bf16.msra.mxu0 0
    %2052 = vmatprep.subr.bf16.mxu0 0
    %2053 = vmatpush1.bf16.msra.mxu0 0
    %2054 = vmatprep.subr.bf16.mxu0 0
    %2055 = vmatpush1.bf16.msra.mxu0 0
    %2056 = vmatprep.subr.bf16.mxu0 0
    %2057 = vmatpush1.bf16.msra.mxu0 0
    %2058 = vmatprep.subr.bf16.mxu0 0
    %2059 = vmatpush1.bf16.msra.mxu0 0
    %2060 = vmatprep.subr.bf16.mxu0 0
    %2061 = vmatpush1.bf16.msra.mxu0 0
    %2062 = vmatprep.mubr.bf16.mxu0 0
    %2063 = vmatmul.mubr.bf16.gmra.mrb[0].mxu0 %v2025
    %v2064 = vpop.f32.mrb[0].mxu0
    %v2065 = vadd.f32 %v1973, %v2064
    %v2066 = vpop.f32.mrb[0].mxu0
    %v2067 = vpop.f32.mrb[0].mxu0
    %v2068 = vpop.f32.mrb[0].mxu0
    %2069 = vdwg.mxu0
    %v2071 = vsel %vm240, %v1921, 0
    %v2074 = vsel %vm730, %v1925, 0
    %2076 = vmatprep.subr.bf16.mxu0 0
    %2077 = vmatpush1.bf16.msra.mxu0 %v2074
    %2078 = vmatprep.subr.bf16.mxu0 0
    %2079 = vmatpush1.bf16.msra.mxu0 0
    %2080 = vmatprep.subr.bf16.mxu0 0
    %2081 = vmatpush1.bf16.msra.mxu0 0
    %2082 = vmatprep.subr.bf16.mxu0 0
    %2083 = vmatpush1.bf16.msra.mxu0 0
    %2084 = vmatprep.subr.bf16.mxu0 0
    %2085 = vmatpush1.bf16.msra.mxu0 0
    %2086 = vmatprep.subr.bf16.mxu0 0
    %2087 = vmatpush1.bf16.msra.mxu0 0
    %2088 = vmatprep.subr.bf16.mxu0 0
    %2089 = vmatpush1.bf16.msra.mxu0 0
    %2090 = vmatprep.subr.bf16.mxu0 0
    %2091 = vmatpush1.bf16.msra.mxu0 0
    %2092 = vmatprep.subr.bf16.mxu0 0
    %2093 = vmatpush1.bf16.msra.mxu0 0
    %2094 = vmatprep.subr.bf16.mxu0 0
    %2095 = vmatpush1.bf16.msra.mxu0 0
    %2096 = vmatprep.subr.bf16.mxu0 0
    %2097 = vmatpush1.bf16.msra.mxu0 0
    %2098 = vmatprep.subr.bf16.mxu0 0
    %2099 = vmatpush1.bf16.msra.mxu0 0
    %2100 = vmatprep.subr.bf16.mxu0 0
    %2101 = vmatpush1.bf16.msra.mxu0 0
    %2102 = vmatprep.subr.bf16.mxu0 0
    %2103 = vmatpush1.bf16.msra.mxu0 0
    %2104 = vmatprep.subr.bf16.mxu0 0
    %2105 = vmatpush1.bf16.msra.mxu0 0
    %2106 = vmatprep.subr.bf16.mxu0 0
    %2107 = vmatpush1.bf16.msra.mxu0 0
    %2108 = vmatprep.mubr.bf16.mxu0 0
    %2109 = vmatmul.mubr.bf16.gmra.mrb[0].mxu0 %v2071
    %v2110 = vpop.f32.mrb[0].mxu0
    %v2111 = vadd.f32 %v2019, %v2110
    %v2112 = vpop.f32.mrb[0].mxu0
    %v2113 = vpop.f32.mrb[0].mxu0
    %v2114 = vpop.f32.mrb[0].mxu0
    %2115 = vdwg.mxu0
    %v2116 = vpack.c.bf16 %v1914, %v1914
    %v2117 = vpack.c.bf16 %v1918, %v1918
    %v2118 = vmul.f32 %v1450, %v163
    %v2119 = vmul.f32 %v1453, %v163
    %v2120 = vpack.c.bf16 %v2118, %v2118
    %v2121 = vpack.c.bf16 %v2119, %v2119
    %v2123 = vsel %vm240, %v2116, 0
    %v2126 = vsel %vm730, %v2120, 0
    %2128 = vmatprep.subr.bf16.mxu0 0
    %2129 = vmatpush1.bf16.msra.mxu0 %v2126
    %2130 = vmatprep.subr.bf16.mxu0 0
    %2131 = vmatpush1.bf16.msra.mxu0 0
    %2132 = vmatprep.subr.bf16.mxu0 0
    %2133 = vmatpush1.bf16.msra.mxu0 0
    %2134 = vmatprep.subr.bf16.mxu0 0
    %2135 = vmatpush1.bf16.msra.mxu0 0
    %2136 = vmatprep.subr.bf16.mxu0 0
    %2137 = vmatpush1.bf16.msra.mxu0 0
    %2138 = vmatprep.subr.bf16.mxu0 0
    %2139 = vmatpush1.bf16.msra.mxu0 0
    %2140 = vmatprep.subr.bf16.mxu0 0
    %2141 = vmatpush1.bf16.msra.mxu0 0
    %2142 = vmatprep.subr.bf16.mxu0 0
    %2143 = vmatpush1.bf16.msra.mxu0 0
    %2144 = vmatprep.subr.bf16.mxu0 0
    %2145 = vmatpush1.bf16.msra.mxu0 0
    %2146 = vmatprep.subr.bf16.mxu0 0
    %2147 = vmatpush1.bf16.msra.mxu0 0
    %2148 = vmatprep.subr.bf16.mxu0 0
    %2149 = vmatpush1.bf16.msra.mxu0 0
    %2150 = vmatprep.subr.bf16.mxu0 0
    %2151 = vmatpush1.bf16.msra.mxu0 0
    %2152 = vmatprep.subr.bf16.mxu0 0
    %2153 = vmatpush1.bf16.msra.mxu0 0
    %2154 = vmatprep.subr.bf16.mxu0 0
    %2155 = vmatpush1.bf16.msra.mxu0 0
    %2156 = vmatprep.subr.bf16.mxu0 0
    %2157 = vmatpush1.bf16.msra.mxu0 0
    %2158 = vmatprep.subr.bf16.mxu0 0
    %2159 = vmatpush1.bf16.msra.mxu0 0
    %2160 = vmatprep.mubr.bf16.mxu0 0
    %2161 = vmatmul.mubr.bf16.gmra.mrb[0].mxu0 %v2123
    %v2162 = vpop.f32.mrb[0].mxu0
    %v2163 = vadd.f32 0.0, %v2162
    %v2164 = vpop.f32.mrb[0].mxu0
    %v2165 = vpop.f32.mrb[0].mxu0
    %v2166 = vpop.f32.mrb[0].mxu0
    %2167 = vdwg.mxu0
    %v2169 = vsel %vm240, %v2117, 0
    %v2172 = vsel %vm730, %v2121, 0
    %2174 = vmatprep.subr.bf16.mxu0 0
    %2175 = vmatpush1.bf16.msra.mxu0 %v2172
    %2176 = vmatprep.subr.bf16.mxu0 0
    %2177 = vmatpush1.bf16.msra.mxu0 0
    %2178 = vmatprep.subr.bf16.mxu0 0
    %2179 = vmatpush1.bf16.msra.mxu0 0
    %2180 = vmatprep.subr.bf16.mxu0 0
    %2181 = vmatpush1.bf16.msra.mxu0 0
    %2182 = vmatprep.subr.bf16.mxu0 0
    %2183 = vmatpush1.bf16.msra.mxu0 0
    %2184 = vmatprep.subr.bf16.mxu0 0
    %2185 = vmatpush1.bf16.msra.mxu0 0
    %2186 = vmatprep.subr.bf16.mxu0 0
    %2187 = vmatpush1.bf16.msra.mxu0 0
    %2188 = vmatprep.subr.bf16.mxu0 0
    %2189 = vmatpush1.bf16.msra.mxu0 0
    %2190 = vmatprep.subr.bf16.mxu0 0
    %2191 = vmatpush1.bf16.msra.mxu0 0
    %2192 = vmatprep.subr.bf16.mxu0 0
    %2193 = vmatpush1.bf16.msra.mxu0 0
    %2194 = vmatprep.subr.bf16.mxu0 0
    %2195 = vmatpush1.bf16.msra.mxu0 0
    %2196 = vmatprep.subr.bf16.mxu0 0
    %2197 = vmatpush1.bf16.msra.mxu0 0
    %2198 = vmatprep.subr.bf16.mxu0 0
    %2199 = vmatpush1.bf16.msra.mxu0 0
    %2200 = vmatprep.subr.bf16.mxu0 0
    %2201 = vmatpush1.bf16.msra.mxu0 0
    %2202 = vmatprep.subr.bf16.mxu0 0
    %2203 = vmatpush1.bf16.msra.mxu0 0
    %2204 = vmatprep.subr.bf16.mxu0 0
    %2205 = vmatpush1.bf16.msra.mxu0 0
    %2206 = vmatprep.mubr.bf16.mxu0 0
    %2207 = vmatmul.mubr.bf16.gmra.mrb[0].mxu0 %v2169
    %v2208 = vpop.f32.mrb[0].mxu0
    %v2209 = vadd.f32 0.0, %v2208
    %v2210 = vpop.f32.mrb[0].mxu0
    %v2211 = vpop.f32.mrb[0].mxu0
    %v2212 = vpop.f32.mrb[0].mxu0
    %2213 = vdwg.mxu0
    %v2214 = vadd.f32 %v2065, %v2163
    %v2215 = vadd.f32 %v2111, %v2209
    %v2216 = vpack.c.bf16 %v1915, %v1915
    %v2217 = vpack.c.bf16 %v1919, %v1919
    %v2218 = vmul.f32 %v1450, %v168
    %v2219 = vmul.f32 %v1453, %v168
    %v2220 = vpack.c.bf16 %v2218, %v2218
    %v2221 = vpack.c.bf16 %v2219, %v2219
    %v2223 = vsel %vm240, %v2216, 0
    %v2226 = vsel %vm730, %v2220, 0
    %2228 = vmatprep.subr.bf16.mxu0 0
    %2229 = vmatpush1.bf16.msra.mxu0 %v2226
    %2230 = vmatprep.subr.bf16.mxu0 0
    %2231 = vmatpush1.bf16.msra.mxu0 0
    %2232 = vmatprep.subr.bf16.mxu0 0
    %2233 = vmatpush1.bf16.msra.mxu0 0
    %2234 = vmatprep.subr.bf16.mxu0 0
    %2235 = vmatpush1.bf16.msra.mxu0 0
    %2236 = vmatprep.subr.bf16.mxu0 0
    %2237 = vmatpush1.bf16.msra.mxu0 0
    %2238 = vmatprep.subr.bf16.mxu0 0
    %2239 = vmatpush1.bf16.msra.mxu0 0
    %2240 = vmatprep.subr.bf16.mxu0 0
    %2241 = vmatpush1.bf16.msra.mxu0 0
    %2242 = vmatprep.subr.bf16.mxu0 0
    %2243 = vmatpush1.bf16.msra.mxu0 0
    %2244 = vmatprep.subr.bf16.mxu0 0
    %2245 = vmatpush1.bf16.msra.mxu0 0
    %2246 = vmatprep.subr.bf16.mxu0 0
    %2247 = vmatpush1.bf16.msra.mxu0 0
    %2248 = vmatprep.subr.bf16.mxu0 0
    %2249 = vmatpush1.bf16.msra.mxu0 0
    %2250 = vmatprep.subr.bf16.mxu0 0
    %2251 = vmatpush1.bf16.msra.mxu0 0
    %2252 = vmatprep.subr.bf16.mxu0 0
    %2253 = vmatpush1.bf16.msra.mxu0 0
    %2254 = vmatprep.subr.bf16.mxu0 0
    %2255 = vmatpush1.bf16.msra.mxu0 0
    %2256 = vmatprep.subr.bf16.mxu0 0
    %2257 = vmatpush1.bf16.msra.mxu0 0
    %2258 = vmatprep.subr.bf16.mxu0 0
    %2259 = vmatpush1.bf16.msra.mxu0 0
    %2260 = vmatprep.mubr.bf16.mxu0 0
    %2261 = vmatmul.mubr.bf16.gmra.mrb[0].mxu0 %v2223
    %v2262 = vpop.f32.mrb[0].mxu0
    %v2263 = vadd.f32 0.0, %v2262
    %v2264 = vpop.f32.mrb[0].mxu0
    %v2265 = vpop.f32.mrb[0].mxu0
    %v2266 = vpop.f32.mrb[0].mxu0
    %2267 = vdwg.mxu0
    %v2269 = vsel %vm240, %v2217, 0
    %v2272 = vsel %vm730, %v2221, 0
    %2274 = vmatprep.subr.bf16.mxu0 0
    %2275 = vmatpush1.bf16.msra.mxu0 %v2272
    %2276 = vmatprep.subr.bf16.mxu0 0
    %2277 = vmatpush1.bf16.msra.mxu0 0
    %2278 = vmatprep.subr.bf16.mxu0 0
    %2279 = vmatpush1.bf16.msra.mxu0 0
    %2280 = vmatprep.subr.bf16.mxu0 0
    %2281 = vmatpush1.bf16.msra.mxu0 0
    %2282 = vmatprep.subr.bf16.mxu0 0
    %2283 = vmatpush1.bf16.msra.mxu0 0
    %2284 = vmatprep.subr.bf16.mxu0 0
    %2285 = vmatpush1.bf16.msra.mxu0 0
    %2286 = vmatprep.subr.bf16.mxu0 0
    %2287 = vmatpush1.bf16.msra.mxu0 0
    %2288 = vmatprep.subr.bf16.mxu0 0
    %2289 = vmatpush1.bf16.msra.mxu0 0
    %2290 = vmatprep.subr.bf16.mxu0 0
    %2291 = vmatpush1.bf16.msra.mxu0 0
    %2292 = vmatprep.subr.bf16.mxu0 0
    %2293 = vmatpush1.bf16.msra.mxu0 0
    %2294 = vmatprep.subr.bf16.mxu0 0
    %2295 = vmatpush1.bf16.msra.mxu0 0
    %2296 = vmatprep.subr.bf16.mxu0 0
    %2297 = vmatpush1.bf16.msra.mxu0 0
    %2298 = vmatprep.subr.bf16.mxu0 0
    %2299 = vmatpush1.bf16.msra.mxu0 0
    %2300 = vmatprep.subr.bf16.mxu0 0
    %2301 = vmatpush1.bf16.msra.mxu0 0
    %2302 = vmatprep.subr.bf16.mxu0 0
    %2303 = vmatpush1.bf16.msra.mxu0 0
    %2304 = vmatprep.subr.bf16.mxu0 0
    %2305 = vmatpush1.bf16.msra.mxu0 0
    %2306 = vmatprep.mubr.bf16.mxu0 0
    %2307 = vmatmul.mubr.bf16.gmra.mrb[0].mxu0 %v2269
    %v2308 = vpop.f32.mrb[0].mxu0
    %v2309 = vadd.f32 0.0, %v2308
    %v2310 = vpop.f32.mrb[0].mxu0
    %v2311 = vpop.f32.mrb[0].mxu0
    %v2312 = vpop.f32.mrb[0].mxu0
    %2313 = vdwg.mxu0
    %v2314 = vadd.f32 %v2214, %v2263
    %v2315 = vadd.f32 %v2215, %v2309
    %v2316 = vpack.c.bf16 %v2315, %v2314
    %v2317 = vlaneseq
    %v2318 = vshrl.u32 %v2317, 7
    %v2319 = vsub.s32 1, %v2318
    %v2320 = vrot.slane %v1406, %v2319
    %2323 = vrot.lane.b32.xlu0 %v1390, 96
    %v2324 = vpop.permute.xlu0 %2323
    %2325 = vrot.lane.b32.xlu0 %v1391, 96
    %v2326 = vpop.permute.xlu0 %2325
    %v2330 = vsel %vm193, %v2316, 0
    %2332 = vmatprep.subr.bf16.mxu0 0
    %2333 = vmatpush1.bf16.msra.mxu0 %v2324
    %2334 = vmatprep.subr.bf16.mxu0 0
    %2335 = vmatpush1.bf16.msra.mxu0 %v2326
    %2336 = vmatprep.subr.bf16.mxu0 0
    %2337 = vmatpush1.bf16.msra.mxu0 0
    %2338 = vmatprep.subr.bf16.mxu0 0
    %2339 = vmatpush1.bf16.msra.mxu0 0
    %2340 = vmatprep.subr.bf16.mxu0 0
    %2341 = vmatpush1.bf16.msra.mxu0 0
    %2342 = vmatprep.subr.bf16.mxu0 0
    %2343 = vmatpush1.bf16.msra.mxu0 0
    %2344 = vmatprep.subr.bf16.mxu0 0
    %2345 = vmatpush1.bf16.msra.mxu0 0
    %2346 = vmatprep.subr.bf16.mxu0 0
    %2347 = vmatpush1.bf16.msra.mxu0 0
    %2348 = vmatprep.subr.bf16.mxu0 0
    %2349 = vmatpush1.bf16.msra.mxu0 0
    %2350 = vmatprep.subr.bf16.mxu0 0
    %2351 = vmatpush1.bf16.msra.mxu0 0
    %2352 = vmatprep.subr.bf16.mxu0 0
    %2353 = vmatpush1.bf16.msra.mxu0 0
    %2354 = vmatprep.subr.bf16.mxu0 0
    %2355 = vmatpush1.bf16.msra.mxu0 0
    %2356 = vmatprep.subr.bf16.mxu0 0
    %2357 = vmatpush1.bf16.msra.mxu0 0
    %2358 = vmatprep.subr.bf16.mxu0 0
    %2359 = vmatpush1.bf16.msra.mxu0 0
    %2360 = vmatprep.subr.bf16.mxu0 0
    %2361 = vmatpush1.bf16.msra.mxu0 0
    %2362 = vmatprep.subr.bf16.mxu0 0
    %2363 = vmatpush1.bf16.msra.mxu0 0
    %2364 = vmatprep.mubr.bf16.mxu0 0
    %2365 = vmatmul.mubr.bf16.gmra.mrb[0].mxu0 %v2330
    %v2366 = vpop.f32.mrb[0].mxu0
    %v2367 = vadd.f32 %v2320, %v2366
    %v2368 = vpop.f32.mrb[0].mxu0
    %v2369 = vpop.f32.mrb[0].mxu0
    %v2370 = vadd.f32 %v2320, %v2369
    %v2371 = vpop.f32.mrb[0].mxu0
    %2372 = vdwg.mxu0
    %v2373 = vadd.f32 %v1383, %v2367
    %v2374 = vadd.f32 %v1384, %v2370
    %v2375 = vsel %vm193, %v2373, 0.0
    %2376 = vadd.xlane.f32.xlu0 %v2375
    %v2377 = vpop.xlane.xlu0 %2376
    %v2378 = vsel %vm193, %v2374, 0.0
    %2379 = vadd.xlane.f32.xlu0 %v2378
    %v2380 = vpop.xlane.xlu0 %2379
    %v2381 = vmul.f32 %v2377, %v1177
    %v2382 = vmul.f32 %v2380, %v1177
    %v2383 = vsub.f32 %v2373, %v2381
    %v2384 = vsub.f32 %v2374, %v2382
    %v2385 = vmul.f32 %v2383, %v2383
    %v2386 = vmul.f32 %v2384, %v2384
    %v2387 = vsel %vm193, %v2385, 0.0
    %2388 = vadd.xlane.f32.xlu0 %v2387
    %v2389 = vpop.xlane.xlu0 %2388
    %v2390 = vsel %vm193, %v2386, 0.0
    %2391 = vadd.xlane.f32.xlu0 %v2390
    %v2392 = vpop.xlane.xlu0 %2391
    %v2393 = vmul.f32 %v2389, 0.032258064
    %v2394 = vmul.f32 %v2392, 0.032258064
    %v2395 = vrsqrt.pop %v2393
    %v2396 = vmul.f32 %v2393, %v2395
    %vm2397 = vcmp.eq.f32.partialorder %v2393, inf
    %v2398 = vsel %vm2397, %v2393, %v2396
    %vm2399 = vcmp.eq.f32.partialorder %v2393, 0.0
    %v2400 = vand.u32 %v2393, 2147483648
    %v2401 = vsel %vm2399, %v2400, %v2398
    %v2402 = vrsqrt.pop %v2394
    %v2403 = vmul.f32 %v2394, %v2402
    %vm2404 = vcmp.eq.f32.partialorder %v2394, inf
    %v2405 = vsel %vm2404, %v2394, %v2403
    %vm2406 = vcmp.eq.f32.partialorder %v2394, 0.0
    %v2407 = vand.u32 %v2394, 2147483648
    %v2408 = vsel %vm2406, %v2407, %v2405
    %v2409 = vadd.f32 %v2401, 1e-06
    %v2410 = vadd.f32 %v2408, 1e-06
    %v2411 = vrcp.pop %v2409
    %v2412 = vmul.f32 %v2383, %v2411
    %v2413 = vrcp.pop %v2410
    %v2414 = vmul.f32 %v2384, %v2413
    %v2415 = vlaneseq
    %v2416 = vshrl.u32 %v2415, 7
    %v2417 = vsub.s32 3, %v2416
    %v2418 = vrot.slane %v1406, %v2417
    %v2419 = vmul.f32 %v2418, %v2412
    %v2420 = vmul.f32 %v2418, %v2414
    %v2421 = vlaneseq
    %v2422 = vshrl.u32 %v2421, 7
    %v2423 = vsub.s32 4, %v2422
    %v2424 = vrot.slane %v1406, %v2423
    %v2425 = vadd.f32 %v2419, %v2424
    %v2426 = vadd.f32 %v2420, %v2424
    %v2427 = vpack.c.bf16 %v2426, %v2425
    %v2428 = vlaneseq
    %v2429 = vshrl.u32 %v2428, 7
    %v2430 = vsub.s32 7, %v2429
    %v2431 = vrot.slane %v1406, %v2430
    %2432 = vrot.lane.b32.xlu0 %v1390, 64
    %v2433 = vpop.permute.xlu0 %2432
    %2434 = vrot.lane.b32.xlu0 %v1391, 64
    %v2435 = vpop.permute.xlu0 %2434
    %v2439 = vsel %vm193, %v2427, 0
    %2441 = vmatprep.subr.bf16.mxu0 0
    %2442 = vmatpush1.bf16.msra.mxu0 %v2433
    %2443 = vmatprep.subr.bf16.mxu0 0
    %2444 = vmatpush1.bf16.msra.mxu0 %v2435
    %2445 = vmatprep.subr.bf16.mxu0 0
    %2446 = vmatpush1.bf16.msra.mxu0 0
    %2447 = vmatprep.subr.bf16.mxu0 0
    %2448 = vmatpush1.bf16.msra.mxu0 0
    %2449 = vmatprep.subr.bf16.mxu0 0
    %2450 = vmatpush1.bf16.msra.mxu0 0
    %2451 = vmatprep.subr.bf16.mxu0 0
    %2452 = vmatpush1.bf16.msra.mxu0 0
    %2453 = vmatprep.subr.bf16.mxu0 0
    %2454 = vmatpush1.bf16.msra.mxu0 0
    %2455 = vmatprep.subr.bf16.mxu0 0
    %2456 = vmatpush1.bf16.msra.mxu0 0
    %2457 = vmatprep.subr.bf16.mxu0 0
    %2458 = vmatpush1.bf16.msra.mxu0 0
    %2459 = vmatprep.subr.bf16.mxu0 0
    %2460 = vmatpush1.bf16.msra.mxu0 0
    %2461 = vmatprep.subr.bf16.mxu0 0
    %2462 = vmatpush1.bf16.msra.mxu0 0
    %2463 = vmatprep.subr.bf16.mxu0 0
    %2464 = vmatpush1.bf16.msra.mxu0 0
    %2465 = vmatprep.subr.bf16.mxu0 0
    %2466 = vmatpush1.bf16.msra.mxu0 0
    %2467 = vmatprep.subr.bf16.mxu0 0
    %2468 = vmatpush1.bf16.msra.mxu0 0
    %2469 = vmatprep.subr.bf16.mxu0 0
    %2470 = vmatpush1.bf16.msra.mxu0 0
    %2471 = vmatprep.subr.bf16.mxu0 0
    %2472 = vmatpush1.bf16.msra.mxu0 0
    %2473 = vmatprep.mubr.bf16.mxu0 0
    %2474 = vmatmul.mubr.bf16.gmra.mrb[0].mxu0 %v2439
    %v2475 = vpop.f32.mrb[0].mxu0
    %v2476 = vadd.f32 %v2431, %v2475
    %v2477 = vpop.f32.mrb[0].mxu0
    %v2478 = vpop.f32.mrb[0].mxu0
    %v2479 = vadd.f32 %v2431, %v2478
    %v2480 = vpop.f32.mrb[0].mxu0
    %2481 = vdwg.mxu0
    %v2482 = vmax.f32 %v2476, 0.0
    %v2483 = vmax.f32 %v2479, 0.0
    %v2484 = vpack.c.bf16 %v2483, %v2482
    %v2485 = vlaneseq
    %v2486 = vshrl.u32 %v2485, 7
    %v2487 = vsub.s32 2, %v2486
    %v2488 = vrot.slane %v1406, %v2487
    %v2490 = vsel %vm1286, %v2484, 0
    %2492 = vmatprep.subr.bf16.mxu0 0
    %2493 = vmatpush1.bf16.msra.mxu0 %v1401
    %2494 = vmatprep.subr.bf16.mxu0 0
    %2495 = vmatpush1.bf16.msra.mxu0 %v1402
    %2496 = vmatprep.subr.bf16.mxu0 0
    %2497 = vmatpush1.bf16.msra.mxu0 %v1403
    %2498 = vmatprep.subr.bf16.mxu0 0
    %2499 = vmatpush1.bf16.msra.mxu0 %v1404
    %2500 = vmatprep.subr.bf16.mxu0 0
    %2501 = vmatpush1.bf16.msra.mxu0 0
    %2502 = vmatprep.subr.bf16.mxu0 0
    %2503 = vmatpush1.bf16.msra.mxu0 0
    %2504 = vmatprep.subr.bf16.mxu0 0
    %2505 = vmatpush1.bf16.msra.mxu0 0
    %2506 = vmatprep.subr.bf16.mxu0 0
    %2507 = vmatpush1.bf16.msra.mxu0 0
    %2508 = vmatprep.subr.bf16.mxu0 0
    %2509 = vmatpush1.bf16.msra.mxu0 0
    %2510 = vmatprep.subr.bf16.mxu0 0
    %2511 = vmatpush1.bf16.msra.mxu0 0
    %2512 = vmatprep.subr.bf16.mxu0 0
    %2513 = vmatpush1.bf16.msra.mxu0 0
    %2514 = vmatprep.subr.bf16.mxu0 0
    %2515 = vmatpush1.bf16.msra.mxu0 0
    %2516 = vmatprep.subr.bf16.mxu0 0
    %2517 = vmatpush1.bf16.msra.mxu0 0
    %2518 = vmatprep.subr.bf16.mxu0 0
    %2519 = vmatpush1.bf16.msra.mxu0 0
    %2520 = vmatprep.subr.bf16.mxu0 0
    %2521 = vmatpush1.bf16.msra.mxu0 0
    %2522 = vmatprep.subr.bf16.mxu0 0
    %2523 = vmatpush1.bf16.msra.mxu0 0
    %2524 = vmatprep.mubr.bf16.mxu0 0
    %2525 = vmatmul.mubr.bf16.gmra.mrb[0].mxu0 %v2490
    %v2526 = vpop.f32.mrb[0].mxu0
    %v2527 = vadd.f32 %v2488, %v2526
    %v2528 = vpop.f32.mrb[0].mxu0
    %v2529 = vpop.f32.mrb[0].mxu0
    %v2530 = vadd.f32 %v2488, %v2529
    %v2531 = vpop.f32.mrb[0].mxu0
    %2532 = vdwg.mxu0
    %v2533 = vadd.f32 %v2425, %v2527
    %v2534 = vadd.f32 %v2426, %v2530
    %v2535 = vsel %vm193, %v2533, 0.0
    %2536 = vadd.xlane.f32.xlu0 %v2535
    %v2537 = vpop.xlane.xlu0 %2536
    %v2538 = vsel %vm193, %v2534, 0.0
    %2539 = vadd.xlane.f32.xlu0 %v2538
    %v2540 = vpop.xlane.xlu0 %2539
    %v2541 = vmul.f32 %v2537, %v1177
    %v2542 = vmul.f32 %v2540, %v1177
    %v2543 = vsub.f32 %v2533, %v2541
    %v2544 = vsub.f32 %v2534, %v2542
    %v2545 = vmul.f32 %v2543, %v2543
    %v2546 = vmul.f32 %v2544, %v2544
    %v2547 = vsel %vm193, %v2545, 0.0
    %2548 = vadd.xlane.f32.xlu0 %v2547
    %v2549 = vpop.xlane.xlu0 %2548
    %v2550 = vsel %vm193, %v2546, 0.0
    %2551 = vadd.xlane.f32.xlu0 %v2550
    %v2552 = vpop.xlane.xlu0 %2551
    %v2553 = vmul.f32 %v2549, 0.032258064
    %v2554 = vmul.f32 %v2552, 0.032258064
    %v2555 = vrsqrt.pop %v2553
    %v2556 = vmul.f32 %v2553, %v2555
    %vm2557 = vcmp.eq.f32.partialorder %v2553, inf
    %v2558 = vsel %vm2557, %v2553, %v2556
    %vm2559 = vcmp.eq.f32.partialorder %v2553, 0.0
    %v2560 = vand.u32 %v2553, 2147483648
    %v2561 = vsel %vm2559, %v2560, %v2558
    %v2562 = vrsqrt.pop %v2554
    %v2563 = vmul.f32 %v2554, %v2562
    %vm2564 = vcmp.eq.f32.partialorder %v2554, inf
    %v2565 = vsel %vm2564, %v2554, %v2563
    %vm2566 = vcmp.eq.f32.partialorder %v2554, 0.0
    %v2567 = vand.u32 %v2554, 2147483648
    %v2568 = vsel %vm2566, %v2567, %v2565
    %v2569 = vadd.f32 %v2561, 1e-06
    %v2570 = vadd.f32 %v2568, 1e-06
    %v2571 = vrcp.pop %v2569
    %v2572 = vmul.f32 %v2543, %v2571
    %v2573 = vrcp.pop %v2570
    %v2574 = vmul.f32 %v2544, %v2573
    %v2575 = vlaneseq
    %v2576 = vshrl.u32 %v2575, 7
    %v2577 = vsub.s32 5, %v2576
    %v2578 = vrot.slane %v1406, %v2577
    %v2579 = vmul.f32 %v2578, %v2572
    %v2580 = vmul.f32 %v2578, %v2574
    %v2581 = vlaneseq
    %v2582 = vshrl.u32 %v2581, 7
    %v2583 = vsub.s32 6, %v2582
    %v2584 = vrot.slane %v1406, %v2583
    %v2585 = vadd.f32 %v2579, %v2584
    %v2586 = vadd.f32 %v2580, %v2584
    %v2587 = vld [vmem:[%s7] sm:$0x1]
    %v2588 = vld [vmem:[%s7 + $0x1] sm:$0x1]
    %v2589 = vsel %vm193, %v2585, 0.0
    %2590 = vadd.xlane.f32.xlu0 %v2589
    %v2591 = vpop.xlane.xlu0 %2590
    %v2592 = vsel %vm193, %v2586, 0.0
    %2593 = vadd.xlane.f32.xlu0 %v2592
    %v2594 = vpop.xlane.xlu0 %2593
    %v2595 = vmul.f32 %v2591, %v1177
    %v2596 = vmul.f32 %v2594, %v1177
    %v2597 = vsub.f32 %v2585, %v2595
    %v2598 = vsub.f32 %v2586, %v2596
    %v2599 = vmul.f32 %v2597, %v2597
    %v2600 = vmul.f32 %v2598, %v2598
    %v2601 = vsel %vm193, %v2599, 0.0
    %2602 = vadd.xlane.f32.xlu0 %v2601
    %v2603 = vpop.xlane.xlu0 %2602
    %v2604 = vsel %vm193, %v2600, 0.0
    %2605 = vadd.xlane.f32.xlu0 %v2604
    %v2606 = vpop.xlane.xlu0 %2605
    %v2607 = vmul.f32 %v2603, 0.032258064
    %v2608 = vmul.f32 %v2606, 0.032258064
    %v2609 = vrsqrt.pop %v2607
    %v2610 = vmul.f32 %v2607, %v2609
    %vm2611 = vcmp.eq.f32.partialorder %v2607, inf
    %v2612 = vsel %vm2611, %v2607, %v2610
    %vm2613 = vcmp.eq.f32.partialorder %v2607, 0.0
    %v2614 = vand.u32 %v2607, 2147483648
    %v2615 = vsel %vm2613, %v2614, %v2612
    %v2616 = vrsqrt.pop %v2608
    %v2617 = vmul.f32 %v2608, %v2616
    %vm2618 = vcmp.eq.f32.partialorder %v2608, inf
    %v2619 = vsel %vm2618, %v2608, %v2617
    %vm2620 = vcmp.eq.f32.partialorder %v2608, 0.0
    %v2621 = vand.u32 %v2608, 2147483648
    %v2622 = vsel %vm2620, %v2621, %v2619
    %v2623 = vadd.f32 %v2615, 1e-06
    %v2624 = vadd.f32 %v2622, 1e-06
    %v2625 = vrcp.pop %v2623
    %v2626 = vmul.f32 %v2597, %v2625
    %v2627 = vrcp.pop %v2624
    %v2628 = vmul.f32 %v2598, %v2627
    %v2629 = vlaneseq
    %v2630 = vshrl.u32 %v2629, 7
    %v2631 = vsub.s32 0, %v2630
    %v2632 = vrot.slane %v2587, %v2631
    %v2633 = vmul.f32 %v2632, %v2626
    %v2634 = vmul.f32 %v2632, %v2628
    %v2635 = vlaneseq
    %v2636 = vshrl.u32 %v2635, 7
    %v2637 = vsub.s32 0, %v2636
    %v2638 = vrot.slane %v2588, %v2637
    %v2639 = vadd.f32 %v2633, %v2638
    %v2640 = vadd.f32 %v2634, %v2638
    %2641 = vst.msk [vmem:[#allocation2] sm:$0xff] %vm193, %v2639
    %2642 = vst.msk [vmem:[#allocation2 + $0x8] sm:$0xff] %vm193, %v2640
    // Predicated region
    $region34: #{encoder_forward.1} parent=1 // pred_check
      _
    $region35: #{encoder_forward.1} parent=1 // pred_check_branch
      %2644 = sbr.rel (0) target = $region37
    $region36: #{encoder_forward.1} parent=1 // pred_region
      %s2646 = ssub.s32 256, 256
      %2647 = vsyncadd [#allocation3], %s2646
      %s2648 = sshll.u32 [#allocation2], 4
      %s2649 = int_to_ptr.vmem [resolvable:$true] %s2648
      %2654 = dma.vmem_to_hbm [thread:$0]  %s2649, 256, %s8, [#allocation3], 128, 128, 8
    $region37: #{encoder_forward.1} parent=1 // pred_fallthru
      _
    // Predicated region
    $region38: #{encoder_forward.1} parent=1 // pred_check
      _
    $region39: #{encoder_forward.1} parent=1 // pred_check_branch
      %2656 = sbr.rel (0) target = $region41
    $region40: #{encoder_forward.1} parent=1 // pred_region
      %2657 = dma.done [#allocation3], 256
    $region41: #{encoder_forward.1} parent=1 // pred_fallthru
      _
    %2658 = vsyncpa [#allocation3], 1

</llo_original>
